<compile_context>
chip_gen: v7x
topology: tpu7x:2x2x1
jax: 0.10.0
libtpu: 0.0.40
codegen_flags: <defaults>
</compile_context>

<pallas_src>
import functools

import jax
import jax.numpy as jnp
from jax.experimental import pallas as pl
from jax.experimental.pallas import tpu as pltpu

BN_EPS = 1e-5


# ----------------------------- in-kernel helpers -----------------------------

def _stage_padded(pad_ref, img):
    """Write img (H, W, C) into the interior of the zero-padded VMEM scratch."""
    h, w, _ = img.shape
    pad_ref[...] = jnp.zeros_like(pad_ref)
    pad_ref[1:h + 1, 1:w + 1, :] = img.astype(pad_ref.dtype)


def _conv3x3_strips(xpad_ref, w_ref, out_ref, *, tile_h):
    """3x3 'SAME' conv of the padded image staged in VMEM, one strip at a time.

    xpad_ref: (H+2, W+2, Cin) bf16 VMEM scratch with the zero-padded image.
    w_ref:    (9*Cin, Cout)  bf16 weights, rows ordered (kh, kw, cin).
    out_ref:  (1, H, W, Cout) output ref; each row strip is stored as computed.
    Returns per-channel (sum, sum_of_squares) of the f32 conv output, (1, Cout)
    each, for the two-pass BatchNorm statistics.
    """
    hp, wp, cin = xpad_ref.shape
    h, w = hp - 2, wp - 2
    cout = w_ref.shape[1]
    tile_m = tile_h * w
    num_strips = h // tile_h

    def strip(s, carry):
        acc_s, acc_q = carry
        r0 = pl.multiple_of(s * tile_h, tile_h)
        # (tile_m, 9*Cin) im2col patches for this strip; column order
        # (kh, kw, cin) matches the wrapper's weight reshape.  Operands stay
        # bf16; accumulation is f32 on the MXU.
        cols = [
            xpad_ref[pl.ds(r0 + kh, tile_h), pl.ds(kw, w), :].reshape(tile_m, cin)
            for kh in range(3) for kw in range(3)
        ]
        patches = jnp.concatenate(cols, axis=-1)
        z = jnp.dot(patches, w_ref[...], preferred_element_type=jnp.float32)
        out_ref[0, pl.ds(r0, tile_h), :, :] = (
            z.reshape(tile_h, w, cout).astype(out_ref.dtype))
        return (acc_s + jnp.sum(z, axis=0, keepdims=True),
                acc_q + jnp.sum(z * z, axis=0, keepdims=True))

    zero = jnp.zeros((1, cout), jnp.float32)
    return jax.lax.fori_loop(0, num_strips, strip, (zero, zero))


# --------------------------------- kernels -----------------------------------

def conv1_stats_kernel(x_ref, w_ref, y_ref, sum_ref, sq_ref, xpad_ref, *, tile_h):
    c = x_ref.shape[-1]
    _stage_padded(xpad_ref, x_ref[0])
    s, q = _conv3x3_strips(xpad_ref, w_ref, y_ref, tile_h=tile_h)
    sum_ref[...] = s.reshape(1, 1, c)
    sq_ref[...] = q.reshape(1, 1, c)


def bn_prelu_conv2_stats_kernel(y_ref, w_ref, scale_ref, shift_ref, alpha_ref,
                                z_ref, sum_ref, sq_ref, hpad_ref, *, tile_h):
    c = y_ref.shape[-1]
    alpha = alpha_ref[0, 0]
    # BN1 affine (global batch stats folded into scale/shift in the wrapper)
    # followed by single-parameter PReLU, computed in f32, staged as bf16.
    t = y_ref[0].astype(jnp.float32) * scale_ref[...] + shift_ref[...]
    t = jnp.where(t >= 0.0, t, alpha * t)
    _stage_padded(hpad_ref, t)
    s, q = _conv3x3_strips(hpad_ref, w_ref, z_ref, tile_h=tile_h)
    sum_ref[...] = s.reshape(1, 1, c)
    sq_ref[...] = q.reshape(1, 1, c)


def bn_residual_kernel(z_ref, x_ref, scale_ref, shift_ref, o_ref):
    out = (z_ref[0].astype(jnp.float32) * scale_ref[...] + shift_ref[...]
           + x_ref[0].astype(jnp.float32))
    o_ref[...] = out[None].astype(o_ref.dtype)


# --------------------------------- wrapper ------------------------------------

def _bn_scale_shift(sums, sqsums, gamma, beta, count):
    """Fold per-image partial stats into per-channel BN scale/shift (training mode).

    Conv activations are near zero-mean (no bias is applied), so the
    E[x^2] - E[x]^2 form does not suffer meaningful cancellation here.
    """
    s = jnp.sum(sums, axis=(0, 1))                        # (C,)
    q = jnp.sum(sqsums, axis=(0, 1))                      # (C,)
    mean = s / count
    var = jnp.maximum(q / count - mean * mean, 0.0)       # biased batch variance
    scale = gamma * jax.lax.rsqrt(var + BN_EPS)
    shift = beta - mean * scale
    c = scale.shape[0]
    return (scale.reshape(1, 1, c).astype(jnp.float32),
            shift.reshape(1, 1, c).astype(jnp.float32))


def _pick_tile_h(h, w, target_m=512):
    """Largest divisor of H whose im2col strip (tile_h*W rows) stays <= target_m."""
    best = 1
    for th in range(1, h + 1):
        if h % th == 0 and th * w <= target_m:
            best = th
    return best


def init_params(key, channels):
    """Deterministic synthetic parameters (shapes match nn.Conv2d / nn.BatchNorm2d / nn.PReLU)."""
    k1, k2, k3, k4 = jax.random.split(key, 4)
    bound = 1.0 / jnp.sqrt(float(channels * 9))
    return {
        # conv weights in PyTorch OIHW layout
        "w1": jax.random.uniform(k1, (channels, channels, 3, 3), jnp.float32, -bound, bound),
        "b1": jax.random.uniform(k2, (channels,), jnp.float32, -bound, bound),
        "gamma1": jnp.ones((channels,), jnp.float32),
        "beta1": jnp.zeros((channels,), jnp.float32),
        "alpha": jnp.full((1, 1), 0.25, jnp.float32),      # nn.PReLU() default init
        "w2": jax.random.uniform(k3, (channels, channels, 3, 3), jnp.float32, -bound, bound),
        "b2": jax.random.uniform(k4, (channels,), jnp.float32, -bound, bound),
        "gamma2": jnp.ones((channels,), jnp.float32),
        "beta2": jnp.zeros((channels,), jnp.float32),
    }


def residual_block(x_nchw, params, tile_h=None):
    n, c, h, w = x_nchw.shape
    if tile_h is None:
        tile_h = _pick_tile_h(h, w)
    if h % tile_h:
        raise ValueError("tile_h must divide H")

    x = jnp.transpose(x_nchw, (0, 2, 3, 1))               # NCHW -> NHWC
    # OIHW -> HWIO -> (9*Cin, Cout), in bf16 so the MXU runs at native bf16
    # rate (f32 accumulation in-kernel).  Row order (kh, kw, cin) matches the
    # in-kernel im2col column order.
    w1 = jnp.transpose(params["w1"], (2, 3, 1, 0)).reshape(9 * c, c).astype(jnp.bfloat16)
    w2 = jnp.transpose(params["w2"], (2, 3, 1, 0)).reshape(9 * c, c).astype(jnp.bfloat16)
    # Conv biases b1/b2 are intentionally NOT applied: a per-channel bias is
    # exactly cancelled by the training-mode BN mean subtraction.
    count = float(n * h * w)

    img_spec = pl.BlockSpec((1, h, w, c), lambda i: (i, 0, 0, 0))
    w_spec = pl.BlockSpec((9 * c, c), lambda i: (0, 0))
    vec_spec = pl.BlockSpec((1, 1, c), lambda i: (0, 0, 0))
    alpha_spec = pl.BlockSpec(memory_space=pltpu.MemorySpace.SMEM)
    stat_spec = pl.BlockSpec((1, 1, c), lambda i: (i, 0, 0))
    stat_shape = jax.ShapeDtypeStruct((n, 1, c), jnp.float32)
    pad_scratch = pltpu.VMEM((h + 2, w + 2, c), jnp.bfloat16)
    # Strip tiling keeps live VMEM to a few MB even at real SRGAN sizes
    # (C=64, 96x96), inside the 32 MiB default scoped VMEM and v7x's 64 MiB
    # physical VMEM, so no vmem_limit_bytes override is required.
    cparams = pltpu.CompilerParams(dimension_semantics=("parallel",))

    conv_cost = pl.CostEstimate(
        flops=2 * n * h * w * 9 * c * c, transcendentals=0,
        bytes_accessed=(4 + 2) * n * h * w * c + 2 * 9 * c * c + 8 * n * c)

    # Stage 1: conv1 (strip-wise im2col matmuls) + partial BN1 statistics.
    y1, s1, q1 = pl.pallas_call(
        functools.partial(conv1_stats_kernel, tile_h=tile_h),
        grid=(n,),
        in_specs=[img_spec, w_spec],
        out_specs=(img_spec, stat_spec, stat_spec),
        out_shape=(jax.ShapeDtypeStruct((n, h, w, c), jnp.bfloat16),
                   stat_shape, stat_shape),
        scratch_shapes=[pad_scratch],
        compiler_params=cparams,
        cost_estimate=conv_cost,
    )(x, w1)
    scale1, shift1 = _bn_scale_shift(s1, q1, params["gamma1"], params["beta1"], count)

    # Stage 2: BN1 affine + PReLU + conv2 + partial BN2 statistics.
    z2, s2, q2 = pl.pallas_call(
        functools.partial(bn_prelu_conv2_stats_kernel, tile_h=tile_h),
        grid=(n,),
        in_specs=[img_spec, w_spec, vec_spec, vec_spec, alpha_spec],
        out_specs=(img_spec, stat_spec, stat_spec),
        out_shape=(jax.ShapeDtypeStruct((n, h, w, c), jnp.bfloat16),
                   stat_shape, stat_shape),
        scratch_shapes=[pad_scratch],
        compiler_params=cparams,
        cost_estimate=conv_cost,
    )(y1, w2, scale1, shift1, params["alpha"])
    scale2, shift2 = _bn_scale_shift(s2, q2, params["gamma2"], params["beta2"], count)

    # Stage 3: BN2 affine + residual add.
    out = pl.pallas_call(
        bn_residual_kernel,
        grid=(n,),
        in_specs=[img_spec, img_spec, vec_spec, vec_spec],
        out_specs=img_spec,
        out_shape=jax.ShapeDtypeStruct((n, h, w, c), x_nchw.dtype),
        compiler_params=cparams,
        cost_estimate=pl.CostEstimate(
            flops=3 * n * h * w * c, transcendentals=0,
            bytes_accessed=(2 + 4 + 4) * n * h * w * c),
    )(z2, x, scale2, shift2)

    return jnp.transpose(out, (0, 3, 1, 2))               # NHWC -> NCHW


# ----------------------------- pure-JAX reference ------------------------------

def reference(x_nchw, p):
    dn = ("NCHW", "OIHW", "NCHW")

    def bn(t, gamma, beta):
        mean = jnp.mean(t, axis=(0, 2, 3), keepdims=True)
        var = jnp.var(t, axis=(0, 2, 3), keepdims=True)
        return ((t - mean) / jnp.sqrt(var + BN_EPS)) * gamma.reshape(1, -1, 1, 1) \
               + beta.reshape(1, -1, 1, 1)

    y = jax.lax.conv_general_dilated(x_nchw, p["w1"], (1, 1), "SAME",
                                     dimension_numbers=dn)
    y = y + p["b1"].reshape(1, -1, 1, 1)
    y = bn(y, p["gamma1"], p["beta1"])
    y = jnp.where(y >= 0, y, p["alpha"][0, 0] * y)
    z = jax.lax.conv_general_dilated(y, p["w2"], (1, 1), "SAME",
                                     dimension_numbers=dn)
    z = z + p["b2"].reshape(1, -1, 1, 1)
    z = bn(z, p["gamma2"], p["beta2"])
    return z + x_nchw


# ---------------------------------- main ---------------------------------------

if __name__ == "__main__":
    key = jax.random.PRNGKey(0)
    kx, kp = jax.random.split(key)

    channels = 4
    x = jax.random.normal(kx, (2, channels, 16, 16), jnp.float32)
    params = init_params(kp, channels)

    # tile_h=8 -> two row strips per image, exercising the in-kernel strip loop.
    fwd = jax.jit(functools.partial(residual_block, tile_h=8))
    out = jax.block_until_ready(fwd(x, params))

    ref = reference(x, params)
    assert out.shape == x.shape and out.dtype == x.dtype
    err = float(jnp.max(jnp.abs(out - ref)))
    # bf16 inter-stage activations and bf16 MXU operands (intentional perf
    # choice) are compared against a pure-f32 reference, so the tolerance is
    # bf16-scale rather than 1e-3.
    if bool(jnp.all(jnp.isfinite(out))) and err < 1e-1:
        print("KERNEL_OK")
    else:
        print(f"MISMATCH max_abs_err={err}")
</pallas_src>

<mosaic_0001>
module attributes {stable_mosaic.version = 11 : i64} {
  func.func @bn_residual_kernel(%arg0: i32, %arg1: memref<1x16x16x4xbf16, #tpu.memory_space<vmem>>, %arg2: memref<1x16x16x4xf32, #tpu.memory_space<vmem>>, %arg3: memref<1x1x4xf32, #tpu.memory_space<vmem>>, %arg4: memref<1x1x4xf32, #tpu.memory_space<vmem>>, %arg5: memref<1x16x16x4xf32, #tpu.memory_space<vmem>>) attributes {dimension_semantics = [#tpu.dimension_semantics<parallel>], iteration_bounds = array<i64: 2>, scalar_prefetch = 0 : i64, scratch_operands = 0 : i64, tpu.core_type = #tpu.core_type<tc>, window_params = [{transform_indices = @transform_0, window_bounds = array<i64: 1, 16, 16, 4>}, {transform_indices = @transform_1, window_bounds = array<i64: 1, 16, 16, 4>}, {pipeline_mode = #tpu.pipeline_mode<synchronous>, transform_indices = @transform_2, window_bounds = array<i64: 1, 1, 4>}, {pipeline_mode = #tpu.pipeline_mode<synchronous>, transform_indices = @transform_3, window_bounds = array<i64: 1, 1, 4>}, {transform_indices = @transform_4, window_bounds = array<i64: 1, 16, 16, 4>}]} {
    %c0 = arith.constant 0 : index
    %c0_0 = arith.constant 0 : index
    %c0_1 = arith.constant 0 : index
    %c0_2 = arith.constant 0 : index
    %0 = vector.load %arg1[%c0, %c0_0, %c0_1, %c0_2] : memref<1x16x16x4xbf16, #tpu.memory_space<vmem>>, vector<1x16x16x4xbf16>
    %1 = vector.shape_cast %0 : vector<1x16x16x4xbf16> to vector<16x16x4xbf16>
    %2 = arith.extf %1 : vector<16x16x4xbf16> to vector<16x16x4xf32>
    %c0_3 = arith.constant 0 : index
    %c0_4 = arith.constant 0 : index
    %c0_5 = arith.constant 0 : index
    %3 = vector.load %arg3[%c0_3, %c0_4, %c0_5] : memref<1x1x4xf32, #tpu.memory_space<vmem>>, vector<1x1x4xf32>
    %4 = vector.broadcast %3 : vector<1x1x4xf32> to vector<16x16x4xf32>
    %5 = arith.mulf %2, %4 : vector<16x16x4xf32>
    %c0_6 = arith.constant 0 : index
    %c0_7 = arith.constant 0 : index
    %c0_8 = arith.constant 0 : index
    %6 = vector.load %arg4[%c0_6, %c0_7, %c0_8] : memref<1x1x4xf32, #tpu.memory_space<vmem>>, vector<1x1x4xf32>
    %7 = vector.broadcast %6 : vector<1x1x4xf32> to vector<16x16x4xf32>
    %8 = arith.addf %5, %7 : vector<16x16x4xf32>
    %c0_9 = arith.constant 0 : index
    %c0_10 = arith.constant 0 : index
    %c0_11 = arith.constant 0 : index
    %c0_12 = arith.constant 0 : index
    %9 = vector.load %arg2[%c0_9, %c0_10, %c0_11, %c0_12] : memref<1x16x16x4xf32, #tpu.memory_space<vmem>>, vector<1x16x16x4xf32>
    %10 = vector.shape_cast %9 : vector<1x16x16x4xf32> to vector<16x16x4xf32>
    %11 = arith.addf %8, %10 : vector<16x16x4xf32>
    %12 = vector.shape_cast %11 : vector<16x16x4xf32> to vector<1x16x16x4xf32>
    %c0_13 = arith.constant 0 : index
    %c0_14 = arith.constant 0 : index
    %c0_15 = arith.constant 0 : index
    %c0_16 = arith.constant 0 : index
    %13 = vector.load %arg5[%c0_13, %c0_14, %c0_15, %c0_16] : memref<1x16x16x4xf32, #tpu.memory_space<vmem>>, vector<1x16x16x4xf32>
    tpu.vector_store %arg5[%c0_13, %c0_14, %c0_15, %c0_16], %12 {strides = array<i32>} : memref<1x16x16x4xf32, #tpu.memory_space<vmem>>, vector<1x16x16x4xf32>,
    return
  }
  func.func @transform_0(%arg0: i32) -> (i32, i32, i32, i32) {
    %c0_i32 = arith.constant 0 : i32
    %c0_i32_0 = arith.constant 0 : i32
    %c0_i32_1 = arith.constant 0 : i32
    %c0_i32_2 = arith.constant 0 : i32
    return %arg0, %c0_i32, %c0_i32_0, %c0_i32_1 : i32, i32, i32, i32
  }
  func.func @transform_1(%arg0: i32) -> (i32, i32, i32, i32) {
    %c0_i32 = arith.constant 0 : i32
    %c0_i32_0 = arith.constant 0 : i32
    %c0_i32_1 = arith.constant 0 : i32
    %c0_i32_2 = arith.constant 0 : i32
    return %arg0, %c0_i32, %c0_i32_0, %c0_i32_1 : i32, i32, i32, i32
  }
  func.func @transform_2(%arg0: i32) -> (i32, i32, i32) {
    %c0_i32 = arith.constant 0 : i32
    %c0_i32_0 = arith.constant 0 : i32
    %c0_i32_1 = arith.constant 0 : i32
    %c0_i32_2 = arith.constant 0 : i32
    return %c0_i32, %c0_i32_0, %c0_i32_1 : i32, i32, i32
  }
  func.func @transform_3(%arg0: i32) -> (i32, i32, i32) {
    %c0_i32 = arith.constant 0 : i32
    %c0_i32_0 = arith.constant 0 : i32
    %c0_i32_1 = arith.constant 0 : i32
    %c0_i32_2 = arith.constant 0 : i32
    return %c0_i32, %c0_i32_0, %c0_i32_1 : i32, i32, i32
  }
  func.func @transform_4(%arg0: i32) -> (i32, i32, i32, i32) {
    %c0_i32 = arith.constant 0 : i32
    %c0_i32_0 = arith.constant 0 : i32
    %c0_i32_1 = arith.constant 0 : i32
    %c0_i32_2 = arith.constant 0 : i32
    return %arg0, %c0_i32, %c0_i32_0, %c0_i32_1 : i32, i32, i32, i32
  }
}

module attributes {stable_mosaic.version = 11 : i64} {
  func.func @conv1_stats_kernel(%arg0: i32, %arg1: memref<1x16x16x4xf32, #tpu.memory_space<vmem>>, %arg2: memref<36x4xbf16, #tpu.memory_space<vmem>>, %arg3: memref<1x16x16x4xbf16, #tpu.memory_space<vmem>>, %arg4: memref<1x1x4xf32, #tpu.memory_space<vmem>>, %arg5: memref<1x1x4xf32, #tpu.memory_space<vmem>>, %arg6: memref<18x18x4xbf16, #tpu.memory_space<vmem>>) attributes {dimension_semantics = [#tpu.dimension_semantics<parallel>], iteration_bounds = array<i64: 2>, scalar_prefetch = 0 : i64, scratch_operands = 1 : i64, tpu.core_type = #tpu.core_type<tc>, window_params = [{transform_indices = @transform_0, window_bounds = array<i64: 1, 16, 16, 4>}, {pipeline_mode = #tpu.pipeline_mode<synchronous>, transform_indices = @transform_1, window_bounds = array<i64: 36, 4>}, {transform_indices = @transform_2, window_bounds = array<i64: 1, 16, 16, 4>}, {transform_indices = @transform_3, window_bounds = array<i64: 1, 1, 4>}, {transform_indices = @transform_4, window_bounds = array<i64: 1, 1, 4>}]} {
    %c0 = arith.constant 0 : index
    %c0_0 = arith.constant 0 : index
    %c0_1 = arith.constant 0 : index
    %c0_2 = arith.constant 0 : index
    %0 = vector.load %arg1[%c0, %c0_0, %c0_1, %c0_2] : memref<1x16x16x4xf32, #tpu.memory_space<vmem>>, vector<1x16x16x4xf32>
    %1 = vector.shape_cast %0 : vector<1x16x16x4xf32> to vector<16x16x4xf32>
    %cst = arith.constant 0.000000e+00 : bf16
    %2 = vector.broadcast %cst : bf16 to vector<18x18x4xbf16>
    %c0_3 = arith.constant 0 : index
    %c0_4 = arith.constant 0 : index
    %c0_5 = arith.constant 0 : index
    %3 = vector.load %arg6[%c0_3, %c0_4, %c0_5] : memref<18x18x4xbf16, #tpu.memory_space<vmem>>, vector<18x18x4xbf16>
    tpu.vector_store %arg6[%c0_3, %c0_4, %c0_5], %2 {strides = array<i32>} : memref<18x18x4xbf16, #tpu.memory_space<vmem>>, vector<18x18x4xbf16>,
    %4 = arith.truncf %1 : vector<16x16x4xf32> to vector<16x16x4xbf16>
    %c1 = arith.constant 1 : index
    %c1_6 = arith.constant 1 : index
    %c0_7 = arith.constant 0 : index
    %5 = vector.load %arg6[%c1, %c1_6, %c0_7] : memref<18x18x4xbf16, #tpu.memory_space<vmem>>, vector<16x16x4xbf16>
    tpu.vector_store %arg6[%c1, %c1_6, %c0_7], %4 {strides = array<i32>} : memref<18x18x4xbf16, #tpu.memory_space<vmem>>, vector<16x16x4xbf16>,
    %cst_8 = arith.constant 0.000000e+00 : f32
    %6 = vector.broadcast %cst_8 : f32 to vector<1x4xf32>
    %c0_i32 = arith.constant 0 : i32
    %c2_i32 = arith.constant 2 : i32
    %7 = arith.addi %c0_i32, %c2_i32 : i32
    %c1_i32 = arith.constant 1 : i32
    %8:2 = scf.for %arg7 = %c0_i32 to %7 step %c1_i32 iter_args(%arg8 = %6, %arg9 = %6) -> (vector<1x4xf32>, vector<1x4xf32>)  : i32 {
      %c8_i32 = arith.constant 8 : i32
      %13 = arith.muli %arg7, %c8_i32 : i32
      %14 = tpu.assume_multiple %13, 8 : i32
      %c0_i32_16 = arith.constant 0 : i32
      %15 = arith.addi %14, %c0_i32_16 : i32
      %16 = arith.index_cast %15 : i32 to index
      %c0_17 = arith.constant 0 : index
      %c0_18 = arith.constant 0 : index
      %17 = vector.load %arg6[%16, %c0_17, %c0_18] : memref<18x18x4xbf16, #tpu.memory_space<vmem>>, vector<8x16x4xbf16>
      %18 = vector.shape_cast %17 : vector<8x16x4xbf16> to vector<128x4xbf16>
      %c0_i32_19 = arith.constant 0 : i32
      %19 = arith.addi %14, %c0_i32_19 : i32
      %20 = arith.index_cast %19 : i32 to index
      %c1_20 = arith.constant 1 : index
      %c0_21 = arith.constant 0 : index
      %21 = vector.load %arg6[%20, %c1_20, %c0_21] : memref<18x18x4xbf16, #tpu.memory_space<vmem>>, vector<8x16x4xbf16>
      %22 = vector.shape_cast %21 : vector<8x16x4xbf16> to vector<128x4xbf16>
      %c0_i32_22 = arith.constant 0 : i32
      %23 = arith.addi %14, %c0_i32_22 : i32
      %24 = arith.index_cast %23 : i32 to index
      %c2 = arith.constant 2 : index
      %c0_23 = arith.constant 0 : index
      %25 = vector.load %arg6[%24, %c2, %c0_23] : memref<18x18x4xbf16, #tpu.memory_space<vmem>>, vector<8x16x4xbf16>
      %26 = vector.shape_cast %25 : vector<8x16x4xbf16> to vector<128x4xbf16>
      %c1_i32_24 = arith.constant 1 : i32
      %27 = arith.addi %14, %c1_i32_24 : i32
      %28 = arith.index_cast %27 : i32 to index
      %c0_25 = arith.constant 0 : index
      %c0_26 = arith.constant 0 : index
      %29 = vector.load %arg6[%28, %c0_25, %c0_26] : memref<18x18x4xbf16, #tpu.memory_space<vmem>>, vector<8x16x4xbf16>
      %30 = vector.shape_cast %29 : vector<8x16x4xbf16> to vector<128x4xbf16>
      %c1_i32_27 = arith.constant 1 : i32
      %31 = arith.addi %14, %c1_i32_27 : i32
      %32 = arith.index_cast %31 : i32 to index
      %c1_28 = arith.constant 1 : index
      %c0_29 = arith.constant 0 : index
      %33 = vector.load %arg6[%32, %c1_28, %c0_29] : memref<18x18x4xbf16, #tpu.memory_space<vmem>>, vector<8x16x4xbf16>
      %34 = vector.shape_cast %33 : vector<8x16x4xbf16> to vector<128x4xbf16>
      %c1_i32_30 = arith.constant 1 : i32
      %35 = arith.addi %14, %c1_i32_30 : i32
      %36 = arith.index_cast %35 : i32 to index
      %c2_31 = arith.constant 2 : index
      %c0_32 = arith.constant 0 : index
      %37 = vector.load %arg6[%36, %c2_31, %c0_32] : memref<18x18x4xbf16, #tpu.memory_space<vmem>>, vector<8x16x4xbf16>
      %38 = vector.shape_cast %37 : vector<8x16x4xbf16> to vector<128x4xbf16>
      %c2_i32_33 = arith.constant 2 : i32
      %39 = arith.addi %14, %c2_i32_33 : i32
      %40 = arith.index_cast %39 : i32 to index
      %c0_34 = arith.constant 0 : index
      %c0_35 = arith.constant 0 : index
      %41 = vector.load %arg6[%40, %c0_34, %c0_35] : memref<18x18x4xbf16, #tpu.memory_space<vmem>>, vector<8x16x4xbf16>
      %42 = vector.shape_cast %41 : vector<8x16x4xbf16> to vector<128x4xbf16>
      %c2_i32_36 = arith.constant 2 : i32
      %43 = arith.addi %14, %c2_i32_36 : i32
      %44 = arith.index_cast %43 : i32 to index
      %c1_37 = arith.constant 1 : index
      %c0_38 = arith.constant 0 : index
      %45 = vector.load %arg6[%44, %c1_37, %c0_38] : memref<18x18x4xbf16, #tpu.memory_space<vmem>>, vector<8x16x4xbf16>
      %46 = vector.shape_cast %45 : vector<8x16x4xbf16> to vector<128x4xbf16>
      %c2_i32_39 = arith.constant 2 : i32
      %47 = arith.addi %14, %c2_i32_39 : i32
      %48 = arith.index_cast %47 : i32 to index
      %c2_40 = arith.constant 2 : index
      %c0_41 = arith.constant 0 : index
      %49 = vector.load %arg6[%48, %c2_40, %c0_41] : memref<18x18x4xbf16, #tpu.memory_space<vmem>>, vector<8x16x4xbf16>
      %50 = vector.shape_cast %49 : vector<8x16x4xbf16> to vector<128x4xbf16>
      %51 = tpu.concatenate %18, %22, %26, %30, %34, %38, %42, %46, %50 in 1 : vector<128x4xbf16>, vector<128x4xbf16>, vector<128x4xbf16>, vector<128x4xbf16>, vector<128x4xbf16>, vector<128x4xbf16>, vector<128x4xbf16>, vector<128x4xbf16>, vector<128x4xbf16> -> vector<128x36xbf16>
      %c0_42 = arith.constant 0 : index
      %c0_43 = arith.constant 0 : index
      %52 = vector.load %arg2[%c0_42, %c0_43] : memref<36x4xbf16, #tpu.memory_space<vmem>>, vector<36x4xbf16>
      %cst_44 = arith.constant dense<0.000000e+00> : vector<128x4xf32>
      %53 = tpu.matmul %51, %52, %cst_44 {dimension_numbers = #tpu.dot_dimension_numbers<[1], [0], [0], [1], [0, 0, 1, 1], [], []>} : vector<128x36xbf16>, vector<36x4xbf16>, vector<128x4xf32> -> vector<128x4xf32>
      %54 = vector.shape_cast %53 : vector<128x4xf32> to vector<8x16x4xf32>
      %55 = arith.truncf %54 : vector<8x16x4xf32> to vector<8x16x4xbf16>
      %c0_45 = arith.constant 0 : index
      %56 = arith.index_cast %14 : i32 to index
      %c0_46 = arith.constant 0 : index
      %c0_47 = arith.constant 0 : index
      %57 = vector.load %arg3[%c0_45, %56, %c0_46, %c0_47] : memref<1x16x16x4xbf16, #tpu.memory_space<vmem>>, vector<1x8x16x4xbf16>
      %58 = vector.shape_cast %57 : vector<1x8x16x4xbf16> to vector<8x16x4xbf16>
      %59 = vector.shape_cast %55 : vector<8x16x4xbf16> to vector<1x8x16x4xbf16>
      tpu.vector_store %arg3[%c0_45, %56, %c0_46, %c0_47], %59 {strides = array<i32>} : memref<1x16x16x4xbf16, #tpu.memory_space<vmem>>, vector<1x8x16x4xbf16>,
      %cst_48 = arith.constant dense<0.000000e+00> : vector<4xf32>
      %60 = vector.multi_reduction <add>, %53, %cst_48 [0] : vector<128x4xf32> to vector<4xf32>
      %61 = vector.shape_cast %60 : vector<4xf32> to vector<1x4xf32>
      %62 = arith.addf %arg8, %61 : vector<1x4xf32>
      %63 = arith.mulf %53, %53 : vector<128x4xf32>
      %cst_49 = arith.constant dense<0.000000e+00> : vector<4xf32>
      %64 = vector.multi_reduction <add>, %63, %cst_49 [0] : vector<128x4xf32> to vector<4xf32>
      %65 = vector.shape_cast %64 : vector<4xf32> to vector<1x4xf32>
      %66 = arith.addf %arg9, %65 : vector<1x4xf32>
      scf.yield %62, %66 : vector<1x4xf32>, vector<1x4xf32>
    }
    %c2_i32_9 = arith.constant 2 : i32
    %9 = vector.shape_cast %8#0 : vector<1x4xf32> to vector<1x1x4xf32>
    %c0_10 = arith.constant 0 : index
    %c0_11 = arith.constant 0 : index
    %c0_12 = arith.constant 0 : index
    %10 = vector.load %arg4[%c0_10, %c0_11, %c0_12] : memref<1x1x4xf32, #tpu.memory_space<vmem>>, vector<1x1x4xf32>
    tpu.vector_store %arg4[%c0_10, %c0_11, %c0_12], %9 {strides = array<i32>} : memref<1x1x4xf32, #tpu.memory_space<vmem>>, vector<1x1x4xf32>,
    %11 = vector.shape_cast %8#1 : vector<1x4xf32> to vector<1x1x4xf32>
    %c0_13 = arith.constant 0 : index
    %c0_14 = arith.constant 0 : index
    %c0_15 = arith.constant 0 : index
    %12 = vector.load %arg5[%c0_13, %c0_14, %c0_15] : memref<1x1x4xf32, #tpu.memory_space<vmem>>, vector<1x1x4xf32>
    tpu.vector_store %arg5[%c0_13, %c0_14, %c0_15], %11 {strides = array<i32>} : memref<1x1x4xf32, #tpu.memory_space<vmem>>, vector<1x1x4xf32>,
    return
  }
  func.func @transform_0(%arg0: i32) -> (i32, i32, i32, i32) {
    %c0_i32 = arith.constant 0 : i32
    %c0_i32_0 = arith.constant 0 : i32
    %c0_i32_1 = arith.constant 0 : i32
    %c0_i32_2 = arith.constant 0 : i32
    return %arg0, %c0_i32, %c0_i32_0, %c0_i32_1 : i32, i32, i32, i32
  }
  func.func @transform_1(%arg0: i32) -> (i32, i32) {
    %c0_i32 = arith.constant 0 : i32
    %c0_i32_0 = arith.constant 0 : i32
    %c0_i32_1 = arith.constant 0 : i32
    return %c0_i32, %c0_i32_0 : i32, i32
  }
  func.func @transform_2(%arg0: i32) -> (i32, i32, i32, i32) {
    %c0_i32 = arith.constant 0 : i32
    %c0_i32_0 = arith.constant 0 : i32
    %c0_i32_1 = arith.constant 0 : i32
    %c0_i32_2 = arith.constant 0 : i32
    return %arg0, %c0_i32, %c0_i32_0, %c0_i32_1 : i32, i32, i32, i32
  }
  func.func @transform_3(%arg0: i32) -> (i32, i32, i32) {
    %c0_i32 = arith.constant 0 : i32
    %c0_i32_0 = arith.constant 0 : i32
    %c0_i32_1 = arith.constant 0 : i32
    return %arg0, %c0_i32, %c0_i32_0 : i32, i32, i32
  }
  func.func @transform_4(%arg0: i32) -> (i32, i32, i32) {
    %c0_i32 = arith.constant 0 : i32
    %c0_i32_0 = arith.constant 0 : i32
    %c0_i32_1 = arith.constant 0 : i32
    return %arg0, %c0_i32, %c0_i32_0 : i32, i32, i32
  }
}

module attributes {stable_mosaic.version = 11 : i64} {
  func.func @bn_prelu_conv2_stats_kernel(%arg0: i32, %arg1: memref<1x16x16x4xbf16, #tpu.memory_space<vmem>>, %arg2: memref<36x4xbf16, #tpu.memory_space<vmem>>, %arg3: memref<1x1x4xf32, #tpu.memory_space<vmem>>, %arg4: memref<1x1x4xf32, #tpu.memory_space<vmem>>, %arg5: memref<1x1xf32, #tpu.memory_space<smem>>, %arg6: memref<1x16x16x4xbf16, #tpu.memory_space<vmem>>, %arg7: memref<1x1x4xf32, #tpu.memory_space<vmem>>, %arg8: memref<1x1x4xf32, #tpu.memory_space<vmem>>, %arg9: memref<18x18x4xbf16, #tpu.memory_space<vmem>>) attributes {dimension_semantics = [#tpu.dimension_semantics<parallel>], iteration_bounds = array<i64: 2>, scalar_prefetch = 0 : i64, scratch_operands = 1 : i64, tpu.core_type = #tpu.core_type<tc>, window_params = [{transform_indices = @transform_0, window_bounds = array<i64: 1, 16, 16, 4>}, {pipeline_mode = #tpu.pipeline_mode<synchronous>, transform_indices = @transform_1, window_bounds = array<i64: 36, 4>}, {pipeline_mode = #tpu.pipeline_mode<synchronous>, transform_indices = @transform_2, window_bounds = array<i64: 1, 1, 4>}, {pipeline_mode = #tpu.pipeline_mode<synchronous>, transform_indices = @transform_3, window_bounds = array<i64: 1, 1, 4>}, {transform_indices = @transform_4, window_bounds = array<i64: 1, 1>}, {transform_indices = @transform_5, window_bounds = array<i64: 1, 16, 16, 4>}, {transform_indices = @transform_6, window_bounds = array<i64: 1, 1, 4>}, {transform_indices = @transform_7, window_bounds = array<i64: 1, 1, 4>}]} {
    %c0 = arith.constant 0 : index
    %c0_0 = arith.constant 0 : index
    %0 = memref.load %arg5[%c0, %c0_0] : memref<1x1xf32, #tpu.memory_space<smem>>
    %c0_1 = arith.constant 0 : index
    %c0_2 = arith.constant 0 : index
    %c0_3 = arith.constant 0 : index
    %c0_4 = arith.constant 0 : index
    %1 = vector.load %arg1[%c0_1, %c0_2, %c0_3, %c0_4] : memref<1x16x16x4xbf16, #tpu.memory_space<vmem>>, vector<1x16x16x4xbf16>
    %2 = vector.shape_cast %1 : vector<1x16x16x4xbf16> to vector<16x16x4xbf16>
    %3 = arith.extf %2 : vector<16x16x4xbf16> to vector<16x16x4xf32>
    %c0_5 = arith.constant 0 : index
    %c0_6 = arith.constant 0 : index
    %c0_7 = arith.constant 0 : index
    %4 = vector.load %arg3[%c0_5, %c0_6, %c0_7] : memref<1x1x4xf32, #tpu.memory_space<vmem>>, vector<1x1x4xf32>
    %5 = vector.broadcast %4 : vector<1x1x4xf32> to vector<16x16x4xf32>
    %6 = arith.mulf %3, %5 : vector<16x16x4xf32>
    %c0_8 = arith.constant 0 : index
    %c0_9 = arith.constant 0 : index
    %c0_10 = arith.constant 0 : index
    %7 = vector.load %arg4[%c0_8, %c0_9, %c0_10] : memref<1x1x4xf32, #tpu.memory_space<vmem>>, vector<1x1x4xf32>
    %8 = vector.broadcast %7 : vector<1x1x4xf32> to vector<16x16x4xf32>
    %9 = arith.addf %6, %8 : vector<16x16x4xf32>
    %cst = arith.constant 0.000000e+00 : f32
    %10 = vector.broadcast %cst : f32 to vector<16x16x4xf32>
    %11 = arith.cmpf oge, %9, %10 : vector<16x16x4xf32>
    %12 = vector.broadcast %0 : f32 to vector<16x16x4xf32>
    %13 = arith.mulf %12, %9 : vector<16x16x4xf32>
    %14 = arith.select %11, %9, %13 : vector<16x16x4xi1>, vector<16x16x4xf32>
    %cst_11 = arith.constant 0.000000e+00 : bf16
    %15 = vector.broadcast %cst_11 : bf16 to vector<18x18x4xbf16>
    %c0_12 = arith.constant 0 : index
    %c0_13 = arith.constant 0 : index
    %c0_14 = arith.constant 0 : index
    %16 = vector.load %arg9[%c0_12, %c0_13, %c0_14] : memref<18x18x4xbf16, #tpu.memory_space<vmem>>, vector<18x18x4xbf16>
    tpu.vector_store %arg9[%c0_12, %c0_13, %c0_14], %15 {strides = array<i32>} : memref<18x18x4xbf16, #tpu.memory_space<vmem>>, vector<18x18x4xbf16>,
    %17 = arith.truncf %14 : vector<16x16x4xf32> to vector<16x16x4xbf16>
    %c1 = arith.constant 1 : index
    %c1_15 = arith.constant 1 : index
    %c0_16 = arith.constant 0 : index
    %18 = vector.load %arg9[%c1, %c1_15, %c0_16] : memref<18x18x4xbf16, #tpu.memory_space<vmem>>, vector<16x16x4xbf16>
    tpu.vector_store %arg9[%c1, %c1_15, %c0_16], %17 {strides = array<i32>} : memref<18x18x4xbf16, #tpu.memory_space<vmem>>, vector<16x16x4xbf16>,
    %cst_17 = arith.constant 0.000000e+00 : f32
    %19 = vector.broadcast %cst_17 : f32 to vector<1x4xf32>
    %c0_i32 = arith.constant 0 : i32
    %c2_i32 = arith.constant 2 : i32
    %20 = arith.addi %c0_i32, %c2_i32 : i32
    %c1_i32 = arith.constant 1 : i32
    %21:2 = scf.for %arg10 = %c0_i32 to %20 step %c1_i32 iter_args(%arg11 = %19, %arg12 = %19) -> (vector<1x4xf32>, vector<1x4xf32>)  : i32 {
      %c8_i32 = arith.constant 8 : i32
      %26 = arith.muli %arg10, %c8_i32 : i32
      %27 = tpu.assume_multiple %26, 8 : i32
      %c0_i32_25 = arith.constant 0 : i32
      %28 = arith.addi %27, %c0_i32_25 : i32
      %29 = arith.index_cast %28 : i32 to index
      %c0_26 = arith.constant 0 : index
      %c0_27 = arith.constant 0 : index
      %30 = vector.load %arg9[%29, %c0_26, %c0_27] : memref<18x18x4xbf16, #tpu.memory_space<vmem>>, vector<8x16x4xbf16>
      %31 = vector.shape_cast %30 : vector<8x16x4xbf16> to vector<128x4xbf16>
      %c0_i32_28 = arith.constant 0 : i32
      %32 = arith.addi %27, %c0_i32_28 : i32
      %33 = arith.index_cast %32 : i32 to index
      %c1_29 = arith.constant 1 : index
      %c0_30 = arith.constant 0 : index
      %34 = vector.load %arg9[%33, %c1_29, %c0_30] : memref<18x18x4xbf16, #tpu.memory_space<vmem>>, vector<8x16x4xbf16>
      %35 = vector.shape_cast %34 : vector<8x16x4xbf16> to vector<128x4xbf16>
      %c0_i32_31 = arith.constant 0 : i32
      %36 = arith.addi %27, %c0_i32_31 : i32
      %37 = arith.index_cast %36 : i32 to index
      %c2 = arith.constant 2 : index
      %c0_32 = arith.constant 0 : index
      %38 = vector.load %arg9[%37, %c2, %c0_32] : memref<18x18x4xbf16, #tpu.memory_space<vmem>>, vector<8x16x4xbf16>
      %39 = vector.shape_cast %38 : vector<8x16x4xbf16> to vector<128x4xbf16>
      %c1_i32_33 = arith.constant 1 : i32
      %40 = arith.addi %27, %c1_i32_33 : i32
      %41 = arith.index_cast %40 : i32 to index
      %c0_34 = arith.constant 0 : index
      %c0_35 = arith.constant 0 : index
      %42 = vector.load %arg9[%41, %c0_34, %c0_35] : memref<18x18x4xbf16, #tpu.memory_space<vmem>>, vector<8x16x4xbf16>
      %43 = vector.shape_cast %42 : vector<8x16x4xbf16> to vector<128x4xbf16>
      %c1_i32_36 = arith.constant 1 : i32
      %44 = arith.addi %27, %c1_i32_36 : i32
      %45 = arith.index_cast %44 : i32 to index
      %c1_37 = arith.constant 1 : index
      %c0_38 = arith.constant 0 : index
      %46 = vector.load %arg9[%45, %c1_37, %c0_38] : memref<18x18x4xbf16, #tpu.memory_space<vmem>>, vector<8x16x4xbf16>
      %47 = vector.shape_cast %46 : vector<8x16x4xbf16> to vector<128x4xbf16>
      %c1_i32_39 = arith.constant 1 : i32
      %48 = arith.addi %27, %c1_i32_39 : i32
      %49 = arith.index_cast %48 : i32 to index
      %c2_40 = arith.constant 2 : index
      %c0_41 = arith.constant 0 : index
      %50 = vector.load %arg9[%49, %c2_40, %c0_41] : memref<18x18x4xbf16, #tpu.memory_space<vmem>>, vector<8x16x4xbf16>
      %51 = vector.shape_cast %50 : vector<8x16x4xbf16> to vector<128x4xbf16>
      %c2_i32_42 = arith.constant 2 : i32
      %52 = arith.addi %27, %c2_i32_42 : i32
      %53 = arith.index_cast %52 : i32 to index
      %c0_43 = arith.constant 0 : index
      %c0_44 = arith.constant 0 : index
      %54 = vector.load %arg9[%53, %c0_43, %c0_44] : memref<18x18x4xbf16, #tpu.memory_space<vmem>>, vector<8x16x4xbf16>
      %55 = vector.shape_cast %54 : vector<8x16x4xbf16> to vector<128x4xbf16>
      %c2_i32_45 = arith.constant 2 : i32
      %56 = arith.addi %27, %c2_i32_45 : i32
      %57 = arith.index_cast %56 : i32 to index
      %c1_46 = arith.constant 1 : index
      %c0_47 = arith.constant 0 : index
      %58 = vector.load %arg9[%57, %c1_46, %c0_47] : memref<18x18x4xbf16, #tpu.memory_space<vmem>>, vector<8x16x4xbf16>
      %59 = vector.shape_cast %58 : vector<8x16x4xbf16> to vector<128x4xbf16>
      %c2_i32_48 = arith.constant 2 : i32
      %60 = arith.addi %27, %c2_i32_48 : i32
      %61 = arith.index_cast %60 : i32 to index
      %c2_49 = arith.constant 2 : index
      %c0_50 = arith.constant 0 : index
      %62 = vector.load %arg9[%61, %c2_49, %c0_50] : memref<18x18x4xbf16, #tpu.memory_space<vmem>>, vector<8x16x4xbf16>
      %63 = vector.shape_cast %62 : vector<8x16x4xbf16> to vector<128x4xbf16>
      %64 = tpu.concatenate %31, %35, %39, %43, %47, %51, %55, %59, %63 in 1 : vector<128x4xbf16>, vector<128x4xbf16>, vector<128x4xbf16>, vector<128x4xbf16>, vector<128x4xbf16>, vector<128x4xbf16>, vector<128x4xbf16>, vector<128x4xbf16>, vector<128x4xbf16> -> vector<128x36xbf16>
      %c0_51 = arith.constant 0 : index
      %c0_52 = arith.constant 0 : index
      %65 = vector.load %arg2[%c0_51, %c0_52] : memref<36x4xbf16, #tpu.memory_space<vmem>>, vector<36x4xbf16>
      %cst_53 = arith.constant dense<0.000000e+00> : vector<128x4xf32>
      %66 = tpu.matmul %64, %65, %cst_53 {dimension_numbers = #tpu.dot_dimension_numbers<[1], [0], [0], [1], [0, 0, 1, 1], [], []>} : vector<128x36xbf16>, vector<36x4xbf16>, vector<128x4xf32> -> vector<128x4xf32>
      %67 = vector.shape_cast %66 : vector<128x4xf32> to vector<8x16x4xf32>
      %68 = arith.truncf %67 : vector<8x16x4xf32> to vector<8x16x4xbf16>
      %c0_54 = arith.constant 0 : index
      %69 = arith.index_cast %27 : i32 to index
      %c0_55 = arith.constant 0 : index
      %c0_56 = arith.constant 0 : index
      %70 = vector.load %arg6[%c0_54, %69, %c0_55, %c0_56] : memref<1x16x16x4xbf16, #tpu.memory_space<vmem>>, vector<1x8x16x4xbf16>
      %71 = vector.shape_cast %70 : vector<1x8x16x4xbf16> to vector<8x16x4xbf16>
      %72 = vector.shape_cast %68 : vector<8x16x4xbf16> to vector<1x8x16x4xbf16>
      tpu.vector_store %arg6[%c0_54, %69, %c0_55, %c0_56], %72 {strides = array<i32>} : memref<1x16x16x4xbf16, #tpu.memory_space<vmem>>, vector<1x8x16x4xbf16>,
      %cst_57 = arith.constant dense<0.000000e+00> : vector<4xf32>
      %73 = vector.multi_reduction <add>, %66, %cst_57 [0] : vector<128x4xf32> to vector<4xf32>
      %74 = vector.shape_cast %73 : vector<4xf32> to vector<1x4xf32>
      %75 = arith.addf %arg11, %74 : vector<1x4xf32>
      %76 = arith.mulf %66, %66 : vector<128x4xf32>
      %cst_58 = arith.constant dense<0.000000e+00> : vector<4xf32>
      %77 = vector.multi_reduction <add>, %76, %cst_58 [0] : vector<128x4xf32> to vector<4xf32>
      %78 = vector.shape_cast %77 : vector<4xf32> to vector<1x4xf32>
      %79 = arith.addf %arg12, %78 : vector<1x4xf32>
      scf.yield %75, %79 : vector<1x4xf32>, vector<1x4xf32>
    }
    %c2_i32_18 = arith.constant 2 : i32
    %22 = vector.shape_cast %21#0 : vector<1x4xf32> to vector<1x1x4xf32>
    %c0_19 = arith.constant 0 : index
    %c0_20 = arith.constant 0 : index
    %c0_21 = arith.constant 0 : index
    %23 = vector.load %arg7[%c0_19, %c0_20, %c0_21] : memref<1x1x4xf32, #tpu.memory_space<vmem>>, vector<1x1x4xf32>
    tpu.vector_store %arg7[%c0_19, %c0_20, %c0_21], %22 {strides = array<i32>} : memref<1x1x4xf32, #tpu.memory_space<vmem>>, vector<1x1x4xf32>,
    %24 = vector.shape_cast %21#1 : vector<1x4xf32> to vector<1x1x4xf32>
    %c0_22 = arith.constant 0 : index
    %c0_23 = arith.constant 0 : index
    %c0_24 = arith.constant 0 : index
    %25 = vector.load %arg8[%c0_22, %c0_23, %c0_24] : memref<1x1x4xf32, #tpu.memory_space<vmem>>, vector<1x1x4xf32>
    tpu.vector_store %arg8[%c0_22, %c0_23, %c0_24], %24 {strides = array<i32>} : memref<1x1x4xf32, #tpu.memory_space<vmem>>, vector<1x1x4xf32>,
    return
  }
  func.func @transform_0(%arg0: i32) -> (i32, i32, i32, i32) {
    %c0_i32 = arith.constant 0 : i32
    %c0_i32_0 = arith.constant 0 : i32
    %c0_i32_1 = arith.constant 0 : i32
    %c0_i32_2 = arith.constant 0 : i32
    return %arg0, %c0_i32, %c0_i32_0, %c0_i32_1 : i32, i32, i32, i32
  }
  func.func @transform_1(%arg0: i32) -> (i32, i32) {
    %c0_i32 = arith.constant 0 : i32
    %c0_i32_0 = arith.constant 0 : i32
    %c0_i32_1 = arith.constant 0 : i32
    return %c0_i32, %c0_i32_0 : i32, i32
  }
  func.func @transform_2(%arg0: i32) -> (i32, i32, i32) {
    %c0_i32 = arith.constant 0 : i32
    %c0_i32_0 = arith.constant 0 : i32
    %c0_i32_1 = arith.constant 0 : i32
    %c0_i32_2 = arith.constant 0 : i32
    return %c0_i32, %c0_i32_0, %c0_i32_1 : i32, i32, i32
  }
  func.func @transform_3(%arg0: i32) -> (i32, i32, i32) {
    %c0_i32 = arith.constant 0 : i32
    %c0_i32_0 = arith.constant 0 : i32
    %c0_i32_1 = arith.constant 0 : i32
    %c0_i32_2 = arith.constant 0 : i32
    return %c0_i32, %c0_i32_0, %c0_i32_1 : i32, i32, i32
  }
  func.func @transform_4(%arg0: i32) -> (i32, i32) {
    %c0_i32 = arith.constant 0 : i32
    %c0_i32_0 = arith.constant 0 : i32
    %c0_i32_1 = arith.constant 0 : i32
    return %c0_i32, %c0_i32_0 : i32, i32
  }
  func.func @transform_5(%arg0: i32) -> (i32, i32, i32, i32) {
    %c0_i32 = arith.constant 0 : i32
    %c0_i32_0 = arith.constant 0 : i32
    %c0_i32_1 = arith.constant 0 : i32
    %c0_i32_2 = arith.constant 0 : i32
    return %arg0, %c0_i32, %c0_i32_0, %c0_i32_1 : i32, i32, i32, i32
  }
  func.func @transform_6(%arg0: i32) -> (i32, i32, i32) {
    %c0_i32 = arith.constant 0 : i32
    %c0_i32_0 = arith.constant 0 : i32
    %c0_i32_1 = arith.constant 0 : i32
    return %arg0, %c0_i32, %c0_i32_0 : i32, i32, i32
  }
  func.func @transform_7(%arg0: i32) -> (i32, i32, i32) {
    %c0_i32 = arith.constant 0 : i32
    %c0_i32_0 = arith.constant 0 : i32
    %c0_i32_1 = arith.constant 0 : i32
    return %arg0, %c0_i32, %c0_i32_0 : i32, i32, i32
  }
}

</mosaic_0001>

<llo_original>
// kernel: residual_block.5
$region0: #{residual_block.5}
  #allocation0 [shape = 'u32[]', space=smem, size = 0x4, offset = 0x4, fixed_abs, tag = 'smem constant byte address 0x4 - core index']
  #allocation1 [shape = 'u32[144,128]{1,0:T(1,128)}', space=vmem, size = 0x12000, scoped, tag = 'internal scratch']
  %s0 = inlined_call_operand.vmem [shape: bf16[2,16,16,4], index: 0, kind: input, shape index: {}]
  %s1 = inlined_call_operand.vmem [shape: f32[2,16,16,4], index: 1, kind: input, shape index: {}]
  %s2 = inlined_call_operand.vmem [shape: f32[1,1,4], index: 2, kind: input, shape index: {}]
  %s3 = inlined_call_operand.vmem [shape: f32[1,1,4], index: 3, kind: input, shape index: {}]
  %s4 = inlined_call_operand.vmem [shape: f32[2,16,16,4], index: 4, kind: output, shape index: {}]
  %s5 = sld [smem:[#allocation0]]
  $region49: #{residual_block.5} parent=0
    _
  %s7 = ssub.s32 1, %s5
  %s8 = scalar_select 0, %s7, %s5
  loop: start=0, step=1, limit=4
  $region2: #{residual_block.5} parent=0 // loop_pre_header
    _
  $region3: #{residual_block.5} parent=0 // loop_header
    %s10 = sphi 0, %s14
    %p11 = scmp.ge.s32.totalorder %s10, 4
    %s20 = sphi 0, %s22
    %s23 = sphi 0, %s20
    %s24 = sphi 0, %s23
    %s40 = sphi 0, %s24
    %s46 = sphi 0, %s48
    %s49 = sphi 0, %s46
    %s50 = sphi 0, %s49
    %s66 = sphi 0, %s50
    %s70 = sphi 0, %s70
    %s72 = sphi 0, %s70
    %s73 = sphi 0, %s72
    %s87 = sphi 0, %s73
    %s91 = sphi 0, %s91
    %s93 = sphi 0, %s91
    %s94 = sphi 0, %s93
    %s108 = sphi 0, %s94
    %s114 = sphi 0, %s116
    %s117 = sphi 0, %s114
    %s118 = sphi 0, %s117
    %s134 = sphi 0, %s118
  $region4: #{residual_block.5} parent=0 // loop_header_branch
    %13 = sbr.rel (%p11) target = $region8
  $region5: #{residual_block.5} parent=0 // loop_body
    %s15 = ssub.s32 %s10, 1
    %s16 = ssub.s32 %s10, 2
    %s17 = sadd.s32 %s10, 1
    %s18 = ssub.s32 %s10, %s17
    %p19 = scmp.eq.s32.totalorder %s18, 0
    %s21 = sadd.s32 %s20, 1
    %s22 = scalar_select %p19, %s20, %s21
    %p25 = pneg %p19
    %p26 = scmp.eq.s32.totalorder %s10, 1
    %p27 = por %p25, %p26
    %p28 = scmp.ne.s32.totalorder %s20, %s23
    %p29 = scmp.eq.s32.totalorder %s10, 0
    %p30 = por %p28, %p29
    %p31 = scmp.ne.s32.totalorder %s20, %s23
    %p32 = scmp.eq.s32.totalorder %s15, 1
    %p33 = por %p31, %p32
    %p34 = scmp.ne.s32.totalorder %s23, %s24
    %p35 = scmp.eq.s32.totalorder %s15, 0
    %p36 = por %p34, %p35
    %p37 = scmp.ne.s32.totalorder %s23, %s24
    %p38 = scmp.eq.s32.totalorder %s16, 1
    %p39 = por %p37, %p38
    %p41 = scmp.ne.s32.totalorder %s24, %s40
    %p42 = scmp.eq.s32.totalorder %s16, 0
    %p43 = por %p41, %p42
    %s44 = ssub.s32 %s10, %s17
    %p45 = scmp.eq.s32.totalorder %s44, 0
    %s47 = sadd.s32 %s46, 1
    %s48 = scalar_select %p45, %s46, %s47
    %p51 = pneg %p45
    %p52 = scmp.eq.s32.totalorder %s10, 1
    %p53 = por %p51, %p52
    %p54 = scmp.ne.s32.totalorder %s46, %s49
    %p55 = scmp.eq.s32.totalorder %s10, 0
    %p56 = por %p54, %p55
    %p57 = scmp.ne.s32.totalorder %s46, %s49
    %p58 = scmp.eq.s32.totalorder %s15, 1
    %p59 = por %p57, %p58
    %p60 = scmp.ne.s32.totalorder %s49, %s50
    %p61 = scmp.eq.s32.totalorder %s15, 0
    %p62 = por %p60, %p61
    %p63 = scmp.ne.s32.totalorder %s49, %s50
    %p64 = scmp.eq.s32.totalorder %s16, 1
    %p65 = por %p63, %p64
    %p67 = scmp.ne.s32.totalorder %s50, %s66
    %p68 = scmp.eq.s32.totalorder %s16, 0
    %p69 = por %p67, %p68
    %s71 = sadd.s32 %s70, 1
    %p74 = scmp.eq.s32.totalorder %s10, 1
    %p75 = scmp.ne.s32.totalorder %s70, %s72
    %p76 = scmp.eq.s32.totalorder %s10, 0
    %p77 = por %p75, %p76
    %p78 = scmp.ne.s32.totalorder %s70, %s72
    %p79 = scmp.eq.s32.totalorder %s15, 1
    %p80 = por %p78, %p79
    %p81 = scmp.ne.s32.totalorder %s72, %s73
    %p82 = scmp.eq.s32.totalorder %s15, 0
    %p83 = por %p81, %p82
    %p84 = scmp.ne.s32.totalorder %s72, %s73
    %p85 = scmp.eq.s32.totalorder %s16, 1
    %p86 = por %p84, %p85
    %p88 = scmp.ne.s32.totalorder %s73, %s87
    %p89 = scmp.eq.s32.totalorder %s16, 0
    %p90 = por %p88, %p89
    %s92 = sadd.s32 %s91, 1
    %p95 = scmp.eq.s32.totalorder %s10, 1
    %p96 = scmp.ne.s32.totalorder %s91, %s93
    %p97 = scmp.eq.s32.totalorder %s10, 0
    %p98 = por %p96, %p97
    %p99 = scmp.ne.s32.totalorder %s91, %s93
    %p100 = scmp.eq.s32.totalorder %s15, 1
    %p101 = por %p99, %p100
    %p102 = scmp.ne.s32.totalorder %s93, %s94
    %p103 = scmp.eq.s32.totalorder %s15, 0
    %p104 = por %p102, %p103
    %p105 = scmp.ne.s32.totalorder %s93, %s94
    %p106 = scmp.eq.s32.totalorder %s16, 1
    %p107 = por %p105, %p106
    %p109 = scmp.ne.s32.totalorder %s94, %s108
    %p110 = scmp.eq.s32.totalorder %s16, 0
    %p111 = por %p109, %p110
    %s112 = ssub.s32 %s10, %s17
    %p113 = scmp.eq.s32.totalorder %s112, 0
    %s115 = sadd.s32 %s114, 1
    %s116 = scalar_select %p113, %s114, %s115
    %p119 = pneg %p113
    %p120 = scmp.eq.s32.totalorder %s10, 1
    %p121 = por %p119, %p120
    %p122 = scmp.ne.s32.totalorder %s114, %s117
    %p123 = scmp.eq.s32.totalorder %s10, 0
    %p124 = por %p122, %p123
    %p125 = scmp.ne.s32.totalorder %s114, %s117
    %p126 = scmp.eq.s32.totalorder %s15, 1
    %p127 = por %p125, %p126
    %p128 = scmp.ne.s32.totalorder %s117, %s118
    %p129 = scmp.eq.s32.totalorder %s15, 0
    %p130 = por %p128, %p129
    %p131 = scmp.ne.s32.totalorder %s117, %s118
    %p132 = scmp.eq.s32.totalorder %s16, 1
    %p133 = por %p131, %p132
    %p135 = scmp.ne.s32.totalorder %s118, %s134
    %p136 = scmp.eq.s32.totalorder %s16, 0
    %p137 = por %p135, %p136
    %p138 = scmp.le.s32.totalorder 1, %s10
    %p139 = scmp.lt.s32.totalorder %s10, 3
    %p140 = pnand %p138, %p139
    %p141 = pneg %p140
    // Predicated region
    $region9: #{residual_block.5} parent=5 // pred_check
      _
    $region10: #{residual_block.5} parent=5 // pred_check_branch
      %143 = sbr.rel (%p140) target = $region12
    $region11: #{residual_block.5} parent=5 // pred_region
      %s144 = ssub.s32 %s10, 1
      // Predicated region
      $region13: #{residual_block.5} parent=11 // pred_check
        %p145 = pneg %p83
      $region14: #{residual_block.5} parent=11 // pred_check_branch
        %147 = sbr.rel (%p145) target = $region16
      $region15: #{residual_block.5} parent=11 // pred_region
        _
      $region16: #{residual_block.5} parent=11 // pred_fallthru
        _
      // Predicated region
      $region17: #{residual_block.5} parent=11 // pred_check
        %p148 = pneg %p104
      $region18: #{residual_block.5} parent=11 // pred_check_branch
        %150 = sbr.rel (%p148) target = $region20
      $region19: #{residual_block.5} parent=11 // pred_region
        _
      $region20: #{residual_block.5} parent=11 // pred_fallthru
        _
    $region12: #{residual_block.5} parent=5 // pred_fallthru
      _
    %p151 = scmp.lt.s32.totalorder %s10, 2
    // Predicated region
    $region21: #{residual_block.5} parent=5 // pred_check
      %p152 = pneg %p151
    $region22: #{residual_block.5} parent=5 // pred_check_branch
      %154 = sbr.rel (%p152) target = $region24
    $region23: #{residual_block.5} parent=5 // pred_region
      // Predicated region
      $region25: #{residual_block.5} parent=23 // pred_check
        %p155 = pneg %p30
      $region26: #{residual_block.5} parent=23 // pred_check_branch
        %157 = sbr.rel (%p155) target = $region28
      $region27: #{residual_block.5} parent=23 // pred_region
        %p158 = scmp.lt.s32.totalorder %s10, 1
        %s159 = scalar_select %p158, %s10, 1
        %s160 = smul.addr %s159, 32
        %s161 = smul.addr %s160, 4
        %s162 = scalar_lea.vmem %s0, %s161
      $region28: #{residual_block.5} parent=23 // pred_fallthru
        _
      // Predicated region
      $region29: #{residual_block.5} parent=23 // pred_check
        %p163 = pneg %p56
      $region30: #{residual_block.5} parent=23 // pred_check_branch
        %165 = sbr.rel (%p163) target = $region32
      $region31: #{residual_block.5} parent=23 // pred_region
        %p166 = scmp.lt.s32.totalorder %s10, 1
        %s167 = scalar_select %p166, %s10, 1
        %s168 = smul.addr %s167, 32
        %s169 = smul.addr %s168, 8
        %s170 = scalar_lea.vmem %s1, %s169
      $region32: #{residual_block.5} parent=23 // pred_fallthru
        _
    $region24: #{residual_block.5} parent=5 // pred_fallthru
      _
    %p171 = scmp.le.s32.totalorder 1, %s10
    %p172 = scmp.lt.s32.totalorder %s10, 3
    %p173 = pnand %p171, %p172
    %p174 = pneg %p173
    // Predicated region
    $region33: #{residual_block.5} parent=5 // pred_check
      _
    $region34: #{residual_block.5} parent=5 // pred_check_branch
      %176 = sbr.rel (%p173) target = $region36
    $region35: #{residual_block.5} parent=5 // pred_region
      %s177 = ssub.s32 %s10, 1
      %p178 = scmp.lt.s32.totalorder %s15, 1
      %s179 = scalar_select %p178, %s15, 1
      %s180 = smul.addr %s179, 32
      %s181 = smul.addr %s180, 4
      %s182 = scalar_lea.vmem %s0, %s181
      %p183 = pneg %p36
      %p184 = pneg %p33
      %p185 = scmp.lt.s32.totalorder %s15, 1
      %s186 = scalar_select %p185, %s15, 1
      %s187 = smul.addr %s186, 32
      %s188 = smul.addr %s187, 8
      %s189 = scalar_lea.vmem %s1, %s188
      %p190 = pneg %p62
      %p191 = pneg %p59
      %p192 = pneg %p83
      %p193 = pneg %p80
      %p194 = pneg %p104
      %p195 = pneg %p101
      %p196 = pneg %p130
      %p197 = pneg %p127
      %p198 = scmp.lt.s32.totalorder %s15, 1
      %s199 = scalar_select %p198, %s15, 1
      %s200 = smul.addr %s199, 32
      %s201 = smul.addr %s200, 8
      %s202 = scalar_lea.vmem %s4, %s201
      %p203 = scmp.lt.s32.totalorder %s15, 1
      %s204 = scalar_select %p203, %s15, 1
      %s205 = smul.addr %s204, 32
      %s206 = smul.addr %s205, 4
      %s207 = scalar_lea.vmem %s0, %s206
      %p208 = scmp.lt.s32.totalorder %s15, 1
      %s209 = scalar_select %p208, %s15, 1
      %s210 = smul.addr %s209, 32
      %s211 = smul.addr %s210, 8
      %s212 = scalar_lea.vmem %s1, %s211
      %p213 = scmp.lt.s32.totalorder %s15, 1
      %s214 = scalar_select %p213, %s15, 1
      %s215 = smul.addr %s214, 32
      %s216 = smul.addr %s215, 8
      %s217 = scalar_lea.vmem %s4, %s216
      %v218 = vld [vmem:[%s207] sm:$0xf]
      %v219 = vld [vmem:[%s207 + $0x4] sm:$0xf]
      %v220 = vld [vmem:[%s207 + $0x8] sm:$0xf]
      %v221 = vld [vmem:[%s207 + $0xc] sm:$0xf]
      %v222 = vld [vmem:[%s207 + $0x10] sm:$0xf]
      %v223 = vld [vmem:[%s207 + $0x14] sm:$0xf]
      %v224 = vld [vmem:[%s207 + $0x18] sm:$0xf]
      %v225 = vld [vmem:[%s207 + $0x1c] sm:$0xf]
      %v226 = vld [vmem:[%s207 + $0x20] sm:$0xf]
      %v227 = vld [vmem:[%s207 + $0x24] sm:$0xf]
      %v228 = vld [vmem:[%s207 + $0x28] sm:$0xf]
      %v229 = vld [vmem:[%s207 + $0x2c] sm:$0xf]
      %v230 = vld [vmem:[%s207 + $0x30] sm:$0xf]
      %v231 = vld [vmem:[%s207 + $0x34] sm:$0xf]
      %v232 = vld [vmem:[%s207 + $0x38] sm:$0xf]
      %v233 = vld [vmem:[%s207 + $0x3c] sm:$0xf]
      %v234 = vld [vmem:[%s207 + $0x40] sm:$0xf]
      %v235 = vld [vmem:[%s207 + $0x44] sm:$0xf]
      %v236 = vld [vmem:[%s207 + $0x48] sm:$0xf]
      %v237 = vld [vmem:[%s207 + $0x4c] sm:$0xf]
      %v238 = vld [vmem:[%s207 + $0x50] sm:$0xf]
      %v239 = vld [vmem:[%s207 + $0x54] sm:$0xf]
      %v240 = vld [vmem:[%s207 + $0x58] sm:$0xf]
      %v241 = vld [vmem:[%s207 + $0x5c] sm:$0xf]
      %v242 = vld [vmem:[%s207 + $0x60] sm:$0xf]
      %v243 = vld [vmem:[%s207 + $0x64] sm:$0xf]
      %v244 = vld [vmem:[%s207 + $0x68] sm:$0xf]
      %v245 = vld [vmem:[%s207 + $0x6c] sm:$0xf]
      %v246 = vld [vmem:[%s207 + $0x70] sm:$0xf]
      %v247 = vld [vmem:[%s207 + $0x74] sm:$0xf]
      %v248 = vld [vmem:[%s207 + $0x78] sm:$0xf]
      %v249 = vld [vmem:[%s207 + $0x7c] sm:$0xf]
      %v250 = vunpack.c.l.bf16 %v218
      %v251 = vunpack.c.l.bf16 %v219
      %v252 = vunpack.c.l.bf16 %v220
      %v253 = vunpack.c.l.bf16 %v221
      %v254 = vunpack.c.l.bf16 %v222
      %v255 = vunpack.c.l.bf16 %v223
      %v256 = vunpack.c.l.bf16 %v224
      %v257 = vunpack.c.l.bf16 %v225
      %v258 = vunpack.c.l.bf16 %v226
      %v259 = vunpack.c.l.bf16 %v227
      %v260 = vunpack.c.l.bf16 %v228
      %v261 = vunpack.c.l.bf16 %v229
      %v262 = vunpack.c.l.bf16 %v230
      %v263 = vunpack.c.l.bf16 %v231
      %v264 = vunpack.c.l.bf16 %v232
      %v265 = vunpack.c.l.bf16 %v233
      %v266 = vunpack.c.l.bf16 %v234
      %v267 = vunpack.c.l.bf16 %v235
      %v268 = vunpack.c.l.bf16 %v236
      %v269 = vunpack.c.l.bf16 %v237
      %v270 = vunpack.c.l.bf16 %v238
      %v271 = vunpack.c.l.bf16 %v239
      %v272 = vunpack.c.l.bf16 %v240
      %v273 = vunpack.c.l.bf16 %v241
      %v274 = vunpack.c.l.bf16 %v242
      %v275 = vunpack.c.l.bf16 %v243
      %v276 = vunpack.c.l.bf16 %v244
      %v277 = vunpack.c.l.bf16 %v245
      %v278 = vunpack.c.l.bf16 %v246
      %v279 = vunpack.c.l.bf16 %v247
      %v280 = vunpack.c.l.bf16 %v248
      %v281 = vunpack.c.l.bf16 %v249
      %v282 = vld [vmem:[%s2] sm:$0x1]
      %v284 = vlaneseq
      %v285 = vshrl.u32 %v284, 7
      %v286 = vsub.s32 0, %v285
      %v287 = vrot.slane %v282, %v286
      %v289 = vmul.f32 %v250, %v287
      %v290 = vmul.f32 %v251, %v287
      %v291 = vmul.f32 %v252, %v287
      %v292 = vmul.f32 %v253, %v287
      %v293 = vmul.f32 %v254, %v287
      %v294 = vmul.f32 %v255, %v287
      %v295 = vmul.f32 %v256, %v287
      %v296 = vmul.f32 %v257, %v287
      %v297 = vmul.f32 %v258, %v287
      %v298 = vmul.f32 %v259, %v287
      %v299 = vmul.f32 %v260, %v287
      %v300 = vmul.f32 %v261, %v287
      %v301 = vmul.f32 %v262, %v287
      %v302 = vmul.f32 %v263, %v287
      %v303 = vmul.f32 %v264, %v287
      %v304 = vmul.f32 %v265, %v287
      %v305 = vmul.f32 %v266, %v287
      %v306 = vmul.f32 %v267, %v287
      %v307 = vmul.f32 %v268, %v287
      %v308 = vmul.f32 %v269, %v287
      %v309 = vmul.f32 %v270, %v287
      %v310 = vmul.f32 %v271, %v287
      %v311 = vmul.f32 %v272, %v287
      %v312 = vmul.f32 %v273, %v287
      %v313 = vmul.f32 %v274, %v287
      %v314 = vmul.f32 %v275, %v287
      %v315 = vmul.f32 %v276, %v287
      %v316 = vmul.f32 %v277, %v287
      %v317 = vmul.f32 %v278, %v287
      %v318 = vmul.f32 %v279, %v287
      %v319 = vmul.f32 %v280, %v287
      %v320 = vmul.f32 %v281, %v287
      %v321 = vld [vmem:[%s3] sm:$0x1]
      %v323 = vlaneseq
      %v324 = vshrl.u32 %v323, 7
      %v325 = vsub.s32 0, %v324
      %v326 = vrot.slane %v321, %v325
      %v328 = vadd.f32 %v289, %v326
      %v329 = vadd.f32 %v290, %v326
      %v330 = vadd.f32 %v291, %v326
      %v331 = vadd.f32 %v292, %v326
      %v332 = vadd.f32 %v293, %v326
      %v333 = vadd.f32 %v294, %v326
      %v334 = vadd.f32 %v295, %v326
      %v335 = vadd.f32 %v296, %v326
      %v336 = vadd.f32 %v297, %v326
      %v337 = vadd.f32 %v298, %v326
      %v338 = vadd.f32 %v299, %v326
      %v339 = vadd.f32 %v300, %v326
      %v340 = vadd.f32 %v301, %v326
      %v341 = vadd.f32 %v302, %v326
      %v342 = vadd.f32 %v303, %v326
      %v343 = vadd.f32 %v304, %v326
      %v344 = vadd.f32 %v305, %v326
      %v345 = vadd.f32 %v306, %v326
      %v346 = vadd.f32 %v307, %v326
      %v347 = vadd.f32 %v308, %v326
      %v348 = vadd.f32 %v309, %v326
      %v349 = vadd.f32 %v310, %v326
      %v350 = vadd.f32 %v311, %v326
      %v351 = vadd.f32 %v312, %v326
      %v352 = vadd.f32 %v313, %v326
      %v353 = vadd.f32 %v314, %v326
      %v354 = vadd.f32 %v315, %v326
      %v355 = vadd.f32 %v316, %v326
      %v356 = vadd.f32 %v317, %v326
      %v357 = vadd.f32 %v318, %v326
      %v358 = vadd.f32 %v319, %v326
      %v359 = vadd.f32 %v320, %v326
      %v360 = vld [vmem:[%s212] sm:$0xff]
      %v361 = vld [vmem:[%s212 + $0x8] sm:$0xff]
      %v362 = vld [vmem:[%s212 + $0x10] sm:$0xff]
      %v363 = vld [vmem:[%s212 + $0x18] sm:$0xff]
      %v364 = vld [vmem:[%s212 + $0x20] sm:$0xff]
      %v365 = vld [vmem:[%s212 + $0x28] sm:$0xff]
      %v366 = vld [vmem:[%s212 + $0x30] sm:$0xff]
      %v367 = vld [vmem:[%s212 + $0x38] sm:$0xff]
      %v368 = vld [vmem:[%s212 + $0x40] sm:$0xff]
      %v369 = vld [vmem:[%s212 + $0x48] sm:$0xff]
      %v370 = vld [vmem:[%s212 + $0x50] sm:$0xff]
      %v371 = vld [vmem:[%s212 + $0x58] sm:$0xff]
      %v372 = vld [vmem:[%s212 + $0x60] sm:$0xff]
      %v373 = vld [vmem:[%s212 + $0x68] sm:$0xff]
      %v374 = vld [vmem:[%s212 + $0x70] sm:$0xff]
      %v375 = vld [vmem:[%s212 + $0x78] sm:$0xff]
      %v376 = vld [vmem:[%s212 + $0x80] sm:$0xff]
      %v377 = vld [vmem:[%s212 + $0x88] sm:$0xff]
      %v378 = vld [vmem:[%s212 + $0x90] sm:$0xff]
      %v379 = vld [vmem:[%s212 + $0x98] sm:$0xff]
      %v380 = vld [vmem:[%s212 + $0xa0] sm:$0xff]
      %v381 = vld [vmem:[%s212 + $0xa8] sm:$0xff]
      %v382 = vld [vmem:[%s212 + $0xb0] sm:$0xff]
      %v383 = vld [vmem:[%s212 + $0xb8] sm:$0xff]
      %v384 = vld [vmem:[%s212 + $0xc0] sm:$0xff]
      %v385 = vld [vmem:[%s212 + $0xc8] sm:$0xff]
      %v386 = vld [vmem:[%s212 + $0xd0] sm:$0xff]
      %v387 = vld [vmem:[%s212 + $0xd8] sm:$0xff]
      %v388 = vld [vmem:[%s212 + $0xe0] sm:$0xff]
      %v389 = vld [vmem:[%s212 + $0xe8] sm:$0xff]
      %v390 = vld [vmem:[%s212 + $0xf0] sm:$0xff]
      %v391 = vld [vmem:[%s212 + $0xf8] sm:$0xff]
      %v392 = vadd.f32 %v328, %v360
      %v393 = vadd.f32 %v329, %v361
      %v394 = vadd.f32 %v330, %v362
      %v395 = vadd.f32 %v331, %v363
      %v396 = vadd.f32 %v332, %v364
      %v397 = vadd.f32 %v333, %v365
      %v398 = vadd.f32 %v334, %v366
      %v399 = vadd.f32 %v335, %v367
      %v400 = vadd.f32 %v336, %v368
      %v401 = vadd.f32 %v337, %v369
      %v402 = vadd.f32 %v338, %v370
      %v403 = vadd.f32 %v339, %v371
      %v404 = vadd.f32 %v340, %v372
      %v405 = vadd.f32 %v341, %v373
      %v406 = vadd.f32 %v342, %v374
      %v407 = vadd.f32 %v343, %v375
      %v408 = vadd.f32 %v344, %v376
      %v409 = vadd.f32 %v345, %v377
      %v410 = vadd.f32 %v346, %v378
      %v411 = vadd.f32 %v347, %v379
      %v412 = vadd.f32 %v348, %v380
      %v413 = vadd.f32 %v349, %v381
      %v414 = vadd.f32 %v350, %v382
      %v415 = vadd.f32 %v351, %v383
      %v416 = vadd.f32 %v352, %v384
      %v417 = vadd.f32 %v353, %v385
      %v418 = vadd.f32 %v354, %v386
      %v419 = vadd.f32 %v355, %v387
      %v420 = vadd.f32 %v356, %v388
      %v421 = vadd.f32 %v357, %v389
      %v422 = vadd.f32 %v358, %v390
      %v423 = vadd.f32 %v359, %v391
      %vm424 = vcmask 31744
      %425 = vst.msk [vmem:[%s217] sm:$0xff] %vm424, %v392
      %426 = vst.msk [vmem:[%s217 + $0x8] sm:$0xff] %vm424, %v393
      %427 = vst.msk [vmem:[%s217 + $0x10] sm:$0xff] %vm424, %v394
      %428 = vst.msk [vmem:[%s217 + $0x18] sm:$0xff] %vm424, %v395
      %429 = vst.msk [vmem:[%s217 + $0x20] sm:$0xff] %vm424, %v396
      %430 = vst.msk [vmem:[%s217 + $0x28] sm:$0xff] %vm424, %v397
      %431 = vst.msk [vmem:[%s217 + $0x30] sm:$0xff] %vm424, %v398
      %432 = vst.msk [vmem:[%s217 + $0x38] sm:$0xff] %vm424, %v399
      %433 = vst.msk [vmem:[%s217 + $0x40] sm:$0xff] %vm424, %v400
      %434 = vst.msk [vmem:[%s217 + $0x48] sm:$0xff] %vm424, %v401
      %435 = vst.msk [vmem:[%s217 + $0x50] sm:$0xff] %vm424, %v402
      %436 = vst.msk [vmem:[%s217 + $0x58] sm:$0xff] %vm424, %v403
      %437 = vst.msk [vmem:[%s217 + $0x60] sm:$0xff] %vm424, %v404
      %438 = vst.msk [vmem:[%s217 + $0x68] sm:$0xff] %vm424, %v405
      %439 = vst.msk [vmem:[%s217 + $0x70] sm:$0xff] %vm424, %v406
      %440 = vst.msk [vmem:[%s217 + $0x78] sm:$0xff] %vm424, %v407
      %441 = vst.msk [vmem:[%s217 + $0x80] sm:$0xff] %vm424, %v408
      %442 = vst.msk [vmem:[%s217 + $0x88] sm:$0xff] %vm424, %v409
      %443 = vst.msk [vmem:[%s217 + $0x90] sm:$0xff] %vm424, %v410
      %444 = vst.msk [vmem:[%s217 + $0x98] sm:$0xff] %vm424, %v411
      %445 = vst.msk [vmem:[%s217 + $0xa0] sm:$0xff] %vm424, %v412
      %446 = vst.msk [vmem:[%s217 + $0xa8] sm:$0xff] %vm424, %v413
      %447 = vst.msk [vmem:[%s217 + $0xb0] sm:$0xff] %vm424, %v414
      %448 = vst.msk [vmem:[%s217 + $0xb8] sm:$0xff] %vm424, %v415
      %449 = vst.msk [vmem:[%s217 + $0xc0] sm:$0xff] %vm424, %v416
      %450 = vst.msk [vmem:[%s217 + $0xc8] sm:$0xff] %vm424, %v417
      %451 = vst.msk [vmem:[%s217 + $0xd0] sm:$0xff] %vm424, %v418
      %452 = vst.msk [vmem:[%s217 + $0xd8] sm:$0xff] %vm424, %v419
      %453 = vst.msk [vmem:[%s217 + $0xe0] sm:$0xff] %vm424, %v420
      %454 = vst.msk [vmem:[%s217 + $0xe8] sm:$0xff] %vm424, %v421
      %455 = vst.msk [vmem:[%s217 + $0xf0] sm:$0xff] %vm424, %v422
      %456 = vst.msk [vmem:[%s217 + $0xf8] sm:$0xff] %vm424, %v423
      %p457 = scmp.lt.s32.totalorder %s15, 1
      %s458 = scalar_select %p457, %s15, 1
      %s459 = smul.addr %s458, 32
      %s460 = smul.addr %s459, 8
      %s461 = scalar_lea.vmem %s4, %s460
      // Predicated region
      $region37: #{residual_block.5} parent=35 // pred_check
        %p462 = pneg %p127
      $region38: #{residual_block.5} parent=35 // pred_check_branch
        %464 = sbr.rel (%p462) target = $region40
      $region39: #{residual_block.5} parent=35 // pred_region
        _
      $region40: #{residual_block.5} parent=35 // pred_fallthru
        _
    $region36: #{residual_block.5} parent=5 // pred_fallthru
      _
    %p465 = scmp.le.s32.totalorder 2, %s10
    // Predicated region
    $region41: #{residual_block.5} parent=5 // pred_check
      %p466 = pneg %p465
    $region42: #{residual_block.5} parent=5 // pred_check_branch
      %468 = sbr.rel (%p466) target = $region44
    $region43: #{residual_block.5} parent=5 // pred_region
      %s469 = ssub.s32 %s10, 2
      // Predicated region
      $region45: #{residual_block.5} parent=43 // pred_check
        %p470 = pneg %p133
      $region46: #{residual_block.5} parent=43 // pred_check_branch
        %472 = sbr.rel (%p470) target = $region48
      $region47: #{residual_block.5} parent=43 // pred_region
        %p473 = scmp.lt.s32.totalorder %s16, 1
        %s474 = scalar_select %p473, %s16, 1
        %s475 = smul.addr %s474, 32
        %s476 = smul.addr %s475, 8
        %s477 = scalar_lea.vmem %s4, %s476
      $region48: #{residual_block.5} parent=43 // pred_fallthru
        _
    $region44: #{residual_block.5} parent=5 // pred_fallthru
      _
  $region6: #{residual_block.5} parent=0 // loop_footer
    %s14 = sadd.s32 1, %s10
  $region7: #{residual_block.5} parent=0 // loop_footer_branch
    %9 = sbr.rel target = $region3
  $region8: #{residual_block.5} parent=0 // loop_exit
    _

// kernel: residual_block.4
$region0: #{residual_block.4}
  #allocation0 [shape = 'u32[]', space=smem, size = 0x4, offset = 0x4, fixed_abs, tag = 'smem constant byte address 0x4 - core index']
  #allocation1 [shape = 'u32[144,128]{1,0:T(1,128)}', space=vmem, size = 0x12000, scoped, tag = 'internal scratch']
  #allocation2 [shape = 'bf16[18,18,4]{2,1,0:T(8,128)(2,1)}', space=vmem, size = 0x1b000, scoped, tag = 'scratch operand']
  #allocation3 [shape = 'f32[1,1]{1,0:T(1,128)S(6)}', space=smem, size = 0x200, scoped, tag = 'scoped memory for residual_block.4']
  %s0 = inlined_call_operand.vmem [shape: bf16[2,16,16,4], index: 0, kind: input, shape index: {}]
  %s1 = inlined_call_operand.vmem [shape: bf16[36,4], index: 1, kind: input, shape index: {}]
  %s2 = inlined_call_operand.vmem [shape: f32[1,1,4], index: 2, kind: input, shape index: {}]
  %s3 = inlined_call_operand.vmem [shape: f32[1,1,4], index: 3, kind: input, shape index: {}]
  %s4 = inlined_call_operand.<no memory space> [shape: f32[1,1], index: 4, kind: input, shape index: {}]
  %s5 = inlined_call_operand.vmem [shape: bf16[2,16,16,4], index: 5, kind: output, shape index: {0}]
  %s6 = inlined_call_operand.vmem [shape: f32[2,1,4], index: 6, kind: output, shape index: {1}]
  %s7 = inlined_call_operand.vmem [shape: f32[2,1,4], index: 7, kind: output, shape index: {2}]
  %8 = xla_tuple %s5, %s6, %s7
  %s9 = sld [smem:[#allocation0]]
  $region76: #{residual_block.4} parent=0
    _
  %s11 = ssub.s32 1, %s9
  %s12 = scalar_select 0, %s11, %s9
  %13 = sst [smem:[#allocation3]] %s4
  loop: start=0, step=1, limit=4
  $region2: #{residual_block.4} parent=0 // loop_pre_header
    _
  $region3: #{residual_block.4} parent=0 // loop_header
    %s15 = sphi 0, %s19
    %p16 = scmp.ge.s32.totalorder %s15, 4
    %s25 = sphi 0, %s27
    %s28 = sphi 0, %s25
    %s29 = sphi 0, %s28
    %s45 = sphi 0, %s29
    %s49 = sphi 0, %s49
    %s51 = sphi 0, %s49
    %s52 = sphi 0, %s51
    %s66 = sphi 0, %s52
    %s70 = sphi 0, %s70
    %s72 = sphi 0, %s70
    %s73 = sphi 0, %s72
    %s87 = sphi 0, %s73
    %s91 = sphi 0, %s91
    %s93 = sphi 0, %s91
    %s94 = sphi 0, %s93
    %s108 = sphi 0, %s94
    %s112 = sphi 0, %s112
    %s114 = sphi 0, %s112
    %s115 = sphi 0, %s114
    %s129 = sphi 0, %s115
    %s135 = sphi 0, %s137
    %s138 = sphi 0, %s135
    %s139 = sphi 0, %s138
    %s155 = sphi 0, %s139
    %s161 = sphi 0, %s163
    %s164 = sphi 0, %s161
    %s165 = sphi 0, %s164
    %s181 = sphi 0, %s165
    %s187 = sphi 0, %s189
    %s190 = sphi 0, %s187
    %s191 = sphi 0, %s190
    %s207 = sphi 0, %s191
  $region4: #{residual_block.4} parent=0 // loop_header_branch
    %18 = sbr.rel (%p16) target = $region8
  $region5: #{residual_block.4} parent=0 // loop_body
    %s20 = ssub.s32 %s15, 1
    %s21 = ssub.s32 %s15, 2
    %s22 = sadd.s32 %s15, 1
    %s23 = ssub.s32 %s15, %s22
    %p24 = scmp.eq.s32.totalorder %s23, 0
    %s26 = sadd.s32 %s25, 1
    %s27 = scalar_select %p24, %s25, %s26
    %p30 = pneg %p24
    %p31 = scmp.eq.s32.totalorder %s15, 1
    %p32 = por %p30, %p31
    %p33 = scmp.ne.s32.totalorder %s25, %s28
    %p34 = scmp.eq.s32.totalorder %s15, 0
    %p35 = por %p33, %p34
    %p36 = scmp.ne.s32.totalorder %s25, %s28
    %p37 = scmp.eq.s32.totalorder %s20, 1
    %p38 = por %p36, %p37
    %p39 = scmp.ne.s32.totalorder %s28, %s29
    %p40 = scmp.eq.s32.totalorder %s20, 0
    %p41 = por %p39, %p40
    %p42 = scmp.ne.s32.totalorder %s28, %s29
    %p43 = scmp.eq.s32.totalorder %s21, 1
    %p44 = por %p42, %p43
    %p46 = scmp.ne.s32.totalorder %s29, %s45
    %p47 = scmp.eq.s32.totalorder %s21, 0
    %p48 = por %p46, %p47
    %s50 = sadd.s32 %s49, 1
    %p53 = scmp.eq.s32.totalorder %s15, 1
    %p54 = scmp.ne.s32.totalorder %s49, %s51
    %p55 = scmp.eq.s32.totalorder %s15, 0
    %p56 = por %p54, %p55
    %p57 = scmp.ne.s32.totalorder %s49, %s51
    %p58 = scmp.eq.s32.totalorder %s20, 1
    %p59 = por %p57, %p58
    %p60 = scmp.ne.s32.totalorder %s51, %s52
    %p61 = scmp.eq.s32.totalorder %s20, 0
    %p62 = por %p60, %p61
    %p63 = scmp.ne.s32.totalorder %s51, %s52
    %p64 = scmp.eq.s32.totalorder %s21, 1
    %p65 = por %p63, %p64
    %p67 = scmp.ne.s32.totalorder %s52, %s66
    %p68 = scmp.eq.s32.totalorder %s21, 0
    %p69 = por %p67, %p68
    %s71 = sadd.s32 %s70, 1
    %p74 = scmp.eq.s32.totalorder %s15, 1
    %p75 = scmp.ne.s32.totalorder %s70, %s72
    %p76 = scmp.eq.s32.totalorder %s15, 0
    %p77 = por %p75, %p76
    %p78 = scmp.ne.s32.totalorder %s70, %s72
    %p79 = scmp.eq.s32.totalorder %s20, 1
    %p80 = por %p78, %p79
    %p81 = scmp.ne.s32.totalorder %s72, %s73
    %p82 = scmp.eq.s32.totalorder %s20, 0
    %p83 = por %p81, %p82
    %p84 = scmp.ne.s32.totalorder %s72, %s73
    %p85 = scmp.eq.s32.totalorder %s21, 1
    %p86 = por %p84, %p85
    %p88 = scmp.ne.s32.totalorder %s73, %s87
    %p89 = scmp.eq.s32.totalorder %s21, 0
    %p90 = por %p88, %p89
    %s92 = sadd.s32 %s91, 1
    %p95 = scmp.eq.s32.totalorder %s15, 1
    %p96 = scmp.ne.s32.totalorder %s91, %s93
    %p97 = scmp.eq.s32.totalorder %s15, 0
    %p98 = por %p96, %p97
    %p99 = scmp.ne.s32.totalorder %s91, %s93
    %p100 = scmp.eq.s32.totalorder %s20, 1
    %p101 = por %p99, %p100
    %p102 = scmp.ne.s32.totalorder %s93, %s94
    %p103 = scmp.eq.s32.totalorder %s20, 0
    %p104 = por %p102, %p103
    %p105 = scmp.ne.s32.totalorder %s93, %s94
    %p106 = scmp.eq.s32.totalorder %s21, 1
    %p107 = por %p105, %p106
    %p109 = scmp.ne.s32.totalorder %s94, %s108
    %p110 = scmp.eq.s32.totalorder %s21, 0
    %p111 = por %p109, %p110
    %s113 = sadd.s32 %s112, 1
    %p116 = scmp.eq.s32.totalorder %s15, 1
    %p117 = scmp.ne.s32.totalorder %s112, %s114
    %p118 = scmp.eq.s32.totalorder %s15, 0
    %p119 = por %p117, %p118
    %p120 = scmp.ne.s32.totalorder %s112, %s114
    %p121 = scmp.eq.s32.totalorder %s20, 1
    %p122 = por %p120, %p121
    %p123 = scmp.ne.s32.totalorder %s114, %s115
    %p124 = scmp.eq.s32.totalorder %s20, 0
    %p125 = por %p123, %p124
    %p126 = scmp.ne.s32.totalorder %s114, %s115
    %p127 = scmp.eq.s32.totalorder %s21, 1
    %p128 = por %p126, %p127
    %p130 = scmp.ne.s32.totalorder %s115, %s129
    %p131 = scmp.eq.s32.totalorder %s21, 0
    %p132 = por %p130, %p131
    %s133 = ssub.s32 %s15, %s22
    %p134 = scmp.eq.s32.totalorder %s133, 0
    %s136 = sadd.s32 %s135, 1
    %s137 = scalar_select %p134, %s135, %s136
    %p140 = pneg %p134
    %p141 = scmp.eq.s32.totalorder %s15, 1
    %p142 = por %p140, %p141
    %p143 = scmp.ne.s32.totalorder %s135, %s138
    %p144 = scmp.eq.s32.totalorder %s15, 0
    %p145 = por %p143, %p144
    %p146 = scmp.ne.s32.totalorder %s135, %s138
    %p147 = scmp.eq.s32.totalorder %s20, 1
    %p148 = por %p146, %p147
    %p149 = scmp.ne.s32.totalorder %s138, %s139
    %p150 = scmp.eq.s32.totalorder %s20, 0
    %p151 = por %p149, %p150
    %p152 = scmp.ne.s32.totalorder %s138, %s139
    %p153 = scmp.eq.s32.totalorder %s21, 1
    %p154 = por %p152, %p153
    %p156 = scmp.ne.s32.totalorder %s139, %s155
    %p157 = scmp.eq.s32.totalorder %s21, 0
    %p158 = por %p156, %p157
    %s159 = ssub.s32 %s15, %s22
    %p160 = scmp.eq.s32.totalorder %s159, 0
    %s162 = sadd.s32 %s161, 1
    %s163 = scalar_select %p160, %s161, %s162
    %p166 = pneg %p160
    %p167 = scmp.eq.s32.totalorder %s15, 1
    %p168 = por %p166, %p167
    %p169 = scmp.ne.s32.totalorder %s161, %s164
    %p170 = scmp.eq.s32.totalorder %s15, 0
    %p171 = por %p169, %p170
    %p172 = scmp.ne.s32.totalorder %s161, %s164
    %p173 = scmp.eq.s32.totalorder %s20, 1
    %p174 = por %p172, %p173
    %p175 = scmp.ne.s32.totalorder %s164, %s165
    %p176 = scmp.eq.s32.totalorder %s20, 0
    %p177 = por %p175, %p176
    %p178 = scmp.ne.s32.totalorder %s164, %s165
    %p179 = scmp.eq.s32.totalorder %s21, 1
    %p180 = por %p178, %p179
    %p182 = scmp.ne.s32.totalorder %s165, %s181
    %p183 = scmp.eq.s32.totalorder %s21, 0
    %p184 = por %p182, %p183
    %s185 = ssub.s32 %s15, %s22
    %p186 = scmp.eq.s32.totalorder %s185, 0
    %s188 = sadd.s32 %s187, 1
    %s189 = scalar_select %p186, %s187, %s188
    %p192 = pneg %p186
    %p193 = scmp.eq.s32.totalorder %s15, 1
    %p194 = por %p192, %p193
    %p195 = scmp.ne.s32.totalorder %s187, %s190
    %p196 = scmp.eq.s32.totalorder %s15, 0
    %p197 = por %p195, %p196
    %p198 = scmp.ne.s32.totalorder %s187, %s190
    %p199 = scmp.eq.s32.totalorder %s20, 1
    %p200 = por %p198, %p199
    %p201 = scmp.ne.s32.totalorder %s190, %s191
    %p202 = scmp.eq.s32.totalorder %s20, 0
    %p203 = por %p201, %p202
    %p204 = scmp.ne.s32.totalorder %s190, %s191
    %p205 = scmp.eq.s32.totalorder %s21, 1
    %p206 = por %p204, %p205
    %p208 = scmp.ne.s32.totalorder %s191, %s207
    %p209 = scmp.eq.s32.totalorder %s21, 0
    %p210 = por %p208, %p209
    %p211 = scmp.le.s32.totalorder 1, %s15
    %p212 = scmp.lt.s32.totalorder %s15, 3
    %p213 = pnand %p211, %p212
    %p214 = pneg %p213
    // Predicated region
    $region9: #{residual_block.4} parent=5 // pred_check
      _
    $region10: #{residual_block.4} parent=5 // pred_check_branch
      %216 = sbr.rel (%p213) target = $region12
    $region11: #{residual_block.4} parent=5 // pred_region
      %s217 = ssub.s32 %s15, 1
      // Predicated region
      $region13: #{residual_block.4} parent=11 // pred_check
        %p218 = pneg %p62
      $region14: #{residual_block.4} parent=11 // pred_check_branch
        %220 = sbr.rel (%p218) target = $region16
      $region15: #{residual_block.4} parent=11 // pred_region
        _
      $region16: #{residual_block.4} parent=11 // pred_fallthru
        _
      // Predicated region
      $region17: #{residual_block.4} parent=11 // pred_check
        %p221 = pneg %p83
      $region18: #{residual_block.4} parent=11 // pred_check_branch
        %223 = sbr.rel (%p221) target = $region20
      $region19: #{residual_block.4} parent=11 // pred_region
        _
      $region20: #{residual_block.4} parent=11 // pred_fallthru
        _
      // Predicated region
      $region21: #{residual_block.4} parent=11 // pred_check
        %p224 = pneg %p104
      $region22: #{residual_block.4} parent=11 // pred_check_branch
        %226 = sbr.rel (%p224) target = $region24
      $region23: #{residual_block.4} parent=11 // pred_region
        _
      $region24: #{residual_block.4} parent=11 // pred_fallthru
        _
      // Predicated region
      $region25: #{residual_block.4} parent=11 // pred_check
        %p227 = pneg %p125
      $region26: #{residual_block.4} parent=11 // pred_check_branch
        %229 = sbr.rel (%p227) target = $region28
      $region27: #{residual_block.4} parent=11 // pred_region
        _
      $region28: #{residual_block.4} parent=11 // pred_fallthru
        _
    $region12: #{residual_block.4} parent=5 // pred_fallthru
      _
    %p230 = scmp.lt.s32.totalorder %s15, 2
    // Predicated region
    $region29: #{residual_block.4} parent=5 // pred_check
      %p231 = pneg %p230
    $region30: #{residual_block.4} parent=5 // pred_check_branch
      %233 = sbr.rel (%p231) target = $region32
    $region31: #{residual_block.4} parent=5 // pred_region
      // Predicated region
      $region33: #{residual_block.4} parent=31 // pred_check
        %p234 = pneg %p35
      $region34: #{residual_block.4} parent=31 // pred_check_branch
        %236 = sbr.rel (%p234) target = $region36
      $region35: #{residual_block.4} parent=31 // pred_region
        %p237 = scmp.lt.s32.totalorder %s15, 1
        %s238 = scalar_select %p237, %s15, 1
        %s239 = smul.addr %s238, 32
        %s240 = smul.addr %s239, 4
        %s241 = scalar_lea.vmem %s0, %s240
      $region36: #{residual_block.4} parent=31 // pred_fallthru
        _
    $region32: #{residual_block.4} parent=5 // pred_fallthru
      _
    %p242 = scmp.le.s32.totalorder 1, %s15
    %p243 = scmp.lt.s32.totalorder %s15, 3
    %p244 = pnand %p242, %p243
    %p245 = pneg %p244
    // Predicated region
    $region37: #{residual_block.4} parent=5 // pred_check
      _
    $region38: #{residual_block.4} parent=5 // pred_check_branch
      %247 = sbr.rel (%p244) target = $region40
    $region39: #{residual_block.4} parent=5 // pred_region
      %s248 = ssub.s32 %s15, 1
      %p249 = scmp.lt.s32.totalorder %s20, 1
      %s250 = scalar_select %p249, %s20, 1
      %s251 = smul.addr %s250, 32
      %s252 = smul.addr %s251, 4
      %s253 = scalar_lea.vmem %s0, %s252
      %p254 = pneg %p41
      %p255 = pneg %p38
      %p256 = pneg %p62
      %p257 = pneg %p59
      %p258 = pneg %p83
      %p259 = pneg %p80
      %p260 = pneg %p104
      %p261 = pneg %p101
      %p262 = pneg %p125
      %p263 = pneg %p122
      %p264 = pneg %p151
      %p265 = pneg %p148
      %p266 = scmp.lt.s32.totalorder %s20, 1
      %s267 = scalar_select %p266, %s20, 1
      %s268 = smul.addr %s267, 32
      %s269 = smul.addr %s268, 4
      %s270 = scalar_lea.vmem %s5, %s269
      %p271 = pneg %p177
      %p272 = pneg %p174
      %p273 = scmp.lt.s32.totalorder %s20, 1
      %s274 = scalar_select %p273, %s20, 1
      %s275 = scalar_lea.vmem %s6, %s274
      %p276 = pneg %p203
      %p277 = pneg %p200
      %p278 = scmp.lt.s32.totalorder %s20, 1
      %s279 = scalar_select %p278, %s20, 1
      %s280 = scalar_lea.vmem %s7, %s279
      %p281 = scmp.lt.s32.totalorder %s20, 1
      %s282 = scalar_select %p281, %s20, 1
      %s283 = smul.addr %s282, 32
      %s284 = smul.addr %s283, 4
      %s285 = scalar_lea.vmem %s0, %s284
      %p286 = scmp.lt.s32.totalorder %s20, 1
      %s287 = scalar_select %p286, %s20, 1
      %s288 = smul.addr %s287, 32
      %s289 = smul.addr %s288, 4
      %s290 = scalar_lea.vmem %s5, %s289
      %p291 = scmp.lt.s32.totalorder %s20, 1
      %s292 = scalar_select %p291, %s20, 1
      %s293 = scalar_lea.vmem %s6, %s292
      %p294 = scmp.lt.s32.totalorder %s20, 1
      %s295 = scalar_select %p294, %s20, 1
      %s296 = scalar_lea.vmem %s7, %s295
      %s298 = sld [smem:[#allocation3]]
      %v299 = vld [vmem:[%s285] sm:$0xf]
      %v300 = vld [vmem:[%s285 + $0x4] sm:$0xf]
      %v301 = vld [vmem:[%s285 + $0x8] sm:$0xf]
      %v302 = vld [vmem:[%s285 + $0xc] sm:$0xf]
      %v303 = vld [vmem:[%s285 + $0x10] sm:$0xf]
      %v304 = vld [vmem:[%s285 + $0x14] sm:$0xf]
      %v305 = vld [vmem:[%s285 + $0x18] sm:$0xf]
      %v306 = vld [vmem:[%s285 + $0x1c] sm:$0xf]
      %v307 = vld [vmem:[%s285 + $0x20] sm:$0xf]
      %v308 = vld [vmem:[%s285 + $0x24] sm:$0xf]
      %v309 = vld [vmem:[%s285 + $0x28] sm:$0xf]
      %v310 = vld [vmem:[%s285 + $0x2c] sm:$0xf]
      %v311 = vld [vmem:[%s285 + $0x30] sm:$0xf]
      %v312 = vld [vmem:[%s285 + $0x34] sm:$0xf]
      %v313 = vld [vmem:[%s285 + $0x38] sm:$0xf]
      %v314 = vld [vmem:[%s285 + $0x3c] sm:$0xf]
      %v315 = vld [vmem:[%s285 + $0x40] sm:$0xf]
      %v316 = vld [vmem:[%s285 + $0x44] sm:$0xf]
      %v317 = vld [vmem:[%s285 + $0x48] sm:$0xf]
      %v318 = vld [vmem:[%s285 + $0x4c] sm:$0xf]
      %v319 = vld [vmem:[%s285 + $0x50] sm:$0xf]
      %v320 = vld [vmem:[%s285 + $0x54] sm:$0xf]
      %v321 = vld [vmem:[%s285 + $0x58] sm:$0xf]
      %v322 = vld [vmem:[%s285 + $0x5c] sm:$0xf]
      %v323 = vld [vmem:[%s285 + $0x60] sm:$0xf]
      %v324 = vld [vmem:[%s285 + $0x64] sm:$0xf]
      %v325 = vld [vmem:[%s285 + $0x68] sm:$0xf]
      %v326 = vld [vmem:[%s285 + $0x6c] sm:$0xf]
      %v327 = vld [vmem:[%s285 + $0x70] sm:$0xf]
      %v328 = vld [vmem:[%s285 + $0x74] sm:$0xf]
      %v329 = vld [vmem:[%s285 + $0x78] sm:$0xf]
      %v330 = vld [vmem:[%s285 + $0x7c] sm:$0xf]
      %v331 = vunpack.c.l.bf16 %v299
      %v332 = vunpack.c.l.bf16 %v300
      %v333 = vunpack.c.l.bf16 %v301
      %v334 = vunpack.c.l.bf16 %v302
      %v335 = vunpack.c.l.bf16 %v303
      %v336 = vunpack.c.l.bf16 %v304
      %v337 = vunpack.c.l.bf16 %v305
      %v338 = vunpack.c.l.bf16 %v306
      %v339 = vunpack.c.l.bf16 %v307
      %v340 = vunpack.c.l.bf16 %v308
      %v341 = vunpack.c.l.bf16 %v309
      %v342 = vunpack.c.l.bf16 %v310
      %v343 = vunpack.c.l.bf16 %v311
      %v344 = vunpack.c.l.bf16 %v312
      %v345 = vunpack.c.l.bf16 %v313
      %v346 = vunpack.c.l.bf16 %v314
      %v347 = vunpack.c.l.bf16 %v315
      %v348 = vunpack.c.l.bf16 %v316
      %v349 = vunpack.c.l.bf16 %v317
      %v350 = vunpack.c.l.bf16 %v318
      %v351 = vunpack.c.l.bf16 %v319
      %v352 = vunpack.c.l.bf16 %v320
      %v353 = vunpack.c.l.bf16 %v321
      %v354 = vunpack.c.l.bf16 %v322
      %v355 = vunpack.c.l.bf16 %v323
      %v356 = vunpack.c.l.bf16 %v324
      %v357 = vunpack.c.l.bf16 %v325
      %v358 = vunpack.c.l.bf16 %v326
      %v359 = vunpack.c.l.bf16 %v327
      %v360 = vunpack.c.l.bf16 %v328
      %v361 = vunpack.c.l.bf16 %v329
      %v362 = vunpack.c.l.bf16 %v330
      %v363 = vld [vmem:[%s2] sm:$0x1]
      %v365 = vlaneseq
      %v366 = vshrl.u32 %v365, 7
      %v367 = vsub.s32 0, %v366
      %v368 = vrot.slane %v363, %v367
      %v370 = vmul.f32 %v331, %v368
      %v371 = vmul.f32 %v332, %v368
      %v372 = vmul.f32 %v333, %v368
      %v373 = vmul.f32 %v334, %v368
      %v374 = vmul.f32 %v335, %v368
      %v375 = vmul.f32 %v336, %v368
      %v376 = vmul.f32 %v337, %v368
      %v377 = vmul.f32 %v338, %v368
      %v378 = vmul.f32 %v339, %v368
      %v379 = vmul.f32 %v340, %v368
      %v380 = vmul.f32 %v341, %v368
      %v381 = vmul.f32 %v342, %v368
      %v382 = vmul.f32 %v343, %v368
      %v383 = vmul.f32 %v344, %v368
      %v384 = vmul.f32 %v345, %v368
      %v385 = vmul.f32 %v346, %v368
      %v386 = vmul.f32 %v347, %v368
      %v387 = vmul.f32 %v348, %v368
      %v388 = vmul.f32 %v349, %v368
      %v389 = vmul.f32 %v350, %v368
      %v390 = vmul.f32 %v351, %v368
      %v391 = vmul.f32 %v352, %v368
      %v392 = vmul.f32 %v353, %v368
      %v393 = vmul.f32 %v354, %v368
      %v394 = vmul.f32 %v355, %v368
      %v395 = vmul.f32 %v356, %v368
      %v396 = vmul.f32 %v357, %v368
      %v397 = vmul.f32 %v358, %v368
      %v398 = vmul.f32 %v359, %v368
      %v399 = vmul.f32 %v360, %v368
      %v400 = vmul.f32 %v361, %v368
      %v401 = vmul.f32 %v362, %v368
      %v402 = vld [vmem:[%s3] sm:$0x1]
      %v404 = vlaneseq
      %v405 = vshrl.u32 %v404, 7
      %v406 = vsub.s32 0, %v405
      %v407 = vrot.slane %v402, %v406
      %v409 = vadd.f32 %v370, %v407
      %v410 = vadd.f32 %v371, %v407
      %v411 = vadd.f32 %v372, %v407
      %v412 = vadd.f32 %v373, %v407
      %v413 = vadd.f32 %v374, %v407
      %v414 = vadd.f32 %v375, %v407
      %v415 = vadd.f32 %v376, %v407
      %v416 = vadd.f32 %v377, %v407
      %v417 = vadd.f32 %v378, %v407
      %v418 = vadd.f32 %v379, %v407
      %v419 = vadd.f32 %v380, %v407
      %v420 = vadd.f32 %v381, %v407
      %v421 = vadd.f32 %v382, %v407
      %v422 = vadd.f32 %v383, %v407
      %v423 = vadd.f32 %v384, %v407
      %v424 = vadd.f32 %v385, %v407
      %v425 = vadd.f32 %v386, %v407
      %v426 = vadd.f32 %v387, %v407
      %v427 = vadd.f32 %v388, %v407
      %v428 = vadd.f32 %v389, %v407
      %v429 = vadd.f32 %v390, %v407
      %v430 = vadd.f32 %v391, %v407
      %v431 = vadd.f32 %v392, %v407
      %v432 = vadd.f32 %v393, %v407
      %v433 = vadd.f32 %v394, %v407
      %v434 = vadd.f32 %v395, %v407
      %v435 = vadd.f32 %v396, %v407
      %v436 = vadd.f32 %v397, %v407
      %v437 = vadd.f32 %v398, %v407
      %v438 = vadd.f32 %v399, %v407
      %v439 = vadd.f32 %v400, %v407
      %v440 = vadd.f32 %v401, %v407
      %vm441 = vcmp.ge.f32.partialorder %v409, 0.0
      %vm442 = vcmp.ge.f32.partialorder %v410, 0.0
      %vm443 = vcmp.ge.f32.partialorder %v411, 0.0
      %vm444 = vcmp.ge.f32.partialorder %v412, 0.0
      %vm445 = vcmp.ge.f32.partialorder %v413, 0.0
      %vm446 = vcmp.ge.f32.partialorder %v414, 0.0
      %vm447 = vcmp.ge.f32.partialorder %v415, 0.0
      %vm448 = vcmp.ge.f32.partialorder %v416, 0.0
      %vm449 = vcmp.ge.f32.partialorder %v417, 0.0
      %vm450 = vcmp.ge.f32.partialorder %v418, 0.0
      %vm451 = vcmp.ge.f32.partialorder %v419, 0.0
      %vm452 = vcmp.ge.f32.partialorder %v420, 0.0
      %vm453 = vcmp.ge.f32.partialorder %v421, 0.0
      %vm454 = vcmp.ge.f32.partialorder %v422, 0.0
      %vm455 = vcmp.ge.f32.partialorder %v423, 0.0
      %vm456 = vcmp.ge.f32.partialorder %v424, 0.0
      %vm457 = vcmp.ge.f32.partialorder %v425, 0.0
      %vm458 = vcmp.ge.f32.partialorder %v426, 0.0
      %vm459 = vcmp.ge.f32.partialorder %v427, 0.0
      %vm460 = vcmp.ge.f32.partialorder %v428, 0.0
      %vm461 = vcmp.ge.f32.partialorder %v429, 0.0
      %vm462 = vcmp.ge.f32.partialorder %v430, 0.0
      %vm463 = vcmp.ge.f32.partialorder %v431, 0.0
      %vm464 = vcmp.ge.f32.partialorder %v432, 0.0
      %vm465 = vcmp.ge.f32.partialorder %v433, 0.0
      %vm466 = vcmp.ge.f32.partialorder %v434, 0.0
      %vm467 = vcmp.ge.f32.partialorder %v435, 0.0
      %vm468 = vcmp.ge.f32.partialorder %v436, 0.0
      %vm469 = vcmp.ge.f32.partialorder %v437, 0.0
      %vm470 = vcmp.ge.f32.partialorder %v438, 0.0
      %vm471 = vcmp.ge.f32.partialorder %v439, 0.0
      %vm472 = vcmp.ge.f32.partialorder %v440, 0.0
      %v473 = vstv %s298
      %v474 = vmul.f32 %v473, %v409
      %v475 = vmul.f32 %v473, %v410
      %v476 = vmul.f32 %v473, %v411
      %v477 = vmul.f32 %v473, %v412
      %v478 = vmul.f32 %v473, %v413
      %v479 = vmul.f32 %v473, %v414
      %v480 = vmul.f32 %v473, %v415
      %v481 = vmul.f32 %v473, %v416
      %v482 = vmul.f32 %v473, %v417
      %v483 = vmul.f32 %v473, %v418
      %v484 = vmul.f32 %v473, %v419
      %v485 = vmul.f32 %v473, %v420
      %v486 = vmul.f32 %v473, %v421
      %v487 = vmul.f32 %v473, %v422
      %v488 = vmul.f32 %v473, %v423
      %v489 = vmul.f32 %v473, %v424
      %v490 = vmul.f32 %v473, %v425
      %v491 = vmul.f32 %v473, %v426
      %v492 = vmul.f32 %v473, %v427
      %v493 = vmul.f32 %v473, %v428
      %v494 = vmul.f32 %v473, %v429
      %v495 = vmul.f32 %v473, %v430
      %v496 = vmul.f32 %v473, %v431
      %v497 = vmul.f32 %v473, %v432
      %v498 = vmul.f32 %v473, %v433
      %v499 = vmul.f32 %v473, %v434
      %v500 = vmul.f32 %v473, %v435
      %v501 = vmul.f32 %v473, %v436
      %v502 = vmul.f32 %v473, %v437
      %v503 = vmul.f32 %v473, %v438
      %v504 = vmul.f32 %v473, %v439
      %v505 = vmul.f32 %v473, %v440
      %v506 = vsel %vm441, %v409, %v474
      %v507 = vsel %vm442, %v410, %v475
      %v508 = vsel %vm443, %v411, %v476
      %v509 = vsel %vm444, %v412, %v477
      %v510 = vsel %vm445, %v413, %v478
      %v511 = vsel %vm446, %v414, %v479
      %v512 = vsel %vm447, %v415, %v480
      %v513 = vsel %vm448, %v416, %v481
      %v514 = vsel %vm449, %v417, %v482
      %v515 = vsel %vm450, %v418, %v483
      %v516 = vsel %vm451, %v419, %v484
      %v517 = vsel %vm452, %v420, %v485
      %v518 = vsel %vm453, %v421, %v486
      %v519 = vsel %vm454, %v422, %v487
      %v520 = vsel %vm455, %v423, %v488
      %v521 = vsel %vm456, %v424, %v489
      %v522 = vsel %vm457, %v425, %v490
      %v523 = vsel %vm458, %v426, %v491
      %v524 = vsel %vm459, %v427, %v492
      %v525 = vsel %vm460, %v428, %v493
      %v526 = vsel %vm461, %v429, %v494
      %v527 = vsel %vm462, %v430, %v495
      %v528 = vsel %vm463, %v431, %v496
      %v529 = vsel %vm464, %v432, %v497
      %v530 = vsel %vm465, %v433, %v498
      %v531 = vsel %vm466, %v434, %v499
      %v532 = vsel %vm467, %v435, %v500
      %v533 = vsel %vm468, %v436, %v501
      %v534 = vsel %vm469, %v437, %v502
      %v535 = vsel %vm470, %v438, %v503
      %v536 = vsel %vm471, %v439, %v504
      %v537 = vsel %vm472, %v440, %v505
      %vm538 = vcmask 27648
      %539 = vst.msk [vmem:[#allocation2] sm:$0xf] %vm538, 0
      %540 = vst.msk [vmem:[#allocation2 + $0x4] sm:$0xf] %vm538, 0
      %vm541 = vcmask 24576
      %542 = vst.msk [vmem:[#allocation2 + $0x8] sm:$0x1] %vm541, 0
      %543 = vst.msk [vmem:[#allocation2 + $0xc] sm:$0xf] %vm538, 0
      %544 = vst.msk [vmem:[#allocation2 + $0x10] sm:$0xf] %vm538, 0
      %545 = vst.msk [vmem:[#allocation2 + $0x14] sm:$0x1] %vm541, 0
      %546 = vst.msk [vmem:[#allocation2 + $0x18] sm:$0xf] %vm538, 0
      %547 = vst.msk [vmem:[#allocation2 + $0x1c] sm:$0xf] %vm538, 0
      %548 = vst.msk [vmem:[#allocation2 + $0x20] sm:$0x1] %vm541, 0
      %549 = vst.msk [vmem:[#allocation2 + $0x24] sm:$0xf] %vm538, 0
      %550 = vst.msk [vmem:[#allocation2 + $0x28] sm:$0xf] %vm538, 0
      %551 = vst.msk [vmem:[#allocation2 + $0x2c] sm:$0x1] %vm541, 0
      %552 = vst.msk [vmem:[#allocation2 + $0x30] sm:$0xf] %vm538, 0
      %553 = vst.msk [vmem:[#allocation2 + $0x34] sm:$0xf] %vm538, 0
      %554 = vst.msk [vmem:[#allocation2 + $0x38] sm:$0x1] %vm541, 0
      %555 = vst.msk [vmem:[#allocation2 + $0x3c] sm:$0xf] %vm538, 0
      %556 = vst.msk [vmem:[#allocation2 + $0x40] sm:$0xf] %vm538, 0
      %557 = vst.msk [vmem:[#allocation2 + $0x44] sm:$0x1] %vm541, 0
      %558 = vst.msk [vmem:[#allocation2 + $0x48] sm:$0xf] %vm538, 0
      %559 = vst.msk [vmem:[#allocation2 + $0x4c] sm:$0xf] %vm538, 0
      %560 = vst.msk [vmem:[#allocation2 + $0x50] sm:$0x1] %vm541, 0
      %561 = vst.msk [vmem:[#allocation2 + $0x54] sm:$0xf] %vm538, 0
      %562 = vst.msk [vmem:[#allocation2 + $0x58] sm:$0xf] %vm538, 0
      %563 = vst.msk [vmem:[#allocation2 + $0x5c] sm:$0x1] %vm541, 0
      %564 = vst.msk [vmem:[#allocation2 + $0x60] sm:$0xf] %vm538, 0
      %565 = vst.msk [vmem:[#allocation2 + $0x64] sm:$0xf] %vm538, 0
      %566 = vst.msk [vmem:[#allocation2 + $0x68] sm:$0x1] %vm541, 0
      %567 = vst.msk [vmem:[#allocation2 + $0x6c] sm:$0xf] %vm538, 0
      %568 = vst.msk [vmem:[#allocation2 + $0x70] sm:$0xf] %vm538, 0
      %569 = vst.msk [vmem:[#allocation2 + $0x74] sm:$0x1] %vm541, 0
      %570 = vst.msk [vmem:[#allocation2 + $0x78] sm:$0xf] %vm538, 0
      %571 = vst.msk [vmem:[#allocation2 + $0x7c] sm:$0xf] %vm538, 0
      %572 = vst.msk [vmem:[#allocation2 + $0x80] sm:$0x1] %vm541, 0
      %573 = vst.msk [vmem:[#allocation2 + $0x84] sm:$0xf] %vm538, 0
      %574 = vst.msk [vmem:[#allocation2 + $0x88] sm:$0xf] %vm538, 0
      %575 = vst.msk [vmem:[#allocation2 + $0x8c] sm:$0x1] %vm541, 0
      %576 = vst.msk [vmem:[#allocation2 + $0x90] sm:$0xf] %vm538, 0
      %577 = vst.msk [vmem:[#allocation2 + $0x94] sm:$0xf] %vm538, 0
      %578 = vst.msk [vmem:[#allocation2 + $0x98] sm:$0x1] %vm541, 0
      %579 = vst.msk [vmem:[#allocation2 + $0x9c] sm:$0xf] %vm538, 0
      %580 = vst.msk [vmem:[#allocation2 + $0xa0] sm:$0xf] %vm538, 0
      %581 = vst.msk [vmem:[#allocation2 + $0xa4] sm:$0x1] %vm541, 0
      %582 = vst.msk [vmem:[#allocation2 + $0xa8] sm:$0xf] %vm538, 0
      %583 = vst.msk [vmem:[#allocation2 + $0xac] sm:$0xf] %vm538, 0
      %584 = vst.msk [vmem:[#allocation2 + $0xb0] sm:$0x1] %vm541, 0
      %585 = vst.msk [vmem:[#allocation2 + $0xb4] sm:$0xf] %vm538, 0
      %586 = vst.msk [vmem:[#allocation2 + $0xb8] sm:$0xf] %vm538, 0
      %587 = vst.msk [vmem:[#allocation2 + $0xbc] sm:$0x1] %vm541, 0
      %588 = vst.msk [vmem:[#allocation2 + $0xc0] sm:$0xf] %vm538, 0
      %589 = vst.msk [vmem:[#allocation2 + $0xc4] sm:$0xf] %vm538, 0
      %590 = vst.msk [vmem:[#allocation2 + $0xc8] sm:$0x1] %vm541, 0
      %591 = vst.msk [vmem:[#allocation2 + $0xcc] sm:$0xf] %vm538, 0
      %592 = vst.msk [vmem:[#allocation2 + $0xd0] sm:$0xf] %vm538, 0
      %593 = vst.msk [vmem:[#allocation2 + $0xd4] sm:$0x1] %vm541, 0
      %v594 = vpack.c.bf16 %v507, %v506
      %v595 = vpack.c.bf16 %v509, %v508
      %v596 = vpack.c.bf16 %v511, %v510
      %v597 = vpack.c.bf16 %v513, %v512
      %v598 = vpack.c.bf16 %v515, %v514
      %v599 = vpack.c.bf16 %v517, %v516
      %v600 = vpack.c.bf16 %v519, %v518
      %v601 = vpack.c.bf16 %v521, %v520
      %v602 = vpack.c.bf16 %v523, %v522
      %v603 = vpack.c.bf16 %v525, %v524
      %v604 = vpack.c.bf16 %v527, %v526
      %v605 = vpack.c.bf16 %v529, %v528
      %v606 = vpack.c.bf16 %v531, %v530
      %v607 = vpack.c.bf16 %v533, %v532
      %v608 = vpack.c.bf16 %v535, %v534
      %v609 = vpack.c.bf16 %v537, %v536
      %v626 = vunpack.c.l.b16 %v594
      %v627 = vunpack.c.h.b16 %v594
      %v628 = vunpack.c.l.b16 %v595
      %v629 = vunpack.c.h.b16 %v595
      %v630 = vunpack.c.l.b16 %v596
      %v631 = vunpack.c.h.b16 %v596
      %v632 = vunpack.c.l.b16 %v597
      %v633 = vunpack.c.h.b16 %v597
      %v634 = vunpack.c.l.b16 %v598
      %v635 = vunpack.c.h.b16 %v598
      %v636 = vunpack.c.l.b16 %v599
      %v637 = vunpack.c.h.b16 %v599
      %v638 = vunpack.c.l.b16 %v600
      %v639 = vunpack.c.h.b16 %v600
      %v640 = vunpack.c.l.b16 %v601
      %v641 = vunpack.c.h.b16 %v601
      %v642 = vunpack.c.l.b16 %v602
      %v643 = vunpack.c.h.b16 %v602
      %v644 = vunpack.c.l.b16 %v603
      %v645 = vunpack.c.h.b16 %v603
      %v646 = vunpack.c.l.b16 %v604
      %v647 = vunpack.c.h.b16 %v604
      %v648 = vunpack.c.l.b16 %v605
      %v649 = vunpack.c.h.b16 %v605
      %v650 = vunpack.c.l.b16 %v606
      %v651 = vunpack.c.h.b16 %v606
      %v652 = vunpack.c.l.b16 %v607
      %v653 = vunpack.c.h.b16 %v607
      %v654 = vunpack.c.l.b16 %v608
      %v655 = vunpack.c.h.b16 %v608
      %v656 = vunpack.c.l.b16 %v609
      %v657 = vunpack.c.h.b16 %v609
      %v658 = vpack.c.b16 %v626, %v626
      %v659 = vpack.c.b16 %v627, %v627
      %v660 = vpack.c.b16 %v628, %v628
      %v661 = vpack.c.b16 %v629, %v629
      %v662 = vpack.c.b16 %v630, %v630
      %v663 = vpack.c.b16 %v631, %v631
      %v664 = vpack.c.b16 %v632, %v632
      %v665 = vpack.c.b16 %v633, %v633
      %v666 = vpack.c.b16 %v634, %v634
      %v667 = vpack.c.b16 %v635, %v635
      %v668 = vpack.c.b16 %v636, %v636
      %v669 = vpack.c.b16 %v637, %v637
      %v670 = vpack.c.b16 %v638, %v638
      %v671 = vpack.c.b16 %v639, %v639
      %v672 = vpack.c.b16 %v640, %v640
      %v673 = vpack.c.b16 %v641, %v641
      %v674 = vpack.c.b16 %v642, %v642
      %v675 = vpack.c.b16 %v643, %v643
      %v676 = vpack.c.b16 %v644, %v644
      %v677 = vpack.c.b16 %v645, %v645
      %v678 = vpack.c.b16 %v646, %v646
      %v679 = vpack.c.b16 %v647, %v647
      %v680 = vpack.c.b16 %v648, %v648
      %v681 = vpack.c.b16 %v649, %v649
      %v682 = vpack.c.b16 %v650, %v650
      %v683 = vpack.c.b16 %v651, %v651
      %v684 = vpack.c.b16 %v652, %v652
      %v685 = vpack.c.b16 %v653, %v653
      %v686 = vpack.c.b16 %v654, %v654
      %v687 = vpack.c.b16 %v655, %v655
      %v688 = vpack.c.b16 %v656, %v656
      %v689 = vpack.c.b16 %v657, %v657
      %vm690 = vsmask.f32 256
      %vm691 = vsmask.f32 4368
      %vm692 = vmor %vm690, %vm691
      %v694 = vshrl.u32 %v658, 16
      %v696 = vrot.slane %v694, 7
      %v697 = vshll.u32 %v658, 16
      %v699 = vor.u32 %v696, %v697
      %v700 = vrot.slane %v696, 4
      %v702 = vshrl.u32 %v659, 16
      %v704 = vrot.slane %v702, 7
      %v705 = vshll.u32 %v659, 16
      %v707 = vor.u32 %v704, %v705
      %v708 = vsel %vm692, %v700, %v707
      %v709 = vrot.slane %v704, 4
      %v711 = vshrl.u32 %v660, 16
      %v713 = vrot.slane %v711, 7
      %v714 = vshll.u32 %v660, 16
      %v716 = vor.u32 %v713, %v714
      %v717 = vrot.slane %v713, 4
      %v719 = vshrl.u32 %v661, 16
      %v721 = vrot.slane %v719, 7
      %v722 = vshll.u32 %v661, 16
      %v724 = vor.u32 %v721, %v722
      %v725 = vsel %vm692, %v717, %v724
      %v726 = vrot.slane %v721, 4
      %v728 = vshrl.u32 %v662, 16
      %v730 = vrot.slane %v728, 7
      %v731 = vshll.u32 %v662, 16
      %v733 = vor.u32 %v730, %v731
      %v734 = vrot.slane %v730, 4
      %v736 = vshrl.u32 %v663, 16
      %v738 = vrot.slane %v736, 7
      %v739 = vshll.u32 %v663, 16
      %v741 = vor.u32 %v738, %v739
      %v742 = vsel %vm692, %v734, %v741
      %v743 = vrot.slane %v738, 4
      %v745 = vshrl.u32 %v664, 16
      %v747 = vrot.slane %v745, 7
      %v748 = vshll.u32 %v664, 16
      %v750 = vor.u32 %v747, %v748
      %v751 = vrot.slane %v747, 4
      %v753 = vshrl.u32 %v665, 16
      %v755 = vrot.slane %v753, 7
      %v756 = vshll.u32 %v665, 16
      %v758 = vor.u32 %v755, %v756
      %v759 = vsel %vm692, %v751, %v758
      %v760 = vrot.slane %v755, 4
      %v762 = vshrl.u32 %v666, 16
      %v764 = vrot.slane %v762, 7
      %v765 = vshll.u32 %v666, 16
      %v767 = vor.u32 %v764, %v765
      %v768 = vrot.slane %v764, 4
      %v770 = vshrl.u32 %v667, 16
      %v772 = vrot.slane %v770, 7
      %v773 = vshll.u32 %v667, 16
      %v775 = vor.u32 %v772, %v773
      %v776 = vsel %vm692, %v768, %v775
      %v777 = vrot.slane %v772, 4
      %v779 = vshrl.u32 %v668, 16
      %v781 = vrot.slane %v779, 7
      %v782 = vshll.u32 %v668, 16
      %v784 = vor.u32 %v781, %v782
      %v785 = vrot.slane %v781, 4
      %v787 = vshrl.u32 %v669, 16
      %v789 = vrot.slane %v787, 7
      %v790 = vshll.u32 %v669, 16
      %v792 = vor.u32 %v789, %v790
      %v793 = vsel %vm692, %v785, %v792
      %v794 = vrot.slane %v789, 4
      %v796 = vshrl.u32 %v670, 16
      %v798 = vrot.slane %v796, 7
      %v799 = vshll.u32 %v670, 16
      %v801 = vor.u32 %v798, %v799
      %v802 = vrot.slane %v798, 4
      %v804 = vshrl.u32 %v671, 16
      %v806 = vrot.slane %v804, 7
      %v807 = vshll.u32 %v671, 16
      %v809 = vor.u32 %v806, %v807
      %v810 = vsel %vm692, %v802, %v809
      %v811 = vrot.slane %v806, 4
      %v813 = vshrl.u32 %v672, 16
      %v815 = vrot.slane %v813, 7
      %v816 = vshll.u32 %v672, 16
      %v818 = vor.u32 %v815, %v816
      %v819 = vrot.slane %v815, 4
      %v821 = vshrl.u32 %v673, 16
      %v823 = vrot.slane %v821, 7
      %v824 = vshll.u32 %v673, 16
      %v826 = vor.u32 %v823, %v824
      %v827 = vsel %vm692, %v819, %v826
      %v828 = vrot.slane %v823, 4
      %v830 = vshrl.u32 %v674, 16
      %v832 = vrot.slane %v830, 7
      %v833 = vshll.u32 %v674, 16
      %v835 = vor.u32 %v832, %v833
      %v836 = vrot.slane %v832, 4
      %v838 = vshrl.u32 %v675, 16
      %v840 = vrot.slane %v838, 7
      %v841 = vshll.u32 %v675, 16
      %v843 = vor.u32 %v840, %v841
      %v844 = vsel %vm692, %v836, %v843
      %v845 = vrot.slane %v840, 4
      %v847 = vshrl.u32 %v676, 16
      %v849 = vrot.slane %v847, 7
      %v850 = vshll.u32 %v676, 16
      %v852 = vor.u32 %v849, %v850
      %v853 = vrot.slane %v849, 4
      %v855 = vshrl.u32 %v677, 16
      %v857 = vrot.slane %v855, 7
      %v858 = vshll.u32 %v677, 16
      %v860 = vor.u32 %v857, %v858
      %v861 = vsel %vm692, %v853, %v860
      %v862 = vrot.slane %v857, 4
      %v864 = vshrl.u32 %v678, 16
      %v866 = vrot.slane %v864, 7
      %v867 = vshll.u32 %v678, 16
      %v869 = vor.u32 %v866, %v867
      %v870 = vrot.slane %v866, 4
      %v872 = vshrl.u32 %v679, 16
      %v874 = vrot.slane %v872, 7
      %v875 = vshll.u32 %v679, 16
      %v877 = vor.u32 %v874, %v875
      %v878 = vsel %vm692, %v870, %v877
      %v879 = vrot.slane %v874, 4
      %v881 = vshrl.u32 %v680, 16
      %v883 = vrot.slane %v881, 7
      %v884 = vshll.u32 %v680, 16
      %v886 = vor.u32 %v883, %v884
      %v887 = vrot.slane %v883, 4
      %v889 = vshrl.u32 %v681, 16
      %v891 = vrot.slane %v889, 7
      %v892 = vshll.u32 %v681, 16
      %v894 = vor.u32 %v891, %v892
      %v895 = vsel %vm692, %v887, %v894
      %v896 = vrot.slane %v891, 4
      %v898 = vshrl.u32 %v682, 16
      %v900 = vrot.slane %v898, 7
      %v901 = vshll.u32 %v682, 16
      %v903 = vor.u32 %v900, %v901
      %v904 = vrot.slane %v900, 4
      %v906 = vshrl.u32 %v683, 16
      %v908 = vrot.slane %v906, 7
      %v909 = vshll.u32 %v683, 16
      %v911 = vor.u32 %v908, %v909
      %v912 = vsel %vm692, %v904, %v911
      %v913 = vrot.slane %v908, 4
      %v915 = vshrl.u32 %v684, 16
      %v917 = vrot.slane %v915, 7
      %v918 = vshll.u32 %v684, 16
      %v920 = vor.u32 %v917, %v918
      %v921 = vrot.slane %v917, 4
      %v923 = vshrl.u32 %v685, 16
      %v925 = vrot.slane %v923, 7
      %v926 = vshll.u32 %v685, 16
      %v928 = vor.u32 %v925, %v926
      %v929 = vsel %vm692, %v921, %v928
      %v930 = vrot.slane %v925, 4
      %v932 = vshrl.u32 %v686, 16
      %v934 = vrot.slane %v932, 7
      %v935 = vshll.u32 %v686, 16
      %v937 = vor.u32 %v934, %v935
      %v938 = vrot.slane %v934, 4
      %v940 = vshrl.u32 %v687, 16
      %v942 = vrot.slane %v940, 7
      %v943 = vshll.u32 %v687, 16
      %v945 = vor.u32 %v942, %v943
      %v946 = vsel %vm692, %v938, %v945
      %v947 = vrot.slane %v942, 4
      %v949 = vshrl.u32 %v688, 16
      %v951 = vrot.slane %v949, 7
      %v952 = vshll.u32 %v688, 16
      %v954 = vor.u32 %v951, %v952
      %v955 = vrot.slane %v951, 4
      %v957 = vshrl.u32 %v689, 16
      %v959 = vrot.slane %v957, 7
      %v960 = vshll.u32 %v689, 16
      %v962 = vor.u32 %v959, %v960
      %v963 = vsel %vm692, %v955, %v962
      %v964 = vrot.slane %v959, 4
      %s1013 = scalar_lea.vmem [#allocation2], 12
      %vm1014 = vcmask 27648
      %vm1015 = vsmask.f32 7938
      %vm1016 = vmand %vm1014, %vm1015
      %v1017 = vld [vmem:[%s1013] sm:$0xf]
      %v1018 = vsel %vm1016, %v699, %v1017
      %1019 = vst [vmem:[%s1013] sm:$0xf] %v1018
      %1020 = vst.msk [vmem:[%s1013 + $0x4] sm:$0xf] %vm538, %v708
      %vm1021 = vcmask 24576
      %vm1022 = vmand %vm1021, %vm690
      %v1023 = vld [vmem:[%s1013 + $0x8] sm:$0x1]
      %v1024 = vsel %vm1022, %v709, %v1023
      %1025 = vst [vmem:[%s1013 + $0x8] sm:$0x1] %v1024
      %v1026 = vld [vmem:[%s1013 + $0xc] sm:$0xf]
      %v1027 = vsel %vm1016, %v716, %v1026
      %1028 = vst [vmem:[%s1013 + $0xc] sm:$0xf] %v1027
      %1029 = vst.msk [vmem:[%s1013 + $0x10] sm:$0xf] %vm538, %v725
      %v1030 = vld [vmem:[%s1013 + $0x14] sm:$0x1]
      %v1031 = vsel %vm1022, %v726, %v1030
      %1032 = vst [vmem:[%s1013 + $0x14] sm:$0x1] %v1031
      %v1033 = vld [vmem:[%s1013 + $0x18] sm:$0xf]
      %v1034 = vsel %vm1016, %v733, %v1033
      %1035 = vst [vmem:[%s1013 + $0x18] sm:$0xf] %v1034
      %1036 = vst.msk [vmem:[%s1013 + $0x1c] sm:$0xf] %vm538, %v742
      %v1037 = vld [vmem:[%s1013 + $0x20] sm:$0x1]
      %v1038 = vsel %vm1022, %v743, %v1037
      %1039 = vst [vmem:[%s1013 + $0x20] sm:$0x1] %v1038
      %v1040 = vld [vmem:[%s1013 + $0x24] sm:$0xf]
      %v1041 = vsel %vm1016, %v750, %v1040
      %1042 = vst [vmem:[%s1013 + $0x24] sm:$0xf] %v1041
      %1043 = vst.msk [vmem:[%s1013 + $0x28] sm:$0xf] %vm538, %v759
      %v1044 = vld [vmem:[%s1013 + $0x2c] sm:$0x1]
      %v1045 = vsel %vm1022, %v760, %v1044
      %1046 = vst [vmem:[%s1013 + $0x2c] sm:$0x1] %v1045
      %v1047 = vld [vmem:[%s1013 + $0x30] sm:$0xf]
      %v1048 = vsel %vm1016, %v767, %v1047
      %1049 = vst [vmem:[%s1013 + $0x30] sm:$0xf] %v1048
      %1050 = vst.msk [vmem:[%s1013 + $0x34] sm:$0xf] %vm538, %v776
      %v1051 = vld [vmem:[%s1013 + $0x38] sm:$0x1]
      %v1052 = vsel %vm1022, %v777, %v1051
      %1053 = vst [vmem:[%s1013 + $0x38] sm:$0x1] %v1052
      %v1054 = vld [vmem:[%s1013 + $0x3c] sm:$0xf]
      %v1055 = vsel %vm1016, %v784, %v1054
      %1056 = vst [vmem:[%s1013 + $0x3c] sm:$0xf] %v1055
      %1057 = vst.msk [vmem:[%s1013 + $0x40] sm:$0xf] %vm538, %v793
      %v1058 = vld [vmem:[%s1013 + $0x44] sm:$0x1]
      %v1059 = vsel %vm1022, %v794, %v1058
      %1060 = vst [vmem:[%s1013 + $0x44] sm:$0x1] %v1059
      %v1061 = vld [vmem:[%s1013 + $0x48] sm:$0xf]
      %v1062 = vsel %vm1016, %v801, %v1061
      %1063 = vst [vmem:[%s1013 + $0x48] sm:$0xf] %v1062
      %1064 = vst.msk [vmem:[%s1013 + $0x4c] sm:$0xf] %vm538, %v810
      %v1065 = vld [vmem:[%s1013 + $0x50] sm:$0x1]
      %v1066 = vsel %vm1022, %v811, %v1065
      %1067 = vst [vmem:[%s1013 + $0x50] sm:$0x1] %v1066
      %v1068 = vld [vmem:[%s1013 + $0x54] sm:$0xf]
      %v1069 = vsel %vm1016, %v818, %v1068
      %1070 = vst [vmem:[%s1013 + $0x54] sm:$0xf] %v1069
      %1071 = vst.msk [vmem:[%s1013 + $0x58] sm:$0xf] %vm538, %v827
      %v1072 = vld [vmem:[%s1013 + $0x5c] sm:$0x1]
      %v1073 = vsel %vm1022, %v828, %v1072
      %1074 = vst [vmem:[%s1013 + $0x5c] sm:$0x1] %v1073
      %v1075 = vld [vmem:[%s1013 + $0x60] sm:$0xf]
      %v1076 = vsel %vm1016, %v835, %v1075
      %1077 = vst [vmem:[%s1013 + $0x60] sm:$0xf] %v1076
      %1078 = vst.msk [vmem:[%s1013 + $0x64] sm:$0xf] %vm538, %v844
      %v1079 = vld [vmem:[%s1013 + $0x68] sm:$0x1]
      %v1080 = vsel %vm1022, %v845, %v1079
      %1081 = vst [vmem:[%s1013 + $0x68] sm:$0x1] %v1080
      %v1082 = vld [vmem:[%s1013 + $0x6c] sm:$0xf]
      %v1083 = vsel %vm1016, %v852, %v1082
      %1084 = vst [vmem:[%s1013 + $0x6c] sm:$0xf] %v1083
      %1085 = vst.msk [vmem:[%s1013 + $0x70] sm:$0xf] %vm538, %v861
      %v1086 = vld [vmem:[%s1013 + $0x74] sm:$0x1]
      %v1087 = vsel %vm1022, %v862, %v1086
      %1088 = vst [vmem:[%s1013 + $0x74] sm:$0x1] %v1087
      %v1089 = vld [vmem:[%s1013 + $0x78] sm:$0xf]
      %v1090 = vsel %vm1016, %v869, %v1089
      %1091 = vst [vmem:[%s1013 + $0x78] sm:$0xf] %v1090
      %1092 = vst.msk [vmem:[%s1013 + $0x7c] sm:$0xf] %vm538, %v878
      %v1093 = vld [vmem:[%s1013 + $0x80] sm:$0x1]
      %v1094 = vsel %vm1022, %v879, %v1093
      %1095 = vst [vmem:[%s1013 + $0x80] sm:$0x1] %v1094
      %v1096 = vld [vmem:[%s1013 + $0x84] sm:$0xf]
      %v1097 = vsel %vm1016, %v886, %v1096
      %1098 = vst [vmem:[%s1013 + $0x84] sm:$0xf] %v1097
      %1099 = vst.msk [vmem:[%s1013 + $0x88] sm:$0xf] %vm538, %v895
      %v1100 = vld [vmem:[%s1013 + $0x8c] sm:$0x1]
      %v1101 = vsel %vm1022, %v896, %v1100
      %1102 = vst [vmem:[%s1013 + $0x8c] sm:$0x1] %v1101
      %v1103 = vld [vmem:[%s1013 + $0x90] sm:$0xf]
      %v1104 = vsel %vm1016, %v903, %v1103
      %1105 = vst [vmem:[%s1013 + $0x90] sm:$0xf] %v1104
      %1106 = vst.msk [vmem:[%s1013 + $0x94] sm:$0xf] %vm538, %v912
      %v1107 = vld [vmem:[%s1013 + $0x98] sm:$0x1]
      %v1108 = vsel %vm1022, %v913, %v1107
      %1109 = vst [vmem:[%s1013 + $0x98] sm:$0x1] %v1108
      %v1110 = vld [vmem:[%s1013 + $0x9c] sm:$0xf]
      %v1111 = vsel %vm1016, %v920, %v1110
      %1112 = vst [vmem:[%s1013 + $0x9c] sm:$0xf] %v1111
      %1113 = vst.msk [vmem:[%s1013 + $0xa0] sm:$0xf] %vm538, %v929
      %v1114 = vld [vmem:[%s1013 + $0xa4] sm:$0x1]
      %v1115 = vsel %vm1022, %v930, %v1114
      %1116 = vst [vmem:[%s1013 + $0xa4] sm:$0x1] %v1115
      %v1117 = vld [vmem:[%s1013 + $0xa8] sm:$0xf]
      %v1118 = vsel %vm1016, %v937, %v1117
      %1119 = vst [vmem:[%s1013 + $0xa8] sm:$0xf] %v1118
      %1120 = vst.msk [vmem:[%s1013 + $0xac] sm:$0xf] %vm538, %v946
      %v1121 = vld [vmem:[%s1013 + $0xb0] sm:$0x1]
      %v1122 = vsel %vm1022, %v947, %v1121
      %1123 = vst [vmem:[%s1013 + $0xb0] sm:$0x1] %v1122
      %v1124 = vld [vmem:[%s1013 + $0xb4] sm:$0xf]
      %v1125 = vsel %vm1016, %v954, %v1124
      %1126 = vst [vmem:[%s1013 + $0xb4] sm:$0xf] %v1125
      %1127 = vst.msk [vmem:[%s1013 + $0xb8] sm:$0xf] %vm538, %v963
      %v1128 = vld [vmem:[%s1013 + $0xbc] sm:$0x1]
      %v1129 = vsel %vm1022, %v964, %v1128
      %1130 = vst [vmem:[%s1013 + $0xbc] sm:$0x1] %v1129
      loop: start=0, step=1, limit=2
      $region41: #{residual_block.4} parent=39 // loop_pre_header
        _
      $region42: #{residual_block.4} parent=39 // loop_header
        %s1132 = sphi 0, %s1136
        %p1133 = scmp.ge.s32.totalorder %s1132, 2
        %v1137 = vphi 0.0, %v2839
        %v1138 = vphi 0.0, %v2893
      $region43: #{residual_block.4} parent=39 // loop_header_branch
        %1135 = sbr.rel (%p1133) target = $region47
      $region44: #{residual_block.4} parent=39 // loop_body
        %s1139 = smul.u32 %s1132, 8
        %s1140 = smul.u32 %s1139, 3
        %s1141 = smul.addr %s1140, 4
        %s1142 = scalar_lea.vmem [#allocation2], %s1141
        %v1143 = vld [vmem:[%s1142] sm:$0xf]
        %v1144 = vld [vmem:[%s1142 + $0x4] sm:$0xf]
        %v1145 = vld [vmem:[%s1142 + $0xc] sm:$0xf]
        %v1146 = vld [vmem:[%s1142 + $0x10] sm:$0xf]
        %v1147 = vld [vmem:[%s1142 + $0x18] sm:$0xf]
        %v1148 = vld [vmem:[%s1142 + $0x1c] sm:$0xf]
        %v1149 = vld [vmem:[%s1142 + $0x24] sm:$0xf]
        %v1150 = vld [vmem:[%s1142 + $0x28] sm:$0xf]
        %v1151 = vld [vmem:[%s1142 + $0x30] sm:$0xf]
        %v1152 = vld [vmem:[%s1142 + $0x34] sm:$0xf]
        %v1153 = vld [vmem:[%s1142 + $0x3c] sm:$0xf]
        %v1154 = vld [vmem:[%s1142 + $0x40] sm:$0xf]
        %v1155 = vld [vmem:[%s1142 + $0x48] sm:$0xf]
        %v1156 = vld [vmem:[%s1142 + $0x4c] sm:$0xf]
        %v1157 = vld [vmem:[%s1142 + $0x54] sm:$0xf]
        %v1158 = vld [vmem:[%s1142 + $0x58] sm:$0xf]
        %v1159 = vld [vmem:[%s1142 + $0x8] sm:$0x1]
        %v1160 = vld [vmem:[%s1142 + $0x14] sm:$0x1]
        %v1161 = vld [vmem:[%s1142 + $0x20] sm:$0x1]
        %v1162 = vld [vmem:[%s1142 + $0x2c] sm:$0x1]
        %v1163 = vld [vmem:[%s1142 + $0x38] sm:$0x1]
        %v1164 = vld [vmem:[%s1142 + $0x44] sm:$0x1]
        %v1165 = vld [vmem:[%s1142 + $0x50] sm:$0x1]
        %v1166 = vld [vmem:[%s1142 + $0x5c] sm:$0x1]
        %vm1167 = vsmask.f32 3328
        %vm1168 = vsmask.f32 7440
        %vm1169 = vmor %vm1167, %vm1168
        %v1171 = vshrl.u32 %v1143, 16
        %v1173 = vrot.slane %v1171, 4
        %v1174 = vshll.u32 %v1143, 16
        %v1176 = vrot.slane %v1174, 5
        %v1177 = vor.u32 %v1173, %v1176
        %v1178 = vrot.slane %v1177, 4
        %v1180 = vshll.u32 %v1144, 16
        %v1182 = vrot.slane %v1180, 5
        %v1183 = vsel %vm1169, %v1178, %v1182
        %v1184 = vshrl.u32 %v1144, 16
        %v1186 = vrot.slane %v1184, 4
        %v1187 = vor.u32 %v1186, %v1182
        %v1188 = vrot.slane %v1187, 4
        %v1190 = vshll.u32 %v1159, 16
        %v1192 = vrot.slane %v1190, 5
        %v1193 = vsel %vm1169, %v1188, %v1192
        %v1195 = vshrl.u32 %v1145, 16
        %v1197 = vrot.slane %v1195, 4
        %v1198 = vshll.u32 %v1145, 16
        %v1200 = vrot.slane %v1198, 5
        %v1201 = vor.u32 %v1197, %v1200
        %v1202 = vrot.slane %v1201, 4
        %v1204 = vshll.u32 %v1146, 16
        %v1206 = vrot.slane %v1204, 5
        %v1207 = vsel %vm1169, %v1202, %v1206
        %v1208 = vshrl.u32 %v1146, 16
        %v1210 = vrot.slane %v1208, 4
        %v1211 = vor.u32 %v1210, %v1206
        %v1212 = vrot.slane %v1211, 4
        %v1214 = vshll.u32 %v1160, 16
        %v1216 = vrot.slane %v1214, 5
        %v1217 = vsel %vm1169, %v1212, %v1216
        %v1219 = vshrl.u32 %v1147, 16
        %v1221 = vrot.slane %v1219, 4
        %v1222 = vshll.u32 %v1147, 16
        %v1224 = vrot.slane %v1222, 5
        %v1225 = vor.u32 %v1221, %v1224
        %v1226 = vrot.slane %v1225, 4
        %v1228 = vshll.u32 %v1148, 16
        %v1230 = vrot.slane %v1228, 5
        %v1231 = vsel %vm1169, %v1226, %v1230
        %v1232 = vshrl.u32 %v1148, 16
        %v1234 = vrot.slane %v1232, 4
        %v1235 = vor.u32 %v1234, %v1230
        %v1236 = vrot.slane %v1235, 4
        %v1238 = vshll.u32 %v1161, 16
        %v1240 = vrot.slane %v1238, 5
        %v1241 = vsel %vm1169, %v1236, %v1240
        %v1243 = vshrl.u32 %v1149, 16
        %v1245 = vrot.slane %v1243, 4
        %v1246 = vshll.u32 %v1149, 16
        %v1248 = vrot.slane %v1246, 5
        %v1249 = vor.u32 %v1245, %v1248
        %v1250 = vrot.slane %v1249, 4
        %v1252 = vshll.u32 %v1150, 16
        %v1254 = vrot.slane %v1252, 5
        %v1255 = vsel %vm1169, %v1250, %v1254
        %v1256 = vshrl.u32 %v1150, 16
        %v1258 = vrot.slane %v1256, 4
        %v1259 = vor.u32 %v1258, %v1254
        %v1260 = vrot.slane %v1259, 4
        %v1262 = vshll.u32 %v1162, 16
        %v1264 = vrot.slane %v1262, 5
        %v1265 = vsel %vm1169, %v1260, %v1264
        %v1267 = vshrl.u32 %v1151, 16
        %v1269 = vrot.slane %v1267, 4
        %v1270 = vshll.u32 %v1151, 16
        %v1272 = vrot.slane %v1270, 5
        %v1273 = vor.u32 %v1269, %v1272
        %v1274 = vrot.slane %v1273, 4
        %v1276 = vshll.u32 %v1152, 16
        %v1278 = vrot.slane %v1276, 5
        %v1279 = vsel %vm1169, %v1274, %v1278
        %v1280 = vshrl.u32 %v1152, 16
        %v1282 = vrot.slane %v1280, 4
        %v1283 = vor.u32 %v1282, %v1278
        %v1284 = vrot.slane %v1283, 4
        %v1286 = vshll.u32 %v1163, 16
        %v1288 = vrot.slane %v1286, 5
        %v1289 = vsel %vm1169, %v1284, %v1288
        %v1291 = vshrl.u32 %v1153, 16
        %v1293 = vrot.slane %v1291, 4
        %v1294 = vshll.u32 %v1153, 16
        %v1296 = vrot.slane %v1294, 5
        %v1297 = vor.u32 %v1293, %v1296
        %v1298 = vrot.slane %v1297, 4
        %v1300 = vshll.u32 %v1154, 16
        %v1302 = vrot.slane %v1300, 5
        %v1303 = vsel %vm1169, %v1298, %v1302
        %v1304 = vshrl.u32 %v1154, 16
        %v1306 = vrot.slane %v1304, 4
        %v1307 = vor.u32 %v1306, %v1302
        %v1308 = vrot.slane %v1307, 4
        %v1310 = vshll.u32 %v1164, 16
        %v1312 = vrot.slane %v1310, 5
        %v1313 = vsel %vm1169, %v1308, %v1312
        %v1315 = vshrl.u32 %v1155, 16
        %v1317 = vrot.slane %v1315, 4
        %v1318 = vshll.u32 %v1155, 16
        %v1320 = vrot.slane %v1318, 5
        %v1321 = vor.u32 %v1317, %v1320
        %v1322 = vrot.slane %v1321, 4
        %v1324 = vshll.u32 %v1156, 16
        %v1326 = vrot.slane %v1324, 5
        %v1327 = vsel %vm1169, %v1322, %v1326
        %v1328 = vshrl.u32 %v1156, 16
        %v1330 = vrot.slane %v1328, 4
        %v1331 = vor.u32 %v1330, %v1326
        %v1332 = vrot.slane %v1331, 4
        %v1334 = vshll.u32 %v1165, 16
        %v1336 = vrot.slane %v1334, 5
        %v1337 = vsel %vm1169, %v1332, %v1336
        %v1339 = vshrl.u32 %v1157, 16
        %v1341 = vrot.slane %v1339, 4
        %v1342 = vshll.u32 %v1157, 16
        %v1344 = vrot.slane %v1342, 5
        %v1345 = vor.u32 %v1341, %v1344
        %v1346 = vrot.slane %v1345, 4
        %v1348 = vshll.u32 %v1158, 16
        %v1350 = vrot.slane %v1348, 5
        %v1351 = vsel %vm1169, %v1346, %v1350
        %v1352 = vshrl.u32 %v1158, 16
        %v1354 = vrot.slane %v1352, 4
        %v1355 = vor.u32 %v1354, %v1350
        %v1356 = vrot.slane %v1355, 4
        %v1358 = vshll.u32 %v1166, 16
        %v1360 = vrot.slane %v1358, 5
        %v1361 = vsel %vm1169, %v1356, %v1360
        %v1362 = vld [vmem:[%s1142] sm:$0xe]
        %v1363 = vld [vmem:[%s1142 + $0xc] sm:$0xe]
        %v1364 = vld [vmem:[%s1142 + $0x18] sm:$0xe]
        %v1365 = vld [vmem:[%s1142 + $0x24] sm:$0xe]
        %v1366 = vld [vmem:[%s1142 + $0x30] sm:$0xe]
        %v1367 = vld [vmem:[%s1142 + $0x3c] sm:$0xe]
        %v1368 = vld [vmem:[%s1142 + $0x48] sm:$0xe]
        %v1369 = vld [vmem:[%s1142 + $0x54] sm:$0xe]
        %vm1394 = vcmask 1042432
        %vm1395 = vcmask 1046532
        %vm1396 = vmor %vm1394, %vm1395
        %v1397 = vrot.slane %v1362, 5
        %v1398 = vrot.slane %v1397, 4
        %v1399 = vrot.slane %v1144, 5
        %v1400 = vsel %vm1396, %v1398, %v1399
        %v1401 = vrot.slane %v1399, 4
        %v1402 = vrot.slane %v1159, 5
        %v1403 = vsel %vm1396, %v1401, %v1402
        %v1404 = vrot.slane %v1363, 5
        %v1405 = vrot.slane %v1404, 4
        %v1406 = vrot.slane %v1146, 5
        %v1407 = vsel %vm1396, %v1405, %v1406
        %v1408 = vrot.slane %v1406, 4
        %v1409 = vrot.slane %v1160, 5
        %v1410 = vsel %vm1396, %v1408, %v1409
        %v1411 = vrot.slane %v1364, 5
        %v1412 = vrot.slane %v1411, 4
        %v1413 = vrot.slane %v1148, 5
        %v1414 = vsel %vm1396, %v1412, %v1413
        %v1415 = vrot.slane %v1413, 4
        %v1416 = vrot.slane %v1161, 5
        %v1417 = vsel %vm1396, %v1415, %v1416
        %v1418 = vrot.slane %v1365, 5
        %v1419 = vrot.slane %v1418, 4
        %v1420 = vrot.slane %v1150, 5
        %v1421 = vsel %vm1396, %v1419, %v1420
        %v1422 = vrot.slane %v1420, 4
        %v1423 = vrot.slane %v1162, 5
        %v1424 = vsel %vm1396, %v1422, %v1423
        %v1425 = vrot.slane %v1366, 5
        %v1426 = vrot.slane %v1425, 4
        %v1427 = vrot.slane %v1152, 5
        %v1428 = vsel %vm1396, %v1426, %v1427
        %v1429 = vrot.slane %v1427, 4
        %v1430 = vrot.slane %v1163, 5
        %v1431 = vsel %vm1396, %v1429, %v1430
        %v1432 = vrot.slane %v1367, 5
        %v1433 = vrot.slane %v1432, 4
        %v1434 = vrot.slane %v1154, 5
        %v1435 = vsel %vm1396, %v1433, %v1434
        %v1436 = vrot.slane %v1434, 4
        %v1437 = vrot.slane %v1164, 5
        %v1438 = vsel %vm1396, %v1436, %v1437
        %v1439 = vrot.slane %v1368, 5
        %v1440 = vrot.slane %v1439, 4
        %v1441 = vrot.slane %v1156, 5
        %v1442 = vsel %vm1396, %v1440, %v1441
        %v1443 = vrot.slane %v1441, 4
        %v1444 = vrot.slane %v1165, 5
        %v1445 = vsel %vm1396, %v1443, %v1444
        %v1446 = vrot.slane %v1369, 5
        %v1447 = vrot.slane %v1446, 4
        %v1448 = vrot.slane %v1158, 5
        %v1449 = vsel %vm1396, %v1447, %v1448
        %v1450 = vrot.slane %v1448, 4
        %v1451 = vrot.slane %v1166, 5
        %v1452 = vsel %vm1396, %v1450, %v1451
        %s1453 = sadd.s32 %s1139, 1
        %s1454 = smul.u32 %s1453, 3
        %s1455 = smul.addr %s1454, 4
        %s1456 = scalar_lea.vmem [#allocation2], %s1455
        %v1457 = vld [vmem:[%s1456] sm:$0xf]
        %v1458 = vld [vmem:[%s1456 + $0x4] sm:$0xf]
        %v1459 = vld [vmem:[%s1456 + $0xc] sm:$0xf]
        %v1460 = vld [vmem:[%s1456 + $0x10] sm:$0xf]
        %v1461 = vld [vmem:[%s1456 + $0x18] sm:$0xf]
        %v1462 = vld [vmem:[%s1456 + $0x1c] sm:$0xf]
        %v1463 = vld [vmem:[%s1456 + $0x24] sm:$0xf]
        %v1464 = vld [vmem:[%s1456 + $0x28] sm:$0xf]
        %v1465 = vld [vmem:[%s1456 + $0x30] sm:$0xf]
        %v1466 = vld [vmem:[%s1456 + $0x34] sm:$0xf]
        %v1467 = vld [vmem:[%s1456 + $0x3c] sm:$0xf]
        %v1468 = vld [vmem:[%s1456 + $0x40] sm:$0xf]
        %v1469 = vld [vmem:[%s1456 + $0x48] sm:$0xf]
        %v1470 = vld [vmem:[%s1456 + $0x4c] sm:$0xf]
        %v1471 = vld [vmem:[%s1456 + $0x54] sm:$0xf]
        %v1472 = vld [vmem:[%s1456 + $0x58] sm:$0xf]
        %v1473 = vld [vmem:[%s1456 + $0x8] sm:$0x1]
        %v1474 = vld [vmem:[%s1456 + $0x14] sm:$0x1]
        %v1475 = vld [vmem:[%s1456 + $0x20] sm:$0x1]
        %v1476 = vld [vmem:[%s1456 + $0x2c] sm:$0x1]
        %v1477 = vld [vmem:[%s1456 + $0x38] sm:$0x1]
        %v1478 = vld [vmem:[%s1456 + $0x44] sm:$0x1]
        %v1479 = vld [vmem:[%s1456 + $0x50] sm:$0x1]
        %v1480 = vld [vmem:[%s1456 + $0x5c] sm:$0x1]
        %v1482 = vshrl.u32 %v1457, 16
        %v1484 = vrot.slane %v1482, 4
        %v1485 = vshll.u32 %v1457, 16
        %v1487 = vrot.slane %v1485, 5
        %v1488 = vor.u32 %v1484, %v1487
        %v1489 = vrot.slane %v1488, 4
        %v1491 = vshll.u32 %v1458, 16
        %v1493 = vrot.slane %v1491, 5
        %v1494 = vsel %vm1169, %v1489, %v1493
        %v1495 = vshrl.u32 %v1458, 16
        %v1497 = vrot.slane %v1495, 4
        %v1498 = vor.u32 %v1497, %v1493
        %v1499 = vrot.slane %v1498, 4
        %v1501 = vshll.u32 %v1473, 16
        %v1503 = vrot.slane %v1501, 5
        %v1504 = vsel %vm1169, %v1499, %v1503
        %v1506 = vshrl.u32 %v1459, 16
        %v1508 = vrot.slane %v1506, 4
        %v1509 = vshll.u32 %v1459, 16
        %v1511 = vrot.slane %v1509, 5
        %v1512 = vor.u32 %v1508, %v1511
        %v1513 = vrot.slane %v1512, 4
        %v1515 = vshll.u32 %v1460, 16
        %v1517 = vrot.slane %v1515, 5
        %v1518 = vsel %vm1169, %v1513, %v1517
        %v1519 = vshrl.u32 %v1460, 16
        %v1521 = vrot.slane %v1519, 4
        %v1522 = vor.u32 %v1521, %v1517
        %v1523 = vrot.slane %v1522, 4
        %v1525 = vshll.u32 %v1474, 16
        %v1527 = vrot.slane %v1525, 5
        %v1528 = vsel %vm1169, %v1523, %v1527
        %v1530 = vshrl.u32 %v1461, 16
        %v1532 = vrot.slane %v1530, 4
        %v1533 = vshll.u32 %v1461, 16
        %v1535 = vrot.slane %v1533, 5
        %v1536 = vor.u32 %v1532, %v1535
        %v1537 = vrot.slane %v1536, 4
        %v1539 = vshll.u32 %v1462, 16
        %v1541 = vrot.slane %v1539, 5
        %v1542 = vsel %vm1169, %v1537, %v1541
        %v1543 = vshrl.u32 %v1462, 16
        %v1545 = vrot.slane %v1543, 4
        %v1546 = vor.u32 %v1545, %v1541
        %v1547 = vrot.slane %v1546, 4
        %v1549 = vshll.u32 %v1475, 16
        %v1551 = vrot.slane %v1549, 5
        %v1552 = vsel %vm1169, %v1547, %v1551
        %v1554 = vshrl.u32 %v1463, 16
        %v1556 = vrot.slane %v1554, 4
        %v1557 = vshll.u32 %v1463, 16
        %v1559 = vrot.slane %v1557, 5
        %v1560 = vor.u32 %v1556, %v1559
        %v1561 = vrot.slane %v1560, 4
        %v1563 = vshll.u32 %v1464, 16
        %v1565 = vrot.slane %v1563, 5
        %v1566 = vsel %vm1169, %v1561, %v1565
        %v1567 = vshrl.u32 %v1464, 16
        %v1569 = vrot.slane %v1567, 4
        %v1570 = vor.u32 %v1569, %v1565
        %v1571 = vrot.slane %v1570, 4
        %v1573 = vshll.u32 %v1476, 16
        %v1575 = vrot.slane %v1573, 5
        %v1576 = vsel %vm1169, %v1571, %v1575
        %v1578 = vshrl.u32 %v1465, 16
        %v1580 = vrot.slane %v1578, 4
        %v1581 = vshll.u32 %v1465, 16
        %v1583 = vrot.slane %v1581, 5
        %v1584 = vor.u32 %v1580, %v1583
        %v1585 = vrot.slane %v1584, 4
        %v1587 = vshll.u32 %v1466, 16
        %v1589 = vrot.slane %v1587, 5
        %v1590 = vsel %vm1169, %v1585, %v1589
        %v1591 = vshrl.u32 %v1466, 16
        %v1593 = vrot.slane %v1591, 4
        %v1594 = vor.u32 %v1593, %v1589
        %v1595 = vrot.slane %v1594, 4
        %v1597 = vshll.u32 %v1477, 16
        %v1599 = vrot.slane %v1597, 5
        %v1600 = vsel %vm1169, %v1595, %v1599
        %v1602 = vshrl.u32 %v1467, 16
        %v1604 = vrot.slane %v1602, 4
        %v1605 = vshll.u32 %v1467, 16
        %v1607 = vrot.slane %v1605, 5
        %v1608 = vor.u32 %v1604, %v1607
        %v1609 = vrot.slane %v1608, 4
        %v1611 = vshll.u32 %v1468, 16
        %v1613 = vrot.slane %v1611, 5
        %v1614 = vsel %vm1169, %v1609, %v1613
        %v1615 = vshrl.u32 %v1468, 16
        %v1617 = vrot.slane %v1615, 4
        %v1618 = vor.u32 %v1617, %v1613
        %v1619 = vrot.slane %v1618, 4
        %v1621 = vshll.u32 %v1478, 16
        %v1623 = vrot.slane %v1621, 5
        %v1624 = vsel %vm1169, %v1619, %v1623
        %v1626 = vshrl.u32 %v1469, 16
        %v1628 = vrot.slane %v1626, 4
        %v1629 = vshll.u32 %v1469, 16
        %v1631 = vrot.slane %v1629, 5
        %v1632 = vor.u32 %v1628, %v1631
        %v1633 = vrot.slane %v1632, 4
        %v1635 = vshll.u32 %v1470, 16
        %v1637 = vrot.slane %v1635, 5
        %v1638 = vsel %vm1169, %v1633, %v1637
        %v1639 = vshrl.u32 %v1470, 16
        %v1641 = vrot.slane %v1639, 4
        %v1642 = vor.u32 %v1641, %v1637
        %v1643 = vrot.slane %v1642, 4
        %v1645 = vshll.u32 %v1479, 16
        %v1647 = vrot.slane %v1645, 5
        %v1648 = vsel %vm1169, %v1643, %v1647
        %v1650 = vshrl.u32 %v1471, 16
        %v1652 = vrot.slane %v1650, 4
        %v1653 = vshll.u32 %v1471, 16
        %v1655 = vrot.slane %v1653, 5
        %v1656 = vor.u32 %v1652, %v1655
        %v1657 = vrot.slane %v1656, 4
        %v1659 = vshll.u32 %v1472, 16
        %v1661 = vrot.slane %v1659, 5
        %v1662 = vsel %vm1169, %v1657, %v1661
        %v1663 = vshrl.u32 %v1472, 16
        %v1665 = vrot.slane %v1663, 4
        %v1666 = vor.u32 %v1665, %v1661
        %v1667 = vrot.slane %v1666, 4
        %v1669 = vshll.u32 %v1480, 16
        %v1671 = vrot.slane %v1669, 5
        %v1672 = vsel %vm1169, %v1667, %v1671
        %v1673 = vld [vmem:[%s1456] sm:$0xe]
        %v1674 = vld [vmem:[%s1456 + $0xc] sm:$0xe]
        %v1675 = vld [vmem:[%s1456 + $0x18] sm:$0xe]
        %v1676 = vld [vmem:[%s1456 + $0x24] sm:$0xe]
        %v1677 = vld [vmem:[%s1456 + $0x30] sm:$0xe]
        %v1678 = vld [vmem:[%s1456 + $0x3c] sm:$0xe]
        %v1679 = vld [vmem:[%s1456 + $0x48] sm:$0xe]
        %v1680 = vld [vmem:[%s1456 + $0x54] sm:$0xe]
        %v1705 = vrot.slane %v1673, 5
        %v1706 = vrot.slane %v1705, 4
        %v1707 = vrot.slane %v1458, 5
        %v1708 = vsel %vm1396, %v1706, %v1707
        %v1709 = vrot.slane %v1707, 4
        %v1710 = vrot.slane %v1473, 5
        %v1711 = vsel %vm1396, %v1709, %v1710
        %v1712 = vrot.slane %v1674, 5
        %v1713 = vrot.slane %v1712, 4
        %v1714 = vrot.slane %v1460, 5
        %v1715 = vsel %vm1396, %v1713, %v1714
        %v1716 = vrot.slane %v1714, 4
        %v1717 = vrot.slane %v1474, 5
        %v1718 = vsel %vm1396, %v1716, %v1717
        %v1719 = vrot.slane %v1675, 5
        %v1720 = vrot.slane %v1719, 4
        %v1721 = vrot.slane %v1462, 5
        %v1722 = vsel %vm1396, %v1720, %v1721
        %v1723 = vrot.slane %v1721, 4
        %v1724 = vrot.slane %v1475, 5
        %v1725 = vsel %vm1396, %v1723, %v1724
        %v1726 = vrot.slane %v1676, 5
        %v1727 = vrot.slane %v1726, 4
        %v1728 = vrot.slane %v1464, 5
        %v1729 = vsel %vm1396, %v1727, %v1728
        %v1730 = vrot.slane %v1728, 4
        %v1731 = vrot.slane %v1476, 5
        %v1732 = vsel %vm1396, %v1730, %v1731
        %v1733 = vrot.slane %v1677, 5
        %v1734 = vrot.slane %v1733, 4
        %v1735 = vrot.slane %v1466, 5
        %v1736 = vsel %vm1396, %v1734, %v1735
        %v1737 = vrot.slane %v1735, 4
        %v1738 = vrot.slane %v1477, 5
        %v1739 = vsel %vm1396, %v1737, %v1738
        %v1740 = vrot.slane %v1678, 5
        %v1741 = vrot.slane %v1740, 4
        %v1742 = vrot.slane %v1468, 5
        %v1743 = vsel %vm1396, %v1741, %v1742
        %v1744 = vrot.slane %v1742, 4
        %v1745 = vrot.slane %v1478, 5
        %v1746 = vsel %vm1396, %v1744, %v1745
        %v1747 = vrot.slane %v1679, 5
        %v1748 = vrot.slane %v1747, 4
        %v1749 = vrot.slane %v1470, 5
        %v1750 = vsel %vm1396, %v1748, %v1749
        %v1751 = vrot.slane %v1749, 4
        %v1752 = vrot.slane %v1479, 5
        %v1753 = vsel %vm1396, %v1751, %v1752
        %v1754 = vrot.slane %v1680, 5
        %v1755 = vrot.slane %v1754, 4
        %v1756 = vrot.slane %v1472, 5
        %v1757 = vsel %vm1396, %v1755, %v1756
        %v1758 = vrot.slane %v1756, 4
        %v1759 = vrot.slane %v1480, 5
        %v1760 = vsel %vm1396, %v1758, %v1759
        %s1761 = sadd.s32 %s1139, 2
        %s1762 = smul.u32 %s1761, 3
        %s1763 = smul.addr %s1762, 4
        %s1764 = scalar_lea.vmem [#allocation2], %s1763
        %v1765 = vld [vmem:[%s1764] sm:$0xf]
        %v1766 = vld [vmem:[%s1764 + $0x4] sm:$0xf]
        %v1767 = vld [vmem:[%s1764 + $0xc] sm:$0xf]
        %v1768 = vld [vmem:[%s1764 + $0x10] sm:$0xf]
        %v1769 = vld [vmem:[%s1764 + $0x18] sm:$0xf]
        %v1770 = vld [vmem:[%s1764 + $0x1c] sm:$0xf]
        %v1771 = vld [vmem:[%s1764 + $0x24] sm:$0xf]
        %v1772 = vld [vmem:[%s1764 + $0x28] sm:$0xf]
        %v1773 = vld [vmem:[%s1764 + $0x30] sm:$0xf]
        %v1774 = vld [vmem:[%s1764 + $0x34] sm:$0xf]
        %v1775 = vld [vmem:[%s1764 + $0x3c] sm:$0xf]
        %v1776 = vld [vmem:[%s1764 + $0x40] sm:$0xf]
        %v1777 = vld [vmem:[%s1764 + $0x48] sm:$0xf]
        %v1778 = vld [vmem:[%s1764 + $0x4c] sm:$0xf]
        %v1779 = vld [vmem:[%s1764 + $0x54] sm:$0xf]
        %v1780 = vld [vmem:[%s1764 + $0x58] sm:$0xf]
        %v1781 = vld [vmem:[%s1764 + $0x8] sm:$0x1]
        %v1782 = vld [vmem:[%s1764 + $0x14] sm:$0x1]
        %v1783 = vld [vmem:[%s1764 + $0x20] sm:$0x1]
        %v1784 = vld [vmem:[%s1764 + $0x2c] sm:$0x1]
        %v1785 = vld [vmem:[%s1764 + $0x38] sm:$0x1]
        %v1786 = vld [vmem:[%s1764 + $0x44] sm:$0x1]
        %v1787 = vld [vmem:[%s1764 + $0x50] sm:$0x1]
        %v1788 = vld [vmem:[%s1764 + $0x5c] sm:$0x1]
        %v1790 = vshrl.u32 %v1765, 16
        %v1792 = vrot.slane %v1790, 4
        %v1793 = vshll.u32 %v1765, 16
        %v1795 = vrot.slane %v1793, 5
        %v1796 = vor.u32 %v1792, %v1795
        %v1797 = vrot.slane %v1796, 4
        %v1799 = vshll.u32 %v1766, 16
        %v1801 = vrot.slane %v1799, 5
        %v1802 = vsel %vm1169, %v1797, %v1801
        %v1803 = vshrl.u32 %v1766, 16
        %v1805 = vrot.slane %v1803, 4
        %v1806 = vor.u32 %v1805, %v1801
        %v1807 = vrot.slane %v1806, 4
        %v1809 = vshll.u32 %v1781, 16
        %v1811 = vrot.slane %v1809, 5
        %v1812 = vsel %vm1169, %v1807, %v1811
        %v1814 = vshrl.u32 %v1767, 16
        %v1816 = vrot.slane %v1814, 4
        %v1817 = vshll.u32 %v1767, 16
        %v1819 = vrot.slane %v1817, 5
        %v1820 = vor.u32 %v1816, %v1819
        %v1821 = vrot.slane %v1820, 4
        %v1823 = vshll.u32 %v1768, 16
        %v1825 = vrot.slane %v1823, 5
        %v1826 = vsel %vm1169, %v1821, %v1825
        %v1827 = vshrl.u32 %v1768, 16
        %v1829 = vrot.slane %v1827, 4
        %v1830 = vor.u32 %v1829, %v1825
        %v1831 = vrot.slane %v1830, 4
        %v1833 = vshll.u32 %v1782, 16
        %v1835 = vrot.slane %v1833, 5
        %v1836 = vsel %vm1169, %v1831, %v1835
        %v1838 = vshrl.u32 %v1769, 16
        %v1840 = vrot.slane %v1838, 4
        %v1841 = vshll.u32 %v1769, 16
        %v1843 = vrot.slane %v1841, 5
        %v1844 = vor.u32 %v1840, %v1843
        %v1845 = vrot.slane %v1844, 4
        %v1847 = vshll.u32 %v1770, 16
        %v1849 = vrot.slane %v1847, 5
        %v1850 = vsel %vm1169, %v1845, %v1849
        %v1851 = vshrl.u32 %v1770, 16
        %v1853 = vrot.slane %v1851, 4
        %v1854 = vor.u32 %v1853, %v1849
        %v1855 = vrot.slane %v1854, 4
        %v1857 = vshll.u32 %v1783, 16
        %v1859 = vrot.slane %v1857, 5
        %v1860 = vsel %vm1169, %v1855, %v1859
        %v1862 = vshrl.u32 %v1771, 16
        %v1864 = vrot.slane %v1862, 4
        %v1865 = vshll.u32 %v1771, 16
        %v1867 = vrot.slane %v1865, 5
        %v1868 = vor.u32 %v1864, %v1867
        %v1869 = vrot.slane %v1868, 4
        %v1871 = vshll.u32 %v1772, 16
        %v1873 = vrot.slane %v1871, 5
        %v1874 = vsel %vm1169, %v1869, %v1873
        %v1875 = vshrl.u32 %v1772, 16
        %v1877 = vrot.slane %v1875, 4
        %v1878 = vor.u32 %v1877, %v1873
        %v1879 = vrot.slane %v1878, 4
        %v1881 = vshll.u32 %v1784, 16
        %v1883 = vrot.slane %v1881, 5
        %v1884 = vsel %vm1169, %v1879, %v1883
        %v1886 = vshrl.u32 %v1773, 16
        %v1888 = vrot.slane %v1886, 4
        %v1889 = vshll.u32 %v1773, 16
        %v1891 = vrot.slane %v1889, 5
        %v1892 = vor.u32 %v1888, %v1891
        %v1893 = vrot.slane %v1892, 4
        %v1895 = vshll.u32 %v1774, 16
        %v1897 = vrot.slane %v1895, 5
        %v1898 = vsel %vm1169, %v1893, %v1897
        %v1899 = vshrl.u32 %v1774, 16
        %v1901 = vrot.slane %v1899, 4
        %v1902 = vor.u32 %v1901, %v1897
        %v1903 = vrot.slane %v1902, 4
        %v1905 = vshll.u32 %v1785, 16
        %v1907 = vrot.slane %v1905, 5
        %v1908 = vsel %vm1169, %v1903, %v1907
        %v1910 = vshrl.u32 %v1775, 16
        %v1912 = vrot.slane %v1910, 4
        %v1913 = vshll.u32 %v1775, 16
        %v1915 = vrot.slane %v1913, 5
        %v1916 = vor.u32 %v1912, %v1915
        %v1917 = vrot.slane %v1916, 4
        %v1919 = vshll.u32 %v1776, 16
        %v1921 = vrot.slane %v1919, 5
        %v1922 = vsel %vm1169, %v1917, %v1921
        %v1923 = vshrl.u32 %v1776, 16
        %v1925 = vrot.slane %v1923, 4
        %v1926 = vor.u32 %v1925, %v1921
        %v1927 = vrot.slane %v1926, 4
        %v1929 = vshll.u32 %v1786, 16
        %v1931 = vrot.slane %v1929, 5
        %v1932 = vsel %vm1169, %v1927, %v1931
        %v1934 = vshrl.u32 %v1777, 16
        %v1936 = vrot.slane %v1934, 4
        %v1937 = vshll.u32 %v1777, 16
        %v1939 = vrot.slane %v1937, 5
        %v1940 = vor.u32 %v1936, %v1939
        %v1941 = vrot.slane %v1940, 4
        %v1943 = vshll.u32 %v1778, 16
        %v1945 = vrot.slane %v1943, 5
        %v1946 = vsel %vm1169, %v1941, %v1945
        %v1947 = vshrl.u32 %v1778, 16
        %v1949 = vrot.slane %v1947, 4
        %v1950 = vor.u32 %v1949, %v1945
        %v1951 = vrot.slane %v1950, 4
        %v1953 = vshll.u32 %v1787, 16
        %v1955 = vrot.slane %v1953, 5
        %v1956 = vsel %vm1169, %v1951, %v1955
        %v1958 = vshrl.u32 %v1779, 16
        %v1960 = vrot.slane %v1958, 4
        %v1961 = vshll.u32 %v1779, 16
        %v1963 = vrot.slane %v1961, 5
        %v1964 = vor.u32 %v1960, %v1963
        %v1965 = vrot.slane %v1964, 4
        %v1967 = vshll.u32 %v1780, 16
        %v1969 = vrot.slane %v1967, 5
        %v1970 = vsel %vm1169, %v1965, %v1969
        %v1971 = vshrl.u32 %v1780, 16
        %v1973 = vrot.slane %v1971, 4
        %v1974 = vor.u32 %v1973, %v1969
        %v1975 = vrot.slane %v1974, 4
        %v1977 = vshll.u32 %v1788, 16
        %v1979 = vrot.slane %v1977, 5
        %v1980 = vsel %vm1169, %v1975, %v1979
        %v1981 = vld [vmem:[%s1764] sm:$0xe]
        %v1982 = vld [vmem:[%s1764 + $0xc] sm:$0xe]
        %v1983 = vld [vmem:[%s1764 + $0x18] sm:$0xe]
        %v1984 = vld [vmem:[%s1764 + $0x24] sm:$0xe]
        %v1985 = vld [vmem:[%s1764 + $0x30] sm:$0xe]
        %v1986 = vld [vmem:[%s1764 + $0x3c] sm:$0xe]
        %v1987 = vld [vmem:[%s1764 + $0x48] sm:$0xe]
        %v1988 = vld [vmem:[%s1764 + $0x54] sm:$0xe]
        %v2013 = vrot.slane %v1981, 5
        %v2014 = vrot.slane %v2013, 4
        %v2015 = vrot.slane %v1766, 5
        %v2016 = vsel %vm1396, %v2014, %v2015
        %v2017 = vrot.slane %v2015, 4
        %v2018 = vrot.slane %v1781, 5
        %v2019 = vsel %vm1396, %v2017, %v2018
        %v2020 = vrot.slane %v1982, 5
        %v2021 = vrot.slane %v2020, 4
        %v2022 = vrot.slane %v1768, 5
        %v2023 = vsel %vm1396, %v2021, %v2022
        %v2024 = vrot.slane %v2022, 4
        %v2025 = vrot.slane %v1782, 5
        %v2026 = vsel %vm1396, %v2024, %v2025
        %v2027 = vrot.slane %v1983, 5
        %v2028 = vrot.slane %v2027, 4
        %v2029 = vrot.slane %v1770, 5
        %v2030 = vsel %vm1396, %v2028, %v2029
        %v2031 = vrot.slane %v2029, 4
        %v2032 = vrot.slane %v1783, 5
        %v2033 = vsel %vm1396, %v2031, %v2032
        %v2034 = vrot.slane %v1984, 5
        %v2035 = vrot.slane %v2034, 4
        %v2036 = vrot.slane %v1772, 5
        %v2037 = vsel %vm1396, %v2035, %v2036
        %v2038 = vrot.slane %v2036, 4
        %v2039 = vrot.slane %v1784, 5
        %v2040 = vsel %vm1396, %v2038, %v2039
        %v2041 = vrot.slane %v1985, 5
        %v2042 = vrot.slane %v2041, 4
        %v2043 = vrot.slane %v1774, 5
        %v2044 = vsel %vm1396, %v2042, %v2043
        %v2045 = vrot.slane %v2043, 4
        %v2046 = vrot.slane %v1785, 5
        %v2047 = vsel %vm1396, %v2045, %v2046
        %v2048 = vrot.slane %v1986, 5
        %v2049 = vrot.slane %v2048, 4
        %v2050 = vrot.slane %v1776, 5
        %v2051 = vsel %vm1396, %v2049, %v2050
        %v2052 = vrot.slane %v2050, 4
        %v2053 = vrot.slane %v1786, 5
        %v2054 = vsel %vm1396, %v2052, %v2053
        %v2055 = vrot.slane %v1987, 5
        %v2056 = vrot.slane %v2055, 4
        %v2057 = vrot.slane %v1778, 5
        %v2058 = vsel %vm1396, %v2056, %v2057
        %v2059 = vrot.slane %v2057, 4
        %v2060 = vrot.slane %v1787, 5
        %v2061 = vsel %vm1396, %v2059, %v2060
        %v2062 = vrot.slane %v1988, 5
        %v2063 = vrot.slane %v2062, 4
        %v2064 = vrot.slane %v1780, 5
        %v2065 = vsel %vm1396, %v2063, %v2064
        %v2066 = vrot.slane %v2064, 4
        %v2067 = vrot.slane %v1788, 5
        %v2068 = vsel %vm1396, %v2066, %v2067
        %v2077 = vunpack.c.l.b16 %v1143
        %v2078 = vunpack.c.l.b16 %v1144
        %v2079 = vunpack.c.l.b16 %v1145
        %v2080 = vunpack.c.l.b16 %v1146
        %v2081 = vunpack.c.l.b16 %v1147
        %v2082 = vunpack.c.l.b16 %v1148
        %v2083 = vunpack.c.l.b16 %v1149
        %v2084 = vunpack.c.l.b16 %v1150
        %v2085 = vunpack.c.l.b16 %v1151
        %v2086 = vunpack.c.l.b16 %v1152
        %v2087 = vunpack.c.l.b16 %v1153
        %v2088 = vunpack.c.l.b16 %v1154
        %v2089 = vunpack.c.l.b16 %v1155
        %v2090 = vunpack.c.l.b16 %v1156
        %v2091 = vunpack.c.l.b16 %v1157
        %v2092 = vunpack.c.l.b16 %v1158
        %v2093 = vpack.c.b16 %v2078, %v2077
        %v2094 = vpack.c.b16 %v2080, %v2079
        %v2095 = vpack.c.b16 %v2082, %v2081
        %v2096 = vpack.c.b16 %v2084, %v2083
        %v2097 = vpack.c.b16 %v2086, %v2085
        %v2098 = vpack.c.b16 %v2088, %v2087
        %v2099 = vpack.c.b16 %v2090, %v2089
        %v2100 = vpack.c.b16 %v2092, %v2091
        %v2101 = vunpack.c.l.b16 %v1183
        %v2102 = vunpack.c.l.b16 %v1193
        %v2103 = vunpack.c.l.b16 %v1207
        %v2104 = vunpack.c.l.b16 %v1217
        %v2105 = vunpack.c.l.b16 %v1231
        %v2106 = vunpack.c.l.b16 %v1241
        %v2107 = vunpack.c.l.b16 %v1255
        %v2108 = vunpack.c.l.b16 %v1265
        %v2109 = vunpack.c.l.b16 %v1279
        %v2110 = vunpack.c.l.b16 %v1289
        %v2111 = vunpack.c.l.b16 %v1303
        %v2112 = vunpack.c.l.b16 %v1313
        %v2113 = vunpack.c.l.b16 %v1327
        %v2114 = vunpack.c.l.b16 %v1337
        %v2115 = vunpack.c.l.b16 %v1351
        %v2116 = vunpack.c.l.b16 %v1361
        %v2117 = vpack.c.b16 %v2102, %v2101
        %v2118 = vpack.c.b16 %v2104, %v2103
        %v2119 = vpack.c.b16 %v2106, %v2105
        %v2120 = vpack.c.b16 %v2108, %v2107
        %v2121 = vpack.c.b16 %v2110, %v2109
        %v2122 = vpack.c.b16 %v2112, %v2111
        %v2123 = vpack.c.b16 %v2114, %v2113
        %v2124 = vpack.c.b16 %v2116, %v2115
        %2125 = vrot.lane.b32.xlu0 %v2117, 4
        %v2126 = vpop.permute.xlu0 %2125
        %2127 = vrot.lane.b32.xlu0 %v2118, 4
        %v2128 = vpop.permute.xlu0 %2127
        %2129 = vrot.lane.b32.xlu0 %v2119, 4
        %v2130 = vpop.permute.xlu0 %2129
        %2131 = vrot.lane.b32.xlu0 %v2120, 4
        %v2132 = vpop.permute.xlu0 %2131
        %2133 = vrot.lane.b32.xlu0 %v2121, 4
        %v2134 = vpop.permute.xlu0 %2133
        %2135 = vrot.lane.b32.xlu0 %v2122, 4
        %v2136 = vpop.permute.xlu0 %2135
        %2137 = vrot.lane.b32.xlu0 %v2123, 4
        %v2138 = vpop.permute.xlu0 %2137
        %2139 = vrot.lane.b32.xlu0 %v2124, 4
        %v2140 = vpop.permute.xlu0 %2139
        %v2141 = vunpack.c.l.b16 %v1400
        %v2142 = vunpack.c.l.b16 %v1403
        %v2143 = vunpack.c.l.b16 %v1407
        %v2144 = vunpack.c.l.b16 %v1410
        %v2145 = vunpack.c.l.b16 %v1414
        %v2146 = vunpack.c.l.b16 %v1417
        %v2147 = vunpack.c.l.b16 %v1421
        %v2148 = vunpack.c.l.b16 %v1424
        %v2149 = vunpack.c.l.b16 %v1428
        %v2150 = vunpack.c.l.b16 %v1431
        %v2151 = vunpack.c.l.b16 %v1435
        %v2152 = vunpack.c.l.b16 %v1438
        %v2153 = vunpack.c.l.b16 %v1442
        %v2154 = vunpack.c.l.b16 %v1445
        %v2155 = vunpack.c.l.b16 %v1449
        %v2156 = vunpack.c.l.b16 %v1452
        %v2157 = vpack.c.b16 %v2142, %v2141
        %v2158 = vpack.c.b16 %v2144, %v2143
        %v2159 = vpack.c.b16 %v2146, %v2145
        %v2160 = vpack.c.b16 %v2148, %v2147
        %v2161 = vpack.c.b16 %v2150, %v2149
        %v2162 = vpack.c.b16 %v2152, %v2151
        %v2163 = vpack.c.b16 %v2154, %v2153
        %v2164 = vpack.c.b16 %v2156, %v2155
        %2165 = vrot.lane.b32.xlu0 %v2157, 8
        %v2166 = vpop.permute.xlu0 %2165
        %2167 = vrot.lane.b32.xlu0 %v2158, 8
        %v2168 = vpop.permute.xlu0 %2167
        %2169 = vrot.lane.b32.xlu0 %v2159, 8
        %v2170 = vpop.permute.xlu0 %2169
        %2171 = vrot.lane.b32.xlu0 %v2160, 8
        %v2172 = vpop.permute.xlu0 %2171
        %2173 = vrot.lane.b32.xlu0 %v2161, 8
        %v2174 = vpop.permute.xlu0 %2173
        %2175 = vrot.lane.b32.xlu0 %v2162, 8
        %v2176 = vpop.permute.xlu0 %2175
        %2177 = vrot.lane.b32.xlu0 %v2163, 8
        %v2178 = vpop.permute.xlu0 %2177
        %2179 = vrot.lane.b32.xlu0 %v2164, 8
        %v2180 = vpop.permute.xlu0 %2179
        %v2189 = vunpack.c.l.b16 %v1457
        %v2190 = vunpack.c.l.b16 %v1458
        %v2191 = vunpack.c.l.b16 %v1459
        %v2192 = vunpack.c.l.b16 %v1460
        %v2193 = vunpack.c.l.b16 %v1461
        %v2194 = vunpack.c.l.b16 %v1462
        %v2195 = vunpack.c.l.b16 %v1463
        %v2196 = vunpack.c.l.b16 %v1464
        %v2197 = vunpack.c.l.b16 %v1465
        %v2198 = vunpack.c.l.b16 %v1466
        %v2199 = vunpack.c.l.b16 %v1467
        %v2200 = vunpack.c.l.b16 %v1468
        %v2201 = vunpack.c.l.b16 %v1469
        %v2202 = vunpack.c.l.b16 %v1470
        %v2203 = vunpack.c.l.b16 %v1471
        %v2204 = vunpack.c.l.b16 %v1472
        %v2205 = vpack.c.b16 %v2190, %v2189
        %v2206 = vpack.c.b16 %v2192, %v2191
        %v2207 = vpack.c.b16 %v2194, %v2193
        %v2208 = vpack.c.b16 %v2196, %v2195
        %v2209 = vpack.c.b16 %v2198, %v2197
        %v2210 = vpack.c.b16 %v2200, %v2199
        %v2211 = vpack.c.b16 %v2202, %v2201
        %v2212 = vpack.c.b16 %v2204, %v2203
        %2213 = vrot.lane.b32.xlu0 %v2205, 12
        %v2214 = vpop.permute.xlu0 %2213
        %2215 = vrot.lane.b32.xlu0 %v2206, 12
        %v2216 = vpop.permute.xlu0 %2215
        %2217 = vrot.lane.b32.xlu0 %v2207, 12
        %v2218 = vpop.permute.xlu0 %2217
        %2219 = vrot.lane.b32.xlu0 %v2208, 12
        %v2220 = vpop.permute.xlu0 %2219
        %2221 = vrot.lane.b32.xlu0 %v2209, 12
        %v2222 = vpop.permute.xlu0 %2221
        %2223 = vrot.lane.b32.xlu0 %v2210, 12
        %v2224 = vpop.permute.xlu0 %2223
        %2225 = vrot.lane.b32.xlu0 %v2211, 12
        %v2226 = vpop.permute.xlu0 %2225
        %2227 = vrot.lane.b32.xlu0 %v2212, 12
        %v2228 = vpop.permute.xlu0 %2227
        %v2229 = vunpack.c.l.b16 %v1494
        %v2230 = vunpack.c.l.b16 %v1504
        %v2231 = vunpack.c.l.b16 %v1518
        %v2232 = vunpack.c.l.b16 %v1528
        %v2233 = vunpack.c.l.b16 %v1542
        %v2234 = vunpack.c.l.b16 %v1552
        %v2235 = vunpack.c.l.b16 %v1566
        %v2236 = vunpack.c.l.b16 %v1576
        %v2237 = vunpack.c.l.b16 %v1590
        %v2238 = vunpack.c.l.b16 %v1600
        %v2239 = vunpack.c.l.b16 %v1614
        %v2240 = vunpack.c.l.b16 %v1624
        %v2241 = vunpack.c.l.b16 %v1638
        %v2242 = vunpack.c.l.b16 %v1648
        %v2243 = vunpack.c.l.b16 %v1662
        %v2244 = vunpack.c.l.b16 %v1672
        %v2245 = vpack.c.b16 %v2230, %v2229
        %v2246 = vpack.c.b16 %v2232, %v2231
        %v2247 = vpack.c.b16 %v2234, %v2233
        %v2248 = vpack.c.b16 %v2236, %v2235
        %v2249 = vpack.c.b16 %v2238, %v2237
        %v2250 = vpack.c.b16 %v2240, %v2239
        %v2251 = vpack.c.b16 %v2242, %v2241
        %v2252 = vpack.c.b16 %v2244, %v2243
        %2253 = vrot.lane.b32.xlu0 %v2245, 16
        %v2254 = vpop.permute.xlu0 %2253
        %2255 = vrot.lane.b32.xlu0 %v2246, 16
        %v2256 = vpop.permute.xlu0 %2255
        %2257 = vrot.lane.b32.xlu0 %v2247, 16
        %v2258 = vpop.permute.xlu0 %2257
        %2259 = vrot.lane.b32.xlu0 %v2248, 16
        %v2260 = vpop.permute.xlu0 %2259
        %2261 = vrot.lane.b32.xlu0 %v2249, 16
        %v2262 = vpop.permute.xlu0 %2261
        %2263 = vrot.lane.b32.xlu0 %v2250, 16
        %v2264 = vpop.permute.xlu0 %2263
        %2265 = vrot.lane.b32.xlu0 %v2251, 16
        %v2266 = vpop.permute.xlu0 %2265
        %2267 = vrot.lane.b32.xlu0 %v2252, 16
        %v2268 = vpop.permute.xlu0 %2267
        %v2269 = vunpack.c.l.b16 %v1708
        %v2270 = vunpack.c.l.b16 %v1711
        %v2271 = vunpack.c.l.b16 %v1715
        %v2272 = vunpack.c.l.b16 %v1718
        %v2273 = vunpack.c.l.b16 %v1722
        %v2274 = vunpack.c.l.b16 %v1725
        %v2275 = vunpack.c.l.b16 %v1729
        %v2276 = vunpack.c.l.b16 %v1732
        %v2277 = vunpack.c.l.b16 %v1736
        %v2278 = vunpack.c.l.b16 %v1739
        %v2279 = vunpack.c.l.b16 %v1743
        %v2280 = vunpack.c.l.b16 %v1746
        %v2281 = vunpack.c.l.b16 %v1750
        %v2282 = vunpack.c.l.b16 %v1753
        %v2283 = vunpack.c.l.b16 %v1757
        %v2284 = vunpack.c.l.b16 %v1760
        %v2285 = vpack.c.b16 %v2270, %v2269
        %v2286 = vpack.c.b16 %v2272, %v2271
        %v2287 = vpack.c.b16 %v2274, %v2273
        %v2288 = vpack.c.b16 %v2276, %v2275
        %v2289 = vpack.c.b16 %v2278, %v2277
        %v2290 = vpack.c.b16 %v2280, %v2279
        %v2291 = vpack.c.b16 %v2282, %v2281
        %v2292 = vpack.c.b16 %v2284, %v2283
        %2293 = vrot.lane.b32.xlu0 %v2285, 20
        %v2294 = vpop.permute.xlu0 %2293
        %2295 = vrot.lane.b32.xlu0 %v2286, 20
        %v2296 = vpop.permute.xlu0 %2295
        %2297 = vrot.lane.b32.xlu0 %v2287, 20
        %v2298 = vpop.permute.xlu0 %2297
        %2299 = vrot.lane.b32.xlu0 %v2288, 20
        %v2300 = vpop.permute.xlu0 %2299
        %2301 = vrot.lane.b32.xlu0 %v2289, 20
        %v2302 = vpop.permute.xlu0 %2301
        %2303 = vrot.lane.b32.xlu0 %v2290, 20
        %v2304 = vpop.permute.xlu0 %2303
        %2305 = vrot.lane.b32.xlu0 %v2291, 20
        %v2306 = vpop.permute.xlu0 %2305
        %2307 = vrot.lane.b32.xlu0 %v2292, 20
        %v2308 = vpop.permute.xlu0 %2307
        %v2317 = vunpack.c.l.b16 %v1765
        %v2318 = vunpack.c.l.b16 %v1766
        %v2319 = vunpack.c.l.b16 %v1767
        %v2320 = vunpack.c.l.b16 %v1768
        %v2321 = vunpack.c.l.b16 %v1769
        %v2322 = vunpack.c.l.b16 %v1770
        %v2323 = vunpack.c.l.b16 %v1771
        %v2324 = vunpack.c.l.b16 %v1772
        %v2325 = vunpack.c.l.b16 %v1773
        %v2326 = vunpack.c.l.b16 %v1774
        %v2327 = vunpack.c.l.b16 %v1775
        %v2328 = vunpack.c.l.b16 %v1776
        %v2329 = vunpack.c.l.b16 %v1777
        %v2330 = vunpack.c.l.b16 %v1778
        %v2331 = vunpack.c.l.b16 %v1779
        %v2332 = vunpack.c.l.b16 %v1780
        %v2333 = vpack.c.b16 %v2318, %v2317
        %v2334 = vpack.c.b16 %v2320, %v2319
        %v2335 = vpack.c.b16 %v2322, %v2321
        %v2336 = vpack.c.b16 %v2324, %v2323
        %v2337 = vpack.c.b16 %v2326, %v2325
        %v2338 = vpack.c.b16 %v2328, %v2327
        %v2339 = vpack.c.b16 %v2330, %v2329
        %v2340 = vpack.c.b16 %v2332, %v2331
        %2341 = vrot.lane.b32.xlu0 %v2333, 24
        %v2342 = vpop.permute.xlu0 %2341
        %2343 = vrot.lane.b32.xlu0 %v2334, 24
        %v2344 = vpop.permute.xlu0 %2343
        %2345 = vrot.lane.b32.xlu0 %v2335, 24
        %v2346 = vpop.permute.xlu0 %2345
        %2347 = vrot.lane.b32.xlu0 %v2336, 24
        %v2348 = vpop.permute.xlu0 %2347
        %2349 = vrot.lane.b32.xlu0 %v2337, 24
        %v2350 = vpop.permute.xlu0 %2349
        %2351 = vrot.lane.b32.xlu0 %v2338, 24
        %v2352 = vpop.permute.xlu0 %2351
        %2353 = vrot.lane.b32.xlu0 %v2339, 24
        %v2354 = vpop.permute.xlu0 %2353
        %2355 = vrot.lane.b32.xlu0 %v2340, 24
        %v2356 = vpop.permute.xlu0 %2355
        %v2357 = vunpack.c.l.b16 %v1802
        %v2358 = vunpack.c.l.b16 %v1812
        %v2359 = vunpack.c.l.b16 %v1826
        %v2360 = vunpack.c.l.b16 %v1836
        %v2361 = vunpack.c.l.b16 %v1850
        %v2362 = vunpack.c.l.b16 %v1860
        %v2363 = vunpack.c.l.b16 %v1874
        %v2364 = vunpack.c.l.b16 %v1884
        %v2365 = vunpack.c.l.b16 %v1898
        %v2366 = vunpack.c.l.b16 %v1908
        %v2367 = vunpack.c.l.b16 %v1922
        %v2368 = vunpack.c.l.b16 %v1932
        %v2369 = vunpack.c.l.b16 %v1946
        %v2370 = vunpack.c.l.b16 %v1956
        %v2371 = vunpack.c.l.b16 %v1970
        %v2372 = vunpack.c.l.b16 %v1980
        %v2373 = vpack.c.b16 %v2358, %v2357
        %v2374 = vpack.c.b16 %v2360, %v2359
        %v2375 = vpack.c.b16 %v2362, %v2361
        %v2376 = vpack.c.b16 %v2364, %v2363
        %v2377 = vpack.c.b16 %v2366, %v2365
        %v2378 = vpack.c.b16 %v2368, %v2367
        %v2379 = vpack.c.b16 %v2370, %v2369
        %v2380 = vpack.c.b16 %v2372, %v2371
        %2381 = vrot.lane.b32.xlu0 %v2373, 28
        %v2382 = vpop.permute.xlu0 %2381
        %2383 = vrot.lane.b32.xlu0 %v2374, 28
        %v2384 = vpop.permute.xlu0 %2383
        %2385 = vrot.lane.b32.xlu0 %v2375, 28
        %v2386 = vpop.permute.xlu0 %2385
        %2387 = vrot.lane.b32.xlu0 %v2376, 28
        %v2388 = vpop.permute.xlu0 %2387
        %2389 = vrot.lane.b32.xlu0 %v2377, 28
        %v2390 = vpop.permute.xlu0 %2389
        %2391 = vrot.lane.b32.xlu0 %v2378, 28
        %v2392 = vpop.permute.xlu0 %2391
        %2393 = vrot.lane.b32.xlu0 %v2379, 28
        %v2394 = vpop.permute.xlu0 %2393
        %2395 = vrot.lane.b32.xlu0 %v2380, 28
        %v2396 = vpop.permute.xlu0 %2395
        %v2397 = vunpack.c.l.b16 %v2016
        %v2398 = vunpack.c.l.b16 %v2019
        %v2399 = vunpack.c.l.b16 %v2023
        %v2400 = vunpack.c.l.b16 %v2026
        %v2401 = vunpack.c.l.b16 %v2030
        %v2402 = vunpack.c.l.b16 %v2033
        %v2403 = vunpack.c.l.b16 %v2037
        %v2404 = vunpack.c.l.b16 %v2040
        %v2405 = vunpack.c.l.b16 %v2044
        %v2406 = vunpack.c.l.b16 %v2047
        %v2407 = vunpack.c.l.b16 %v2051
        %v2408 = vunpack.c.l.b16 %v2054
        %v2409 = vunpack.c.l.b16 %v2058
        %v2410 = vunpack.c.l.b16 %v2061
        %v2411 = vunpack.c.l.b16 %v2065
        %v2412 = vunpack.c.l.b16 %v2068
        %v2413 = vpack.c.b16 %v2398, %v2397
        %v2414 = vpack.c.b16 %v2400, %v2399
        %v2415 = vpack.c.b16 %v2402, %v2401
        %v2416 = vpack.c.b16 %v2404, %v2403
        %v2417 = vpack.c.b16 %v2406, %v2405
        %v2418 = vpack.c.b16 %v2408, %v2407
        %v2419 = vpack.c.b16 %v2410, %v2409
        %v2420 = vpack.c.b16 %v2412, %v2411
        %2421 = vrot.lane.b32.xlu0 %v2413, 32
        %v2422 = vpop.permute.xlu0 %2421
        %2423 = vrot.lane.b32.xlu0 %v2414, 32
        %v2424 = vpop.permute.xlu0 %2423
        %2425 = vrot.lane.b32.xlu0 %v2415, 32
        %v2426 = vpop.permute.xlu0 %2425
        %2427 = vrot.lane.b32.xlu0 %v2416, 32
        %v2428 = vpop.permute.xlu0 %2427
        %2429 = vrot.lane.b32.xlu0 %v2417, 32
        %v2430 = vpop.permute.xlu0 %2429
        %2431 = vrot.lane.b32.xlu0 %v2418, 32
        %v2432 = vpop.permute.xlu0 %2431
        %2433 = vrot.lane.b32.xlu0 %v2419, 32
        %v2434 = vpop.permute.xlu0 %2433
        %2435 = vrot.lane.b32.xlu0 %v2420, 32
        %v2436 = vpop.permute.xlu0 %2435
        %vm2437 = vcmask 31744
        %v2440 = vsel %vm2437, %v2093, %v2126
        %v2443 = vsel %vm2437, %v2094, %v2128
        %v2446 = vsel %vm2437, %v2095, %v2130
        %v2449 = vsel %vm2437, %v2096, %v2132
        %v2452 = vsel %vm2437, %v2097, %v2134
        %v2455 = vsel %vm2437, %v2098, %v2136
        %v2458 = vsel %vm2437, %v2099, %v2138
        %v2461 = vsel %vm2437, %v2100, %v2140
        %vm2462 = vcmask 64512
        %v2464 = vsel %vm2462, %v2440, %v2166
        %v2466 = vsel %vm2462, %v2443, %v2168
        %v2468 = vsel %vm2462, %v2446, %v2170
        %v2470 = vsel %vm2462, %v2449, %v2172
        %v2472 = vsel %vm2462, %v2452, %v2174
        %v2474 = vsel %vm2462, %v2455, %v2176
        %v2476 = vsel %vm2462, %v2458, %v2178
        %v2478 = vsel %vm2462, %v2461, %v2180
        %vm2479 = vcmask 97280
        %v2481 = vsel %vm2479, %v2464, %v2214
        %v2483 = vsel %vm2479, %v2466, %v2216
        %v2485 = vsel %vm2479, %v2468, %v2218
        %v2487 = vsel %vm2479, %v2470, %v2220
        %v2489 = vsel %vm2479, %v2472, %v2222
        %v2491 = vsel %vm2479, %v2474, %v2224
        %v2493 = vsel %vm2479, %v2476, %v2226
        %v2495 = vsel %vm2479, %v2478, %v2228
        %vm2496 = vcmask 130048
        %v2498 = vsel %vm2496, %v2481, %v2254
        %v2500 = vsel %vm2496, %v2483, %v2256
        %v2502 = vsel %vm2496, %v2485, %v2258
        %v2504 = vsel %vm2496, %v2487, %v2260
        %v2506 = vsel %vm2496, %v2489, %v2262
        %v2508 = vsel %vm2496, %v2491, %v2264
        %v2510 = vsel %vm2496, %v2493, %v2266
        %v2512 = vsel %vm2496, %v2495, %v2268
        %vm2513 = vcmask 162816
        %v2515 = vsel %vm2513, %v2498, %v2294
        %v2517 = vsel %vm2513, %v2500, %v2296
        %v2519 = vsel %vm2513, %v2502, %v2298
        %v2521 = vsel %vm2513, %v2504, %v2300
        %v2523 = vsel %vm2513, %v2506, %v2302
        %v2525 = vsel %vm2513, %v2508, %v2304
        %v2527 = vsel %vm2513, %v2510, %v2306
        %v2529 = vsel %vm2513, %v2512, %v2308
        %vm2530 = vcmask 195584
        %v2532 = vsel %vm2530, %v2515, %v2342
        %v2534 = vsel %vm2530, %v2517, %v2344
        %v2536 = vsel %vm2530, %v2519, %v2346
        %v2538 = vsel %vm2530, %v2521, %v2348
        %v2540 = vsel %vm2530, %v2523, %v2350
        %v2542 = vsel %vm2530, %v2525, %v2352
        %v2544 = vsel %vm2530, %v2527, %v2354
        %v2546 = vsel %vm2530, %v2529, %v2356
        %vm2547 = vcmask 228352
        %v2549 = vsel %vm2547, %v2532, %v2382
        %v2551 = vsel %vm2547, %v2534, %v2384
        %v2553 = vsel %vm2547, %v2536, %v2386
        %v2555 = vsel %vm2547, %v2538, %v2388
        %v2557 = vsel %vm2547, %v2540, %v2390
        %v2559 = vsel %vm2547, %v2542, %v2392
        %v2561 = vsel %vm2547, %v2544, %v2394
        %v2563 = vsel %vm2547, %v2546, %v2396
        %vm2564 = vcmask 261120
        %v2566 = vsel %vm2564, %v2549, %v2422
        %v2568 = vsel %vm2564, %v2551, %v2424
        %v2570 = vsel %vm2564, %v2553, %v2426
        %v2572 = vsel %vm2564, %v2555, %v2428
        %v2574 = vsel %vm2564, %v2557, %v2430
        %v2576 = vsel %vm2564, %v2559, %v2432
        %v2578 = vsel %vm2564, %v2561, %v2434
        %v2580 = vsel %vm2564, %v2563, %v2436
        %v2581 = vld [vmem:[%s1] sm:$0xf]
        %v2582 = vld [vmem:[%s1 + $0x4] sm:$0xf]
        %v2583 = vld [vmem:[%s1 + $0x8] sm:$0xf]
        %v2584 = vld [vmem:[%s1 + $0xc] sm:$0xf]
        %v2585 = vld [vmem:[%s1 + $0x10] sm:$0x3]
        %v2591 = vunpack.c.l.b16 %v2581
        %v2592 = vunpack.c.l.b16 %v2582
        %v2593 = vunpack.c.l.b16 %v2583
        %v2594 = vunpack.c.l.b16 %v2584
        %v2595 = vunpack.c.l.b16 %v2585
        %v2596 = vpack.c.b16 %v2592, %v2591
        %v2597 = vpack.c.b16 %v2594, %v2593
        %v2598 = vpack.c.b16 %v2595, %v2595
        %vm2601 = vcmask 293888
        %v2602 = vsel %vm2601, %v2566, 0
        %v2604 = vsel %vm2601, %v2568, 0
        %v2606 = vsel %vm2601, %v2570, 0
        %v2608 = vsel %vm2601, %v2572, 0
        %v2610 = vsel %vm2601, %v2574, 0
        %v2612 = vsel %vm2601, %v2576, 0
        %v2614 = vsel %vm2601, %v2578, 0
        %v2616 = vsel %vm2601, %v2580, 0
        %vm2618 = vcmask 1041408
        %v2620 = vsel %vm2618, %v2598, 0
        %2622 = vmatprep.subr.bf16.mxu0 0
        %2623 = vmatpush1.bf16.msra.mxu0 %v2596
        %2624 = vmatprep.subr.bf16.mxu0 0
        %2625 = vmatpush1.bf16.msra.mxu0 %v2597
        %2626 = vmatprep.subr.bf16.mxu0 0
        %2627 = vmatpush1.bf16.msra.mxu0 %v2620
        %2628 = vmatprep.subr.bf16.mxu0 0
        %2629 = vmatpush1.bf16.msra.mxu0 0
        %2630 = vmatprep.subr.bf16.mxu0 0
        %2631 = vmatpush1.bf16.msra.mxu0 0
        %2632 = vmatprep.subr.bf16.mxu0 0
        %2633 = vmatpush1.bf16.msra.mxu0 0
        %2634 = vmatprep.subr.bf16.mxu0 0
        %2635 = vmatpush1.bf16.msra.mxu0 0
        %2636 = vmatprep.subr.bf16.mxu0 0
        %2637 = vmatpush1.bf16.msra.mxu0 0
        %2638 = vmatprep.subr.bf16.mxu0 0
        %2639 = vmatpush1.bf16.msra.mxu0 0
        %2640 = vmatprep.subr.bf16.mxu0 0
        %2641 = vmatpush1.bf16.msra.mxu0 0
        %2642 = vmatprep.subr.bf16.mxu0 0
        %2643 = vmatpush1.bf16.msra.mxu0 0
        %2644 = vmatprep.subr.bf16.mxu0 0
        %2645 = vmatpush1.bf16.msra.mxu0 0
        %2646 = vmatprep.subr.bf16.mxu0 0
        %2647 = vmatpush1.bf16.msra.mxu0 0
        %2648 = vmatprep.subr.bf16.mxu0 0
        %2649 = vmatpush1.bf16.msra.mxu0 0
        %2650 = vmatprep.subr.bf16.mxu0 0
        %2651 = vmatpush1.bf16.msra.mxu0 0
        %2652 = vmatprep.subr.bf16.mxu0 0
        %2653 = vmatpush1.bf16.msra.mxu0 0
        %2654 = vmatprep.mubr.bf16.mxu0 0
        %2655 = vmatmul.mubr.bf16.gmra.mrb[0].mxu0 %v2602
        %v2656 = vpop.f32.mrb[0].mxu0
        %v2657 = vadd.f32 0.0, %v2656
        %v2658 = vpop.f32.mrb[0].mxu0
        %v2659 = vpop.f32.mrb[0].mxu0
        %v2660 = vadd.f32 0.0, %v2659
        %v2661 = vpop.f32.mrb[0].mxu0
        %2662 = vmatprep.mubr.bf16.mxu0 0
        %2663 = vmatmul.mubr.bf16.gmra.mrb[0].mxu0 %v2604
        %v2664 = vpop.f32.mrb[0].mxu0
        %v2665 = vadd.f32 0.0, %v2664
        %v2666 = vpop.f32.mrb[0].mxu0
        %v2667 = vpop.f32.mrb[0].mxu0
        %v2668 = vadd.f32 0.0, %v2667
        %v2669 = vpop.f32.mrb[0].mxu0
        %2670 = vmatprep.mubr.bf16.mxu0 0
        %2671 = vmatmul.mubr.bf16.gmra.mrb[0].mxu0 %v2606
        %v2672 = vpop.f32.mrb[0].mxu0
        %v2673 = vadd.f32 0.0, %v2672
        %v2674 = vpop.f32.mrb[0].mxu0
        %v2675 = vpop.f32.mrb[0].mxu0
        %v2676 = vadd.f32 0.0, %v2675
        %v2677 = vpop.f32.mrb[0].mxu0
        %2678 = vmatprep.mubr.bf16.mxu0 0
        %2679 = vmatmul.mubr.bf16.gmra.mrb[0].mxu0 %v2608
        %v2680 = vpop.f32.mrb[0].mxu0
        %v2681 = vadd.f32 0.0, %v2680
        %v2682 = vpop.f32.mrb[0].mxu0
        %v2683 = vpop.f32.mrb[0].mxu0
        %v2684 = vadd.f32 0.0, %v2683
        %v2685 = vpop.f32.mrb[0].mxu0
        %2686 = vmatprep.mubr.bf16.mxu0 0
        %2687 = vmatmul.mubr.bf16.gmra.mrb[0].mxu0 %v2610
        %v2688 = vpop.f32.mrb[0].mxu0
        %v2689 = vadd.f32 0.0, %v2688
        %v2690 = vpop.f32.mrb[0].mxu0
        %v2691 = vpop.f32.mrb[0].mxu0
        %v2692 = vadd.f32 0.0, %v2691
        %v2693 = vpop.f32.mrb[0].mxu0
        %2694 = vmatprep.mubr.bf16.mxu0 0
        %2695 = vmatmul.mubr.bf16.gmra.mrb[0].mxu0 %v2612
        %v2696 = vpop.f32.mrb[0].mxu0
        %v2697 = vadd.f32 0.0, %v2696
        %v2698 = vpop.f32.mrb[0].mxu0
        %v2699 = vpop.f32.mrb[0].mxu0
        %v2700 = vadd.f32 0.0, %v2699
        %v2701 = vpop.f32.mrb[0].mxu0
        %2702 = vmatprep.mubr.bf16.mxu0 0
        %2703 = vmatmul.mubr.bf16.gmra.mrb[0].mxu0 %v2614
        %v2704 = vpop.f32.mrb[0].mxu0
        %v2705 = vadd.f32 0.0, %v2704
        %v2706 = vpop.f32.mrb[0].mxu0
        %v2707 = vpop.f32.mrb[0].mxu0
        %v2708 = vadd.f32 0.0, %v2707
        %v2709 = vpop.f32.mrb[0].mxu0
        %2710 = vmatprep.mubr.bf16.mxu0 0
        %2711 = vmatmul.mubr.bf16.gmra.mrb[0].mxu0 %v2616
        %v2712 = vpop.f32.mrb[0].mxu0
        %v2713 = vadd.f32 0.0, %v2712
        %v2714 = vpop.f32.mrb[0].mxu0
        %v2715 = vpop.f32.mrb[0].mxu0
        %v2716 = vadd.f32 0.0, %v2715
        %v2717 = vpop.f32.mrb[0].mxu0
        %2718 = vdwg.mxu0
        %v2719 = vpack.c.bf16 %v2660, %v2657
        %v2720 = vpack.c.bf16 %v2668, %v2665
        %v2721 = vpack.c.bf16 %v2676, %v2673
        %v2722 = vpack.c.bf16 %v2684, %v2681
        %v2723 = vpack.c.bf16 %v2692, %v2689
        %v2724 = vpack.c.bf16 %v2700, %v2697
        %v2725 = vpack.c.bf16 %v2708, %v2705
        %v2726 = vpack.c.bf16 %v2716, %v2713
        %v2735 = vunpack.c.l.b16 %v2719
        %v2736 = vunpack.c.h.b16 %v2719
        %v2737 = vunpack.c.l.b16 %v2720
        %v2738 = vunpack.c.h.b16 %v2720
        %v2739 = vunpack.c.l.b16 %v2721
        %v2740 = vunpack.c.h.b16 %v2721
        %v2741 = vunpack.c.l.b16 %v2722
        %v2742 = vunpack.c.h.b16 %v2722
        %v2743 = vunpack.c.l.b16 %v2723
        %v2744 = vunpack.c.h.b16 %v2723
        %v2745 = vunpack.c.l.b16 %v2724
        %v2746 = vunpack.c.h.b16 %v2724
        %v2747 = vunpack.c.l.b16 %v2725
        %v2748 = vunpack.c.h.b16 %v2725
        %v2749 = vunpack.c.l.b16 %v2726
        %v2750 = vunpack.c.h.b16 %v2726
        %v2751 = vpack.c.b16 %v2735, %v2735
        %v2752 = vpack.c.b16 %v2736, %v2736
        %v2753 = vpack.c.b16 %v2737, %v2737
        %v2754 = vpack.c.b16 %v2738, %v2738
        %v2755 = vpack.c.b16 %v2739, %v2739
        %v2756 = vpack.c.b16 %v2740, %v2740
        %v2757 = vpack.c.b16 %v2741, %v2741
        %v2758 = vpack.c.b16 %v2742, %v2742
        %v2759 = vpack.c.b16 %v2743, %v2743
        %v2760 = vpack.c.b16 %v2744, %v2744
        %v2761 = vpack.c.b16 %v2745, %v2745
        %v2762 = vpack.c.b16 %v2746, %v2746
        %v2763 = vpack.c.b16 %v2747, %v2747
        %v2764 = vpack.c.b16 %v2748, %v2748
        %v2765 = vpack.c.b16 %v2749, %v2749
        %v2766 = vpack.c.b16 %v2750, %v2750
        %s2783 = smul.u32 %s1139, 2
        %s2784 = smul.addr %s2783, 4
        %s2785 = scalar_lea.vmem %s290, %s2784
        %2786 = vst.msk [vmem:[%s2785] sm:$0xf] %vm538, %v2751
        %2787 = vst.msk [vmem:[%s2785 + $0x4] sm:$0xf] %vm538, %v2752
        %2788 = vst.msk [vmem:[%s2785 + $0x8] sm:$0xf] %vm538, %v2753
        %2789 = vst.msk [vmem:[%s2785 + $0xc] sm:$0xf] %vm538, %v2754
        %2790 = vst.msk [vmem:[%s2785 + $0x10] sm:$0xf] %vm538, %v2755
        %2791 = vst.msk [vmem:[%s2785 + $0x14] sm:$0xf] %vm538, %v2756
        %2792 = vst.msk [vmem:[%s2785 + $0x18] sm:$0xf] %vm538, %v2757
        %2793 = vst.msk [vmem:[%s2785 + $0x1c] sm:$0xf] %vm538, %v2758
        %2794 = vst.msk [vmem:[%s2785 + $0x20] sm:$0xf] %vm538, %v2759
        %2795 = vst.msk [vmem:[%s2785 + $0x24] sm:$0xf] %vm538, %v2760
        %2796 = vst.msk [vmem:[%s2785 + $0x28] sm:$0xf] %vm538, %v2761
        %2797 = vst.msk [vmem:[%s2785 + $0x2c] sm:$0xf] %vm538, %v2762
        %2798 = vst.msk [vmem:[%s2785 + $0x30] sm:$0xf] %vm538, %v2763
        %2799 = vst.msk [vmem:[%s2785 + $0x34] sm:$0xf] %vm538, %v2764
        %2800 = vst.msk [vmem:[%s2785 + $0x38] sm:$0xf] %vm538, %v2765
        %2801 = vst.msk [vmem:[%s2785 + $0x3c] sm:$0xf] %vm538, %v2766
        %v2802 = vsel %vm2437, %v2657, 0.0
        %v2803 = vsel %vm2437, %v2660, 0.0
        %v2804 = vadd.f32 %v2802, %v2803
        %v2805 = vsel %vm2437, %v2665, 0.0
        %v2806 = vadd.f32 %v2804, %v2805
        %v2807 = vsel %vm2437, %v2668, 0.0
        %v2808 = vadd.f32 %v2806, %v2807
        %v2809 = vsel %vm2437, %v2673, 0.0
        %v2810 = vadd.f32 %v2808, %v2809
        %v2811 = vsel %vm2437, %v2676, 0.0
        %v2812 = vadd.f32 %v2810, %v2811
        %v2813 = vsel %vm2437, %v2681, 0.0
        %v2814 = vadd.f32 %v2812, %v2813
        %v2815 = vsel %vm2437, %v2684, 0.0
        %v2816 = vadd.f32 %v2814, %v2815
        %v2817 = vsel %vm2437, %v2689, 0.0
        %v2818 = vadd.f32 %v2816, %v2817
        %v2819 = vsel %vm2437, %v2692, 0.0
        %v2820 = vadd.f32 %v2818, %v2819
        %v2821 = vsel %vm2437, %v2697, 0.0
        %v2822 = vadd.f32 %v2820, %v2821
        %v2823 = vsel %vm2437, %v2700, 0.0
        %v2824 = vadd.f32 %v2822, %v2823
        %v2825 = vsel %vm2437, %v2705, 0.0
        %v2826 = vadd.f32 %v2824, %v2825
        %v2827 = vsel %vm2437, %v2708, 0.0
        %v2828 = vadd.f32 %v2826, %v2827
        %v2829 = vsel %vm2437, %v2713, 0.0
        %v2830 = vadd.f32 %v2828, %v2829
        %v2831 = vsel %vm2437, %v2716, 0.0
        %v2832 = vadd.f32 %v2830, %v2831
        %v2833 = vrot.slane %v2832, 4
        %v2834 = vadd.f32 %v2832, %v2833
        %v2835 = vrot.slane %v2834, 2
        %v2836 = vadd.f32 %v2834, %v2835
        %v2837 = vrot.slane %v2836, 1
        %v2838 = vadd.f32 %v2836, %v2837
        %v2839 = vadd.f32 %v1137, %v2838
        %v2840 = vmul.f32 %v2657, %v2657
        %v2841 = vmul.f32 %v2660, %v2660
        %v2842 = vmul.f32 %v2665, %v2665
        %v2843 = vmul.f32 %v2668, %v2668
        %v2844 = vmul.f32 %v2673, %v2673
        %v2845 = vmul.f32 %v2676, %v2676
        %v2846 = vmul.f32 %v2681, %v2681
        %v2847 = vmul.f32 %v2684, %v2684
        %v2848 = vmul.f32 %v2689, %v2689
        %v2849 = vmul.f32 %v2692, %v2692
        %v2850 = vmul.f32 %v2697, %v2697
        %v2851 = vmul.f32 %v2700, %v2700
        %v2852 = vmul.f32 %v2705, %v2705
        %v2853 = vmul.f32 %v2708, %v2708
        %v2854 = vmul.f32 %v2713, %v2713
        %v2855 = vmul.f32 %v2716, %v2716
        %v2856 = vsel %vm2437, %v2840, 0.0
        %v2857 = vsel %vm2437, %v2841, 0.0
        %v2858 = vadd.f32 %v2856, %v2857
        %v2859 = vsel %vm2437, %v2842, 0.0
        %v2860 = vadd.f32 %v2858, %v2859
        %v2861 = vsel %vm2437, %v2843, 0.0
        %v2862 = vadd.f32 %v2860, %v2861
        %v2863 = vsel %vm2437, %v2844, 0.0
        %v2864 = vadd.f32 %v2862, %v2863
        %v2865 = vsel %vm2437, %v2845, 0.0
        %v2866 = vadd.f32 %v2864, %v2865
        %v2867 = vsel %vm2437, %v2846, 0.0
        %v2868 = vadd.f32 %v2866, %v2867
        %v2869 = vsel %vm2437, %v2847, 0.0
        %v2870 = vadd.f32 %v2868, %v2869
        %v2871 = vsel %vm2437, %v2848, 0.0
        %v2872 = vadd.f32 %v2870, %v2871
        %v2873 = vsel %vm2437, %v2849, 0.0
        %v2874 = vadd.f32 %v2872, %v2873
        %v2875 = vsel %vm2437, %v2850, 0.0
        %v2876 = vadd.f32 %v2874, %v2875
        %v2877 = vsel %vm2437, %v2851, 0.0
        %v2878 = vadd.f32 %v2876, %v2877
        %v2879 = vsel %vm2437, %v2852, 0.0
        %v2880 = vadd.f32 %v2878, %v2879
        %v2881 = vsel %vm2437, %v2853, 0.0
        %v2882 = vadd.f32 %v2880, %v2881
        %v2883 = vsel %vm2437, %v2854, 0.0
        %v2884 = vadd.f32 %v2882, %v2883
        %v2885 = vsel %vm2437, %v2855, 0.0
        %v2886 = vadd.f32 %v2884, %v2885
        %v2887 = vrot.slane %v2886, 4
        %v2888 = vadd.f32 %v2886, %v2887
        %v2889 = vrot.slane %v2888, 2
        %v2890 = vadd.f32 %v2888, %v2889
        %v2891 = vrot.slane %v2890, 1
        %v2892 = vadd.f32 %v2890, %v2891
        %v2893 = vadd.f32 %v1138, %v2892
      $region45: #{residual_block.4} parent=39 // loop_footer
        %s1136 = sadd.s32 1, %s1132
      $region46: #{residual_block.4} parent=39 // loop_footer_branch
        %1131 = sbr.rel target = $region42
      $region47: #{residual_block.4} parent=39 // loop_exit
        _
      %2894 = vst.msk [vmem:[%s293] sm:$0x1] %vm541, %v1137
      %2895 = vst.msk [vmem:[%s296] sm:$0x1] %vm541, %v1138
      %p2896 = scmp.lt.s32.totalorder %s20, 1
      %s2897 = scalar_select %p2896, %s20, 1
      %s2898 = smul.addr %s2897, 32
      %s2899 = smul.addr %s2898, 4
      %s2900 = scalar_lea.vmem %s5, %s2899
      %p2901 = scmp.lt.s32.totalorder %s20, 1
      %s2902 = scalar_select %p2901, %s20, 1
      %s2903 = scalar_lea.vmem %s6, %s2902
      %p2904 = scmp.lt.s32.totalorder %s20, 1
      %s2905 = scalar_select %p2904, %s20, 1
      %s2906 = scalar_lea.vmem %s7, %s2905
      // Predicated region
      $region48: #{residual_block.4} parent=39 // pred_check
        %p2907 = pneg %p148
      $region49: #{residual_block.4} parent=39 // pred_check_branch
        %2909 = sbr.rel (%p2907) target = $region51
      $region50: #{residual_block.4} parent=39 // pred_region
        _
      $region51: #{residual_block.4} parent=39 // pred_fallthru
        _
      // Predicated region
      $region52: #{residual_block.4} parent=39 // pred_check
        %p2910 = pneg %p174
      $region53: #{residual_block.4} parent=39 // pred_check_branch
        %2912 = sbr.rel (%p2910) target = $region55
      $region54: #{residual_block.4} parent=39 // pred_region
        _
      $region55: #{residual_block.4} parent=39 // pred_fallthru
        _
      // Predicated region
      $region56: #{residual_block.4} parent=39 // pred_check
        %p2913 = pneg %p200
      $region57: #{residual_block.4} parent=39 // pred_check_branch
        %2915 = sbr.rel (%p2913) target = $region59
      $region58: #{residual_block.4} parent=39 // pred_region
        _
      $region59: #{residual_block.4} parent=39 // pred_fallthru
        _
    $region40: #{residual_block.4} parent=5 // pred_fallthru
      _
    %p2916 = scmp.le.s32.totalorder 2, %s15
    // Predicated region
    $region60: #{residual_block.4} parent=5 // pred_check
      %p2917 = pneg %p2916
    $region61: #{residual_block.4} parent=5 // pred_check_branch
      %2919 = sbr.rel (%p2917) target = $region63
    $region62: #{residual_block.4} parent=5 // pred_region
      %s2920 = ssub.s32 %s15, 2
      // Predicated region
      $region64: #{residual_block.4} parent=62 // pred_check
        %p2921 = pneg %p154
      $region65: #{residual_block.4} parent=62 // pred_check_branch
        %2923 = sbr.rel (%p2921) target = $region67
      $region66: #{residual_block.4} parent=62 // pred_region
        %p2924 = scmp.lt.s32.totalorder %s21, 1
        %s2925 = scalar_select %p2924, %s21, 1
        %s2926 = smul.addr %s2925, 32
        %s2927 = smul.addr %s2926, 4
        %s2928 = scalar_lea.vmem %s5, %s2927
      $region67: #{residual_block.4} parent=62 // pred_fallthru
        _
      // Predicated region
      $region68: #{residual_block.4} parent=62 // pred_check
        %p2929 = pneg %p180
      $region69: #{residual_block.4} parent=62 // pred_check_branch
        %2931 = sbr.rel (%p2929) target = $region71
      $region70: #{residual_block.4} parent=62 // pred_region
        %p2932 = scmp.lt.s32.totalorder %s21, 1
        %s2933 = scalar_select %p2932, %s21, 1
        %s2934 = scalar_lea.vmem %s6, %s2933
      $region71: #{residual_block.4} parent=62 // pred_fallthru
        _
      // Predicated region
      $region72: #{residual_block.4} parent=62 // pred_check
        %p2935 = pneg %p206
      $region73: #{residual_block.4} parent=62 // pred_check_branch
        %2937 = sbr.rel (%p2935) target = $region75
      $region74: #{residual_block.4} parent=62 // pred_region
        %p2938 = scmp.lt.s32.totalorder %s21, 1
        %s2939 = scalar_select %p2938, %s21, 1
        %s2940 = scalar_lea.vmem %s7, %s2939
      $region75: #{residual_block.4} parent=62 // pred_fallthru
        _
    $region63: #{residual_block.4} parent=5 // pred_fallthru
      _
  $region6: #{residual_block.4} parent=0 // loop_footer
    %s19 = sadd.s32 1, %s15
  $region7: #{residual_block.4} parent=0 // loop_footer_branch
    %14 = sbr.rel target = $region3
  $region8: #{residual_block.4} parent=0 // loop_exit
    _

// kernel: residual_block.3
$region0: #{residual_block.3}
  #allocation0 [shape = 'u32[]', space=smem, size = 0x4, offset = 0x4, fixed_abs, tag = 'smem constant byte address 0x4 - core index']
  #allocation1 [shape = 'u32[144,128]{1,0:T(1,128)}', space=vmem, size = 0x12000, scoped, tag = 'internal scratch']
  #allocation2 [shape = 'bf16[18,18,4]{2,1,0:T(8,128)(2,1)}', space=vmem, size = 0x1b000, scoped, tag = 'scratch operand']
  %s0 = inlined_call_operand.vmem [shape: f32[2,16,16,4], index: 0, kind: input, shape index: {}]
  %s1 = inlined_call_operand.vmem [shape: bf16[36,4], index: 1, kind: input, shape index: {}]
  %s2 = inlined_call_operand.vmem [shape: bf16[2,16,16,4], index: 2, kind: output, shape index: {0}]
  %s3 = inlined_call_operand.vmem [shape: f32[2,1,4], index: 3, kind: output, shape index: {1}]
  %s4 = inlined_call_operand.vmem [shape: f32[2,1,4], index: 4, kind: output, shape index: {2}]
  %5 = xla_tuple %s2, %s3, %s4
  %s6 = sld [smem:[#allocation0]]
  $region64: #{residual_block.3} parent=0
    _
  %s8 = ssub.s32 1, %s6
  %s9 = scalar_select 0, %s8, %s6
  loop: start=0, step=1, limit=4
  $region2: #{residual_block.3} parent=0 // loop_pre_header
    _
  $region3: #{residual_block.3} parent=0 // loop_header
    %s11 = sphi 0, %s15
    %p12 = scmp.ge.s32.totalorder %s11, 4
    %s21 = sphi 0, %s23
    %s24 = sphi 0, %s21
    %s25 = sphi 0, %s24
    %s41 = sphi 0, %s25
    %s45 = sphi 0, %s45
    %s47 = sphi 0, %s45
    %s48 = sphi 0, %s47
    %s62 = sphi 0, %s48
    %s68 = sphi 0, %s70
    %s71 = sphi 0, %s68
    %s72 = sphi 0, %s71
    %s88 = sphi 0, %s72
    %s94 = sphi 0, %s96
    %s97 = sphi 0, %s94
    %s98 = sphi 0, %s97
    %s114 = sphi 0, %s98
    %s120 = sphi 0, %s122
    %s123 = sphi 0, %s120
    %s124 = sphi 0, %s123
    %s140 = sphi 0, %s124
  $region4: #{residual_block.3} parent=0 // loop_header_branch
    %14 = sbr.rel (%p12) target = $region8
  $region5: #{residual_block.3} parent=0 // loop_body
    %s16 = ssub.s32 %s11, 1
    %s17 = ssub.s32 %s11, 2
    %s18 = sadd.s32 %s11, 1
    %s19 = ssub.s32 %s11, %s18
    %p20 = scmp.eq.s32.totalorder %s19, 0
    %s22 = sadd.s32 %s21, 1
    %s23 = scalar_select %p20, %s21, %s22
    %p26 = pneg %p20
    %p27 = scmp.eq.s32.totalorder %s11, 1
    %p28 = por %p26, %p27
    %p29 = scmp.ne.s32.totalorder %s21, %s24
    %p30 = scmp.eq.s32.totalorder %s11, 0
    %p31 = por %p29, %p30
    %p32 = scmp.ne.s32.totalorder %s21, %s24
    %p33 = scmp.eq.s32.totalorder %s16, 1
    %p34 = por %p32, %p33
    %p35 = scmp.ne.s32.totalorder %s24, %s25
    %p36 = scmp.eq.s32.totalorder %s16, 0
    %p37 = por %p35, %p36
    %p38 = scmp.ne.s32.totalorder %s24, %s25
    %p39 = scmp.eq.s32.totalorder %s17, 1
    %p40 = por %p38, %p39
    %p42 = scmp.ne.s32.totalorder %s25, %s41
    %p43 = scmp.eq.s32.totalorder %s17, 0
    %p44 = por %p42, %p43
    %s46 = sadd.s32 %s45, 1
    %p49 = scmp.eq.s32.totalorder %s11, 1
    %p50 = scmp.ne.s32.totalorder %s45, %s47
    %p51 = scmp.eq.s32.totalorder %s11, 0
    %p52 = por %p50, %p51
    %p53 = scmp.ne.s32.totalorder %s45, %s47
    %p54 = scmp.eq.s32.totalorder %s16, 1
    %p55 = por %p53, %p54
    %p56 = scmp.ne.s32.totalorder %s47, %s48
    %p57 = scmp.eq.s32.totalorder %s16, 0
    %p58 = por %p56, %p57
    %p59 = scmp.ne.s32.totalorder %s47, %s48
    %p60 = scmp.eq.s32.totalorder %s17, 1
    %p61 = por %p59, %p60
    %p63 = scmp.ne.s32.totalorder %s48, %s62
    %p64 = scmp.eq.s32.totalorder %s17, 0
    %p65 = por %p63, %p64
    %s66 = ssub.s32 %s11, %s18
    %p67 = scmp.eq.s32.totalorder %s66, 0
    %s69 = sadd.s32 %s68, 1
    %s70 = scalar_select %p67, %s68, %s69
    %p73 = pneg %p67
    %p74 = scmp.eq.s32.totalorder %s11, 1
    %p75 = por %p73, %p74
    %p76 = scmp.ne.s32.totalorder %s68, %s71
    %p77 = scmp.eq.s32.totalorder %s11, 0
    %p78 = por %p76, %p77
    %p79 = scmp.ne.s32.totalorder %s68, %s71
    %p80 = scmp.eq.s32.totalorder %s16, 1
    %p81 = por %p79, %p80
    %p82 = scmp.ne.s32.totalorder %s71, %s72
    %p83 = scmp.eq.s32.totalorder %s16, 0
    %p84 = por %p82, %p83
    %p85 = scmp.ne.s32.totalorder %s71, %s72
    %p86 = scmp.eq.s32.totalorder %s17, 1
    %p87 = por %p85, %p86
    %p89 = scmp.ne.s32.totalorder %s72, %s88
    %p90 = scmp.eq.s32.totalorder %s17, 0
    %p91 = por %p89, %p90
    %s92 = ssub.s32 %s11, %s18
    %p93 = scmp.eq.s32.totalorder %s92, 0
    %s95 = sadd.s32 %s94, 1
    %s96 = scalar_select %p93, %s94, %s95
    %p99 = pneg %p93
    %p100 = scmp.eq.s32.totalorder %s11, 1
    %p101 = por %p99, %p100
    %p102 = scmp.ne.s32.totalorder %s94, %s97
    %p103 = scmp.eq.s32.totalorder %s11, 0
    %p104 = por %p102, %p103
    %p105 = scmp.ne.s32.totalorder %s94, %s97
    %p106 = scmp.eq.s32.totalorder %s16, 1
    %p107 = por %p105, %p106
    %p108 = scmp.ne.s32.totalorder %s97, %s98
    %p109 = scmp.eq.s32.totalorder %s16, 0
    %p110 = por %p108, %p109
    %p111 = scmp.ne.s32.totalorder %s97, %s98
    %p112 = scmp.eq.s32.totalorder %s17, 1
    %p113 = por %p111, %p112
    %p115 = scmp.ne.s32.totalorder %s98, %s114
    %p116 = scmp.eq.s32.totalorder %s17, 0
    %p117 = por %p115, %p116
    %s118 = ssub.s32 %s11, %s18
    %p119 = scmp.eq.s32.totalorder %s118, 0
    %s121 = sadd.s32 %s120, 1
    %s122 = scalar_select %p119, %s120, %s121
    %p125 = pneg %p119
    %p126 = scmp.eq.s32.totalorder %s11, 1
    %p127 = por %p125, %p126
    %p128 = scmp.ne.s32.totalorder %s120, %s123
    %p129 = scmp.eq.s32.totalorder %s11, 0
    %p130 = por %p128, %p129
    %p131 = scmp.ne.s32.totalorder %s120, %s123
    %p132 = scmp.eq.s32.totalorder %s16, 1
    %p133 = por %p131, %p132
    %p134 = scmp.ne.s32.totalorder %s123, %s124
    %p135 = scmp.eq.s32.totalorder %s16, 0
    %p136 = por %p134, %p135
    %p137 = scmp.ne.s32.totalorder %s123, %s124
    %p138 = scmp.eq.s32.totalorder %s17, 1
    %p139 = por %p137, %p138
    %p141 = scmp.ne.s32.totalorder %s124, %s140
    %p142 = scmp.eq.s32.totalorder %s17, 0
    %p143 = por %p141, %p142
    %p144 = scmp.le.s32.totalorder 1, %s11
    %p145 = scmp.lt.s32.totalorder %s11, 3
    %p146 = pnand %p144, %p145
    %p147 = pneg %p146
    // Predicated region
    $region9: #{residual_block.3} parent=5 // pred_check
      _
    $region10: #{residual_block.3} parent=5 // pred_check_branch
      %149 = sbr.rel (%p146) target = $region12
    $region11: #{residual_block.3} parent=5 // pred_region
      %s150 = ssub.s32 %s11, 1
      // Predicated region
      $region13: #{residual_block.3} parent=11 // pred_check
        %p151 = pneg %p58
      $region14: #{residual_block.3} parent=11 // pred_check_branch
        %153 = sbr.rel (%p151) target = $region16
      $region15: #{residual_block.3} parent=11 // pred_region
        _
      $region16: #{residual_block.3} parent=11 // pred_fallthru
        _
    $region12: #{residual_block.3} parent=5 // pred_fallthru
      _
    %p154 = scmp.lt.s32.totalorder %s11, 2
    // Predicated region
    $region17: #{residual_block.3} parent=5 // pred_check
      %p155 = pneg %p154
    $region18: #{residual_block.3} parent=5 // pred_check_branch
      %157 = sbr.rel (%p155) target = $region20
    $region19: #{residual_block.3} parent=5 // pred_region
      // Predicated region
      $region21: #{residual_block.3} parent=19 // pred_check
        %p158 = pneg %p31
      $region22: #{residual_block.3} parent=19 // pred_check_branch
        %160 = sbr.rel (%p158) target = $region24
      $region23: #{residual_block.3} parent=19 // pred_region
        %p161 = scmp.lt.s32.totalorder %s11, 1
        %s162 = scalar_select %p161, %s11, 1
        %s163 = smul.addr %s162, 32
        %s164 = smul.addr %s163, 8
        %s165 = scalar_lea.vmem %s0, %s164
      $region24: #{residual_block.3} parent=19 // pred_fallthru
        _
    $region20: #{residual_block.3} parent=5 // pred_fallthru
      _
    %p166 = scmp.le.s32.totalorder 1, %s11
    %p167 = scmp.lt.s32.totalorder %s11, 3
    %p168 = pnand %p166, %p167
    %p169 = pneg %p168
    // Predicated region
    $region25: #{residual_block.3} parent=5 // pred_check
      _
    $region26: #{residual_block.3} parent=5 // pred_check_branch
      %171 = sbr.rel (%p168) target = $region28
    $region27: #{residual_block.3} parent=5 // pred_region
      %s172 = ssub.s32 %s11, 1
      %p173 = scmp.lt.s32.totalorder %s16, 1
      %s174 = scalar_select %p173, %s16, 1
      %s175 = smul.addr %s174, 32
      %s176 = smul.addr %s175, 8
      %s177 = scalar_lea.vmem %s0, %s176
      %p178 = pneg %p37
      %p179 = pneg %p34
      %p180 = pneg %p58
      %p181 = pneg %p55
      %p182 = pneg %p84
      %p183 = pneg %p81
      %p184 = scmp.lt.s32.totalorder %s16, 1
      %s185 = scalar_select %p184, %s16, 1
      %s186 = smul.addr %s185, 32
      %s187 = smul.addr %s186, 4
      %s188 = scalar_lea.vmem %s2, %s187
      %p189 = pneg %p110
      %p190 = pneg %p107
      %p191 = scmp.lt.s32.totalorder %s16, 1
      %s192 = scalar_select %p191, %s16, 1
      %s193 = scalar_lea.vmem %s3, %s192
      %p194 = pneg %p136
      %p195 = pneg %p133
      %p196 = scmp.lt.s32.totalorder %s16, 1
      %s197 = scalar_select %p196, %s16, 1
      %s198 = scalar_lea.vmem %s4, %s197
      %p199 = scmp.lt.s32.totalorder %s16, 1
      %s200 = scalar_select %p199, %s16, 1
      %s201 = smul.addr %s200, 32
      %s202 = smul.addr %s201, 8
      %s203 = scalar_lea.vmem %s0, %s202
      %p204 = scmp.lt.s32.totalorder %s16, 1
      %s205 = scalar_select %p204, %s16, 1
      %s206 = smul.addr %s205, 32
      %s207 = smul.addr %s206, 4
      %s208 = scalar_lea.vmem %s2, %s207
      %p209 = scmp.lt.s32.totalorder %s16, 1
      %s210 = scalar_select %p209, %s16, 1
      %s211 = scalar_lea.vmem %s3, %s210
      %p212 = scmp.lt.s32.totalorder %s16, 1
      %s213 = scalar_select %p212, %s16, 1
      %s214 = scalar_lea.vmem %s4, %s213
      %v216 = vld [vmem:[%s203] sm:$0xff]
      %v217 = vld [vmem:[%s203 + $0x8] sm:$0xff]
      %v218 = vld [vmem:[%s203 + $0x10] sm:$0xff]
      %v219 = vld [vmem:[%s203 + $0x18] sm:$0xff]
      %v220 = vld [vmem:[%s203 + $0x20] sm:$0xff]
      %v221 = vld [vmem:[%s203 + $0x28] sm:$0xff]
      %v222 = vld [vmem:[%s203 + $0x30] sm:$0xff]
      %v223 = vld [vmem:[%s203 + $0x38] sm:$0xff]
      %v224 = vld [vmem:[%s203 + $0x40] sm:$0xff]
      %v225 = vld [vmem:[%s203 + $0x48] sm:$0xff]
      %v226 = vld [vmem:[%s203 + $0x50] sm:$0xff]
      %v227 = vld [vmem:[%s203 + $0x58] sm:$0xff]
      %v228 = vld [vmem:[%s203 + $0x60] sm:$0xff]
      %v229 = vld [vmem:[%s203 + $0x68] sm:$0xff]
      %v230 = vld [vmem:[%s203 + $0x70] sm:$0xff]
      %v231 = vld [vmem:[%s203 + $0x78] sm:$0xff]
      %v232 = vld [vmem:[%s203 + $0x80] sm:$0xff]
      %v233 = vld [vmem:[%s203 + $0x88] sm:$0xff]
      %v234 = vld [vmem:[%s203 + $0x90] sm:$0xff]
      %v235 = vld [vmem:[%s203 + $0x98] sm:$0xff]
      %v236 = vld [vmem:[%s203 + $0xa0] sm:$0xff]
      %v237 = vld [vmem:[%s203 + $0xa8] sm:$0xff]
      %v238 = vld [vmem:[%s203 + $0xb0] sm:$0xff]
      %v239 = vld [vmem:[%s203 + $0xb8] sm:$0xff]
      %v240 = vld [vmem:[%s203 + $0xc0] sm:$0xff]
      %v241 = vld [vmem:[%s203 + $0xc8] sm:$0xff]
      %v242 = vld [vmem:[%s203 + $0xd0] sm:$0xff]
      %v243 = vld [vmem:[%s203 + $0xd8] sm:$0xff]
      %v244 = vld [vmem:[%s203 + $0xe0] sm:$0xff]
      %v245 = vld [vmem:[%s203 + $0xe8] sm:$0xff]
      %v246 = vld [vmem:[%s203 + $0xf0] sm:$0xff]
      %v247 = vld [vmem:[%s203 + $0xf8] sm:$0xff]
      %vm248 = vcmask 27648
      %249 = vst.msk [vmem:[#allocation2] sm:$0xf] %vm248, 0
      %250 = vst.msk [vmem:[#allocation2 + $0x4] sm:$0xf] %vm248, 0
      %vm251 = vcmask 24576
      %252 = vst.msk [vmem:[#allocation2 + $0x8] sm:$0x1] %vm251, 0
      %253 = vst.msk [vmem:[#allocation2 + $0xc] sm:$0xf] %vm248, 0
      %254 = vst.msk [vmem:[#allocation2 + $0x10] sm:$0xf] %vm248, 0
      %255 = vst.msk [vmem:[#allocation2 + $0x14] sm:$0x1] %vm251, 0
      %256 = vst.msk [vmem:[#allocation2 + $0x18] sm:$0xf] %vm248, 0
      %257 = vst.msk [vmem:[#allocation2 + $0x1c] sm:$0xf] %vm248, 0
      %258 = vst.msk [vmem:[#allocation2 + $0x20] sm:$0x1] %vm251, 0
      %259 = vst.msk [vmem:[#allocation2 + $0x24] sm:$0xf] %vm248, 0
      %260 = vst.msk [vmem:[#allocation2 + $0x28] sm:$0xf] %vm248, 0
      %261 = vst.msk [vmem:[#allocation2 + $0x2c] sm:$0x1] %vm251, 0
      %262 = vst.msk [vmem:[#allocation2 + $0x30] sm:$0xf] %vm248, 0
      %263 = vst.msk [vmem:[#allocation2 + $0x34] sm:$0xf] %vm248, 0
      %264 = vst.msk [vmem:[#allocation2 + $0x38] sm:$0x1] %vm251, 0
      %265 = vst.msk [vmem:[#allocation2 + $0x3c] sm:$0xf] %vm248, 0
      %266 = vst.msk [vmem:[#allocation2 + $0x40] sm:$0xf] %vm248, 0
      %267 = vst.msk [vmem:[#allocation2 + $0x44] sm:$0x1] %vm251, 0
      %268 = vst.msk [vmem:[#allocation2 + $0x48] sm:$0xf] %vm248, 0
      %269 = vst.msk [vmem:[#allocation2 + $0x4c] sm:$0xf] %vm248, 0
      %270 = vst.msk [vmem:[#allocation2 + $0x50] sm:$0x1] %vm251, 0
      %271 = vst.msk [vmem:[#allocation2 + $0x54] sm:$0xf] %vm248, 0
      %272 = vst.msk [vmem:[#allocation2 + $0x58] sm:$0xf] %vm248, 0
      %273 = vst.msk [vmem:[#allocation2 + $0x5c] sm:$0x1] %vm251, 0
      %274 = vst.msk [vmem:[#allocation2 + $0x60] sm:$0xf] %vm248, 0
      %275 = vst.msk [vmem:[#allocation2 + $0x64] sm:$0xf] %vm248, 0
      %276 = vst.msk [vmem:[#allocation2 + $0x68] sm:$0x1] %vm251, 0
      %277 = vst.msk [vmem:[#allocation2 + $0x6c] sm:$0xf] %vm248, 0
      %278 = vst.msk [vmem:[#allocation2 + $0x70] sm:$0xf] %vm248, 0
      %279 = vst.msk [vmem:[#allocation2 + $0x74] sm:$0x1] %vm251, 0
      %280 = vst.msk [vmem:[#allocation2 + $0x78] sm:$0xf] %vm248, 0
      %281 = vst.msk [vmem:[#allocation2 + $0x7c] sm:$0xf] %vm248, 0
      %282 = vst.msk [vmem:[#allocation2 + $0x80] sm:$0x1] %vm251, 0
      %283 = vst.msk [vmem:[#allocation2 + $0x84] sm:$0xf] %vm248, 0
      %284 = vst.msk [vmem:[#allocation2 + $0x88] sm:$0xf] %vm248, 0
      %285 = vst.msk [vmem:[#allocation2 + $0x8c] sm:$0x1] %vm251, 0
      %286 = vst.msk [vmem:[#allocation2 + $0x90] sm:$0xf] %vm248, 0
      %287 = vst.msk [vmem:[#allocation2 + $0x94] sm:$0xf] %vm248, 0
      %288 = vst.msk [vmem:[#allocation2 + $0x98] sm:$0x1] %vm251, 0
      %289 = vst.msk [vmem:[#allocation2 + $0x9c] sm:$0xf] %vm248, 0
      %290 = vst.msk [vmem:[#allocation2 + $0xa0] sm:$0xf] %vm248, 0
      %291 = vst.msk [vmem:[#allocation2 + $0xa4] sm:$0x1] %vm251, 0
      %292 = vst.msk [vmem:[#allocation2 + $0xa8] sm:$0xf] %vm248, 0
      %293 = vst.msk [vmem:[#allocation2 + $0xac] sm:$0xf] %vm248, 0
      %294 = vst.msk [vmem:[#allocation2 + $0xb0] sm:$0x1] %vm251, 0
      %295 = vst.msk [vmem:[#allocation2 + $0xb4] sm:$0xf] %vm248, 0
      %296 = vst.msk [vmem:[#allocation2 + $0xb8] sm:$0xf] %vm248, 0
      %297 = vst.msk [vmem:[#allocation2 + $0xbc] sm:$0x1] %vm251, 0
      %298 = vst.msk [vmem:[#allocation2 + $0xc0] sm:$0xf] %vm248, 0
      %299 = vst.msk [vmem:[#allocation2 + $0xc4] sm:$0xf] %vm248, 0
      %300 = vst.msk [vmem:[#allocation2 + $0xc8] sm:$0x1] %vm251, 0
      %301 = vst.msk [vmem:[#allocation2 + $0xcc] sm:$0xf] %vm248, 0
      %302 = vst.msk [vmem:[#allocation2 + $0xd0] sm:$0xf] %vm248, 0
      %303 = vst.msk [vmem:[#allocation2 + $0xd4] sm:$0x1] %vm251, 0
      %v304 = vpack.c.bf16 %v217, %v216
      %v305 = vpack.c.bf16 %v219, %v218
      %v306 = vpack.c.bf16 %v221, %v220
      %v307 = vpack.c.bf16 %v223, %v222
      %v308 = vpack.c.bf16 %v225, %v224
      %v309 = vpack.c.bf16 %v227, %v226
      %v310 = vpack.c.bf16 %v229, %v228
      %v311 = vpack.c.bf16 %v231, %v230
      %v312 = vpack.c.bf16 %v233, %v232
      %v313 = vpack.c.bf16 %v235, %v234
      %v314 = vpack.c.bf16 %v237, %v236
      %v315 = vpack.c.bf16 %v239, %v238
      %v316 = vpack.c.bf16 %v241, %v240
      %v317 = vpack.c.bf16 %v243, %v242
      %v318 = vpack.c.bf16 %v245, %v244
      %v319 = vpack.c.bf16 %v247, %v246
      %v336 = vunpack.c.l.b16 %v304
      %v337 = vunpack.c.h.b16 %v304
      %v338 = vunpack.c.l.b16 %v305
      %v339 = vunpack.c.h.b16 %v305
      %v340 = vunpack.c.l.b16 %v306
      %v341 = vunpack.c.h.b16 %v306
      %v342 = vunpack.c.l.b16 %v307
      %v343 = vunpack.c.h.b16 %v307
      %v344 = vunpack.c.l.b16 %v308
      %v345 = vunpack.c.h.b16 %v308
      %v346 = vunpack.c.l.b16 %v309
      %v347 = vunpack.c.h.b16 %v309
      %v348 = vunpack.c.l.b16 %v310
      %v349 = vunpack.c.h.b16 %v310
      %v350 = vunpack.c.l.b16 %v311
      %v351 = vunpack.c.h.b16 %v311
      %v352 = vunpack.c.l.b16 %v312
      %v353 = vunpack.c.h.b16 %v312
      %v354 = vunpack.c.l.b16 %v313
      %v355 = vunpack.c.h.b16 %v313
      %v356 = vunpack.c.l.b16 %v314
      %v357 = vunpack.c.h.b16 %v314
      %v358 = vunpack.c.l.b16 %v315
      %v359 = vunpack.c.h.b16 %v315
      %v360 = vunpack.c.l.b16 %v316
      %v361 = vunpack.c.h.b16 %v316
      %v362 = vunpack.c.l.b16 %v317
      %v363 = vunpack.c.h.b16 %v317
      %v364 = vunpack.c.l.b16 %v318
      %v365 = vunpack.c.h.b16 %v318
      %v366 = vunpack.c.l.b16 %v319
      %v367 = vunpack.c.h.b16 %v319
      %v368 = vpack.c.b16 %v336, %v336
      %v369 = vpack.c.b16 %v337, %v337
      %v370 = vpack.c.b16 %v338, %v338
      %v371 = vpack.c.b16 %v339, %v339
      %v372 = vpack.c.b16 %v340, %v340
      %v373 = vpack.c.b16 %v341, %v341
      %v374 = vpack.c.b16 %v342, %v342
      %v375 = vpack.c.b16 %v343, %v343
      %v376 = vpack.c.b16 %v344, %v344
      %v377 = vpack.c.b16 %v345, %v345
      %v378 = vpack.c.b16 %v346, %v346
      %v379 = vpack.c.b16 %v347, %v347
      %v380 = vpack.c.b16 %v348, %v348
      %v381 = vpack.c.b16 %v349, %v349
      %v382 = vpack.c.b16 %v350, %v350
      %v383 = vpack.c.b16 %v351, %v351
      %v384 = vpack.c.b16 %v352, %v352
      %v385 = vpack.c.b16 %v353, %v353
      %v386 = vpack.c.b16 %v354, %v354
      %v387 = vpack.c.b16 %v355, %v355
      %v388 = vpack.c.b16 %v356, %v356
      %v389 = vpack.c.b16 %v357, %v357
      %v390 = vpack.c.b16 %v358, %v358
      %v391 = vpack.c.b16 %v359, %v359
      %v392 = vpack.c.b16 %v360, %v360
      %v393 = vpack.c.b16 %v361, %v361
      %v394 = vpack.c.b16 %v362, %v362
      %v395 = vpack.c.b16 %v363, %v363
      %v396 = vpack.c.b16 %v364, %v364
      %v397 = vpack.c.b16 %v365, %v365
      %v398 = vpack.c.b16 %v366, %v366
      %v399 = vpack.c.b16 %v367, %v367
      %vm400 = vsmask.f32 256
      %vm401 = vsmask.f32 4368
      %vm402 = vmor %vm400, %vm401
      %v404 = vshrl.u32 %v368, 16
      %v406 = vrot.slane %v404, 7
      %v407 = vshll.u32 %v368, 16
      %v409 = vor.u32 %v406, %v407
      %v410 = vrot.slane %v406, 4
      %v412 = vshrl.u32 %v369, 16
      %v414 = vrot.slane %v412, 7
      %v415 = vshll.u32 %v369, 16
      %v417 = vor.u32 %v414, %v415
      %v418 = vsel %vm402, %v410, %v417
      %v419 = vrot.slane %v414, 4
      %v421 = vshrl.u32 %v370, 16
      %v423 = vrot.slane %v421, 7
      %v424 = vshll.u32 %v370, 16
      %v426 = vor.u32 %v423, %v424
      %v427 = vrot.slane %v423, 4
      %v429 = vshrl.u32 %v371, 16
      %v431 = vrot.slane %v429, 7
      %v432 = vshll.u32 %v371, 16
      %v434 = vor.u32 %v431, %v432
      %v435 = vsel %vm402, %v427, %v434
      %v436 = vrot.slane %v431, 4
      %v438 = vshrl.u32 %v372, 16
      %v440 = vrot.slane %v438, 7
      %v441 = vshll.u32 %v372, 16
      %v443 = vor.u32 %v440, %v441
      %v444 = vrot.slane %v440, 4
      %v446 = vshrl.u32 %v373, 16
      %v448 = vrot.slane %v446, 7
      %v449 = vshll.u32 %v373, 16
      %v451 = vor.u32 %v448, %v449
      %v452 = vsel %vm402, %v444, %v451
      %v453 = vrot.slane %v448, 4
      %v455 = vshrl.u32 %v374, 16
      %v457 = vrot.slane %v455, 7
      %v458 = vshll.u32 %v374, 16
      %v460 = vor.u32 %v457, %v458
      %v461 = vrot.slane %v457, 4
      %v463 = vshrl.u32 %v375, 16
      %v465 = vrot.slane %v463, 7
      %v466 = vshll.u32 %v375, 16
      %v468 = vor.u32 %v465, %v466
      %v469 = vsel %vm402, %v461, %v468
      %v470 = vrot.slane %v465, 4
      %v472 = vshrl.u32 %v376, 16
      %v474 = vrot.slane %v472, 7
      %v475 = vshll.u32 %v376, 16
      %v477 = vor.u32 %v474, %v475
      %v478 = vrot.slane %v474, 4
      %v480 = vshrl.u32 %v377, 16
      %v482 = vrot.slane %v480, 7
      %v483 = vshll.u32 %v377, 16
      %v485 = vor.u32 %v482, %v483
      %v486 = vsel %vm402, %v478, %v485
      %v487 = vrot.slane %v482, 4
      %v489 = vshrl.u32 %v378, 16
      %v491 = vrot.slane %v489, 7
      %v492 = vshll.u32 %v378, 16
      %v494 = vor.u32 %v491, %v492
      %v495 = vrot.slane %v491, 4
      %v497 = vshrl.u32 %v379, 16
      %v499 = vrot.slane %v497, 7
      %v500 = vshll.u32 %v379, 16
      %v502 = vor.u32 %v499, %v500
      %v503 = vsel %vm402, %v495, %v502
      %v504 = vrot.slane %v499, 4
      %v506 = vshrl.u32 %v380, 16
      %v508 = vrot.slane %v506, 7
      %v509 = vshll.u32 %v380, 16
      %v511 = vor.u32 %v508, %v509
      %v512 = vrot.slane %v508, 4
      %v514 = vshrl.u32 %v381, 16
      %v516 = vrot.slane %v514, 7
      %v517 = vshll.u32 %v381, 16
      %v519 = vor.u32 %v516, %v517
      %v520 = vsel %vm402, %v512, %v519
      %v521 = vrot.slane %v516, 4
      %v523 = vshrl.u32 %v382, 16
      %v525 = vrot.slane %v523, 7
      %v526 = vshll.u32 %v382, 16
      %v528 = vor.u32 %v525, %v526
      %v529 = vrot.slane %v525, 4
      %v531 = vshrl.u32 %v383, 16
      %v533 = vrot.slane %v531, 7
      %v534 = vshll.u32 %v383, 16
      %v536 = vor.u32 %v533, %v534
      %v537 = vsel %vm402, %v529, %v536
      %v538 = vrot.slane %v533, 4
      %v540 = vshrl.u32 %v384, 16
      %v542 = vrot.slane %v540, 7
      %v543 = vshll.u32 %v384, 16
      %v545 = vor.u32 %v542, %v543
      %v546 = vrot.slane %v542, 4
      %v548 = vshrl.u32 %v385, 16
      %v550 = vrot.slane %v548, 7
      %v551 = vshll.u32 %v385, 16
      %v553 = vor.u32 %v550, %v551
      %v554 = vsel %vm402, %v546, %v553
      %v555 = vrot.slane %v550, 4
      %v557 = vshrl.u32 %v386, 16
      %v559 = vrot.slane %v557, 7
      %v560 = vshll.u32 %v386, 16
      %v562 = vor.u32 %v559, %v560
      %v563 = vrot.slane %v559, 4
      %v565 = vshrl.u32 %v387, 16
      %v567 = vrot.slane %v565, 7
      %v568 = vshll.u32 %v387, 16
      %v570 = vor.u32 %v567, %v568
      %v571 = vsel %vm402, %v563, %v570
      %v572 = vrot.slane %v567, 4
      %v574 = vshrl.u32 %v388, 16
      %v576 = vrot.slane %v574, 7
      %v577 = vshll.u32 %v388, 16
      %v579 = vor.u32 %v576, %v577
      %v580 = vrot.slane %v576, 4
      %v582 = vshrl.u32 %v389, 16
      %v584 = vrot.slane %v582, 7
      %v585 = vshll.u32 %v389, 16
      %v587 = vor.u32 %v584, %v585
      %v588 = vsel %vm402, %v580, %v587
      %v589 = vrot.slane %v584, 4
      %v591 = vshrl.u32 %v390, 16
      %v593 = vrot.slane %v591, 7
      %v594 = vshll.u32 %v390, 16
      %v596 = vor.u32 %v593, %v594
      %v597 = vrot.slane %v593, 4
      %v599 = vshrl.u32 %v391, 16
      %v601 = vrot.slane %v599, 7
      %v602 = vshll.u32 %v391, 16
      %v604 = vor.u32 %v601, %v602
      %v605 = vsel %vm402, %v597, %v604
      %v606 = vrot.slane %v601, 4
      %v608 = vshrl.u32 %v392, 16
      %v610 = vrot.slane %v608, 7
      %v611 = vshll.u32 %v392, 16
      %v613 = vor.u32 %v610, %v611
      %v614 = vrot.slane %v610, 4
      %v616 = vshrl.u32 %v393, 16
      %v618 = vrot.slane %v616, 7
      %v619 = vshll.u32 %v393, 16
      %v621 = vor.u32 %v618, %v619
      %v622 = vsel %vm402, %v614, %v621
      %v623 = vrot.slane %v618, 4
      %v625 = vshrl.u32 %v394, 16
      %v627 = vrot.slane %v625, 7
      %v628 = vshll.u32 %v394, 16
      %v630 = vor.u32 %v627, %v628
      %v631 = vrot.slane %v627, 4
      %v633 = vshrl.u32 %v395, 16
      %v635 = vrot.slane %v633, 7
      %v636 = vshll.u32 %v395, 16
      %v638 = vor.u32 %v635, %v636
      %v639 = vsel %vm402, %v631, %v638
      %v640 = vrot.slane %v635, 4
      %v642 = vshrl.u32 %v396, 16
      %v644 = vrot.slane %v642, 7
      %v645 = vshll.u32 %v396, 16
      %v647 = vor.u32 %v644, %v645
      %v648 = vrot.slane %v644, 4
      %v650 = vshrl.u32 %v397, 16
      %v652 = vrot.slane %v650, 7
      %v653 = vshll.u32 %v397, 16
      %v655 = vor.u32 %v652, %v653
      %v656 = vsel %vm402, %v648, %v655
      %v657 = vrot.slane %v652, 4
      %v659 = vshrl.u32 %v398, 16
      %v661 = vrot.slane %v659, 7
      %v662 = vshll.u32 %v398, 16
      %v664 = vor.u32 %v661, %v662
      %v665 = vrot.slane %v661, 4
      %v667 = vshrl.u32 %v399, 16
      %v669 = vrot.slane %v667, 7
      %v670 = vshll.u32 %v399, 16
      %v672 = vor.u32 %v669, %v670
      %v673 = vsel %vm402, %v665, %v672
      %v674 = vrot.slane %v669, 4
      %s723 = scalar_lea.vmem [#allocation2], 12
      %vm724 = vcmask 27648
      %vm725 = vsmask.f32 7938
      %vm726 = vmand %vm724, %vm725
      %v727 = vld [vmem:[%s723] sm:$0xf]
      %v728 = vsel %vm726, %v409, %v727
      %729 = vst [vmem:[%s723] sm:$0xf] %v728
      %730 = vst.msk [vmem:[%s723 + $0x4] sm:$0xf] %vm248, %v418
      %vm731 = vcmask 24576
      %vm732 = vmand %vm731, %vm400
      %v733 = vld [vmem:[%s723 + $0x8] sm:$0x1]
      %v734 = vsel %vm732, %v419, %v733
      %735 = vst [vmem:[%s723 + $0x8] sm:$0x1] %v734
      %v736 = vld [vmem:[%s723 + $0xc] sm:$0xf]
      %v737 = vsel %vm726, %v426, %v736
      %738 = vst [vmem:[%s723 + $0xc] sm:$0xf] %v737
      %739 = vst.msk [vmem:[%s723 + $0x10] sm:$0xf] %vm248, %v435
      %v740 = vld [vmem:[%s723 + $0x14] sm:$0x1]
      %v741 = vsel %vm732, %v436, %v740
      %742 = vst [vmem:[%s723 + $0x14] sm:$0x1] %v741
      %v743 = vld [vmem:[%s723 + $0x18] sm:$0xf]
      %v744 = vsel %vm726, %v443, %v743
      %745 = vst [vmem:[%s723 + $0x18] sm:$0xf] %v744
      %746 = vst.msk [vmem:[%s723 + $0x1c] sm:$0xf] %vm248, %v452
      %v747 = vld [vmem:[%s723 + $0x20] sm:$0x1]
      %v748 = vsel %vm732, %v453, %v747
      %749 = vst [vmem:[%s723 + $0x20] sm:$0x1] %v748
      %v750 = vld [vmem:[%s723 + $0x24] sm:$0xf]
      %v751 = vsel %vm726, %v460, %v750
      %752 = vst [vmem:[%s723 + $0x24] sm:$0xf] %v751
      %753 = vst.msk [vmem:[%s723 + $0x28] sm:$0xf] %vm248, %v469
      %v754 = vld [vmem:[%s723 + $0x2c] sm:$0x1]
      %v755 = vsel %vm732, %v470, %v754
      %756 = vst [vmem:[%s723 + $0x2c] sm:$0x1] %v755
      %v757 = vld [vmem:[%s723 + $0x30] sm:$0xf]
      %v758 = vsel %vm726, %v477, %v757
      %759 = vst [vmem:[%s723 + $0x30] sm:$0xf] %v758
      %760 = vst.msk [vmem:[%s723 + $0x34] sm:$0xf] %vm248, %v486
      %v761 = vld [vmem:[%s723 + $0x38] sm:$0x1]
      %v762 = vsel %vm732, %v487, %v761
      %763 = vst [vmem:[%s723 + $0x38] sm:$0x1] %v762
      %v764 = vld [vmem:[%s723 + $0x3c] sm:$0xf]
      %v765 = vsel %vm726, %v494, %v764
      %766 = vst [vmem:[%s723 + $0x3c] sm:$0xf] %v765
      %767 = vst.msk [vmem:[%s723 + $0x40] sm:$0xf] %vm248, %v503
      %v768 = vld [vmem:[%s723 + $0x44] sm:$0x1]
      %v769 = vsel %vm732, %v504, %v768
      %770 = vst [vmem:[%s723 + $0x44] sm:$0x1] %v769
      %v771 = vld [vmem:[%s723 + $0x48] sm:$0xf]
      %v772 = vsel %vm726, %v511, %v771
      %773 = vst [vmem:[%s723 + $0x48] sm:$0xf] %v772
      %774 = vst.msk [vmem:[%s723 + $0x4c] sm:$0xf] %vm248, %v520
      %v775 = vld [vmem:[%s723 + $0x50] sm:$0x1]
      %v776 = vsel %vm732, %v521, %v775
      %777 = vst [vmem:[%s723 + $0x50] sm:$0x1] %v776
      %v778 = vld [vmem:[%s723 + $0x54] sm:$0xf]
      %v779 = vsel %vm726, %v528, %v778
      %780 = vst [vmem:[%s723 + $0x54] sm:$0xf] %v779
      %781 = vst.msk [vmem:[%s723 + $0x58] sm:$0xf] %vm248, %v537
      %v782 = vld [vmem:[%s723 + $0x5c] sm:$0x1]
      %v783 = vsel %vm732, %v538, %v782
      %784 = vst [vmem:[%s723 + $0x5c] sm:$0x1] %v783
      %v785 = vld [vmem:[%s723 + $0x60] sm:$0xf]
      %v786 = vsel %vm726, %v545, %v785
      %787 = vst [vmem:[%s723 + $0x60] sm:$0xf] %v786
      %788 = vst.msk [vmem:[%s723 + $0x64] sm:$0xf] %vm248, %v554
      %v789 = vld [vmem:[%s723 + $0x68] sm:$0x1]
      %v790 = vsel %vm732, %v555, %v789
      %791 = vst [vmem:[%s723 + $0x68] sm:$0x1] %v790
      %v792 = vld [vmem:[%s723 + $0x6c] sm:$0xf]
      %v793 = vsel %vm726, %v562, %v792
      %794 = vst [vmem:[%s723 + $0x6c] sm:$0xf] %v793
      %795 = vst.msk [vmem:[%s723 + $0x70] sm:$0xf] %vm248, %v571
      %v796 = vld [vmem:[%s723 + $0x74] sm:$0x1]
      %v797 = vsel %vm732, %v572, %v796
      %798 = vst [vmem:[%s723 + $0x74] sm:$0x1] %v797
      %v799 = vld [vmem:[%s723 + $0x78] sm:$0xf]
      %v800 = vsel %vm726, %v579, %v799
      %801 = vst [vmem:[%s723 + $0x78] sm:$0xf] %v800
      %802 = vst.msk [vmem:[%s723 + $0x7c] sm:$0xf] %vm248, %v588
      %v803 = vld [vmem:[%s723 + $0x80] sm:$0x1]
      %v804 = vsel %vm732, %v589, %v803
      %805 = vst [vmem:[%s723 + $0x80] sm:$0x1] %v804
      %v806 = vld [vmem:[%s723 + $0x84] sm:$0xf]
      %v807 = vsel %vm726, %v596, %v806
      %808 = vst [vmem:[%s723 + $0x84] sm:$0xf] %v807
      %809 = vst.msk [vmem:[%s723 + $0x88] sm:$0xf] %vm248, %v605
      %v810 = vld [vmem:[%s723 + $0x8c] sm:$0x1]
      %v811 = vsel %vm732, %v606, %v810
      %812 = vst [vmem:[%s723 + $0x8c] sm:$0x1] %v811
      %v813 = vld [vmem:[%s723 + $0x90] sm:$0xf]
      %v814 = vsel %vm726, %v613, %v813
      %815 = vst [vmem:[%s723 + $0x90] sm:$0xf] %v814
      %816 = vst.msk [vmem:[%s723 + $0x94] sm:$0xf] %vm248, %v622
      %v817 = vld [vmem:[%s723 + $0x98] sm:$0x1]
      %v818 = vsel %vm732, %v623, %v817
      %819 = vst [vmem:[%s723 + $0x98] sm:$0x1] %v818
      %v820 = vld [vmem:[%s723 + $0x9c] sm:$0xf]
      %v821 = vsel %vm726, %v630, %v820
      %822 = vst [vmem:[%s723 + $0x9c] sm:$0xf] %v821
      %823 = vst.msk [vmem:[%s723 + $0xa0] sm:$0xf] %vm248, %v639
      %v824 = vld [vmem:[%s723 + $0xa4] sm:$0x1]
      %v825 = vsel %vm732, %v640, %v824
      %826 = vst [vmem:[%s723 + $0xa4] sm:$0x1] %v825
      %v827 = vld [vmem:[%s723 + $0xa8] sm:$0xf]
      %v828 = vsel %vm726, %v647, %v827
      %829 = vst [vmem:[%s723 + $0xa8] sm:$0xf] %v828
      %830 = vst.msk [vmem:[%s723 + $0xac] sm:$0xf] %vm248, %v656
      %v831 = vld [vmem:[%s723 + $0xb0] sm:$0x1]
      %v832 = vsel %vm732, %v657, %v831
      %833 = vst [vmem:[%s723 + $0xb0] sm:$0x1] %v832
      %v834 = vld [vmem:[%s723 + $0xb4] sm:$0xf]
      %v835 = vsel %vm726, %v664, %v834
      %836 = vst [vmem:[%s723 + $0xb4] sm:$0xf] %v835
      %837 = vst.msk [vmem:[%s723 + $0xb8] sm:$0xf] %vm248, %v673
      %v838 = vld [vmem:[%s723 + $0xbc] sm:$0x1]
      %v839 = vsel %vm732, %v674, %v838
      %840 = vst [vmem:[%s723 + $0xbc] sm:$0x1] %v839
      loop: start=0, step=1, limit=2
      $region29: #{residual_block.3} parent=27 // loop_pre_header
        _
      $region30: #{residual_block.3} parent=27 // loop_header
        %s842 = sphi 0, %s846
        %p843 = scmp.ge.s32.totalorder %s842, 2
        %v847 = vphi 0.0, %v2549
        %v848 = vphi 0.0, %v2603
      $region31: #{residual_block.3} parent=27 // loop_header_branch
        %845 = sbr.rel (%p843) target = $region35
      $region32: #{residual_block.3} parent=27 // loop_body
        %s849 = smul.u32 %s842, 8
        %s850 = smul.u32 %s849, 3
        %s851 = smul.addr %s850, 4
        %s852 = scalar_lea.vmem [#allocation2], %s851
        %v853 = vld [vmem:[%s852] sm:$0xf]
        %v854 = vld [vmem:[%s852 + $0x4] sm:$0xf]
        %v855 = vld [vmem:[%s852 + $0xc] sm:$0xf]
        %v856 = vld [vmem:[%s852 + $0x10] sm:$0xf]
        %v857 = vld [vmem:[%s852 + $0x18] sm:$0xf]
        %v858 = vld [vmem:[%s852 + $0x1c] sm:$0xf]
        %v859 = vld [vmem:[%s852 + $0x24] sm:$0xf]
        %v860 = vld [vmem:[%s852 + $0x28] sm:$0xf]
        %v861 = vld [vmem:[%s852 + $0x30] sm:$0xf]
        %v862 = vld [vmem:[%s852 + $0x34] sm:$0xf]
        %v863 = vld [vmem:[%s852 + $0x3c] sm:$0xf]
        %v864 = vld [vmem:[%s852 + $0x40] sm:$0xf]
        %v865 = vld [vmem:[%s852 + $0x48] sm:$0xf]
        %v866 = vld [vmem:[%s852 + $0x4c] sm:$0xf]
        %v867 = vld [vmem:[%s852 + $0x54] sm:$0xf]
        %v868 = vld [vmem:[%s852 + $0x58] sm:$0xf]
        %v869 = vld [vmem:[%s852 + $0x8] sm:$0x1]
        %v870 = vld [vmem:[%s852 + $0x14] sm:$0x1]
        %v871 = vld [vmem:[%s852 + $0x20] sm:$0x1]
        %v872 = vld [vmem:[%s852 + $0x2c] sm:$0x1]
        %v873 = vld [vmem:[%s852 + $0x38] sm:$0x1]
        %v874 = vld [vmem:[%s852 + $0x44] sm:$0x1]
        %v875 = vld [vmem:[%s852 + $0x50] sm:$0x1]
        %v876 = vld [vmem:[%s852 + $0x5c] sm:$0x1]
        %vm877 = vsmask.f32 3328
        %vm878 = vsmask.f32 7440
        %vm879 = vmor %vm877, %vm878
        %v881 = vshrl.u32 %v853, 16
        %v883 = vrot.slane %v881, 4
        %v884 = vshll.u32 %v853, 16
        %v886 = vrot.slane %v884, 5
        %v887 = vor.u32 %v883, %v886
        %v888 = vrot.slane %v887, 4
        %v890 = vshll.u32 %v854, 16
        %v892 = vrot.slane %v890, 5
        %v893 = vsel %vm879, %v888, %v892
        %v894 = vshrl.u32 %v854, 16
        %v896 = vrot.slane %v894, 4
        %v897 = vor.u32 %v896, %v892
        %v898 = vrot.slane %v897, 4
        %v900 = vshll.u32 %v869, 16
        %v902 = vrot.slane %v900, 5
        %v903 = vsel %vm879, %v898, %v902
        %v905 = vshrl.u32 %v855, 16
        %v907 = vrot.slane %v905, 4
        %v908 = vshll.u32 %v855, 16
        %v910 = vrot.slane %v908, 5
        %v911 = vor.u32 %v907, %v910
        %v912 = vrot.slane %v911, 4
        %v914 = vshll.u32 %v856, 16
        %v916 = vrot.slane %v914, 5
        %v917 = vsel %vm879, %v912, %v916
        %v918 = vshrl.u32 %v856, 16
        %v920 = vrot.slane %v918, 4
        %v921 = vor.u32 %v920, %v916
        %v922 = vrot.slane %v921, 4
        %v924 = vshll.u32 %v870, 16
        %v926 = vrot.slane %v924, 5
        %v927 = vsel %vm879, %v922, %v926
        %v929 = vshrl.u32 %v857, 16
        %v931 = vrot.slane %v929, 4
        %v932 = vshll.u32 %v857, 16
        %v934 = vrot.slane %v932, 5
        %v935 = vor.u32 %v931, %v934
        %v936 = vrot.slane %v935, 4
        %v938 = vshll.u32 %v858, 16
        %v940 = vrot.slane %v938, 5
        %v941 = vsel %vm879, %v936, %v940
        %v942 = vshrl.u32 %v858, 16
        %v944 = vrot.slane %v942, 4
        %v945 = vor.u32 %v944, %v940
        %v946 = vrot.slane %v945, 4
        %v948 = vshll.u32 %v871, 16
        %v950 = vrot.slane %v948, 5
        %v951 = vsel %vm879, %v946, %v950
        %v953 = vshrl.u32 %v859, 16
        %v955 = vrot.slane %v953, 4
        %v956 = vshll.u32 %v859, 16
        %v958 = vrot.slane %v956, 5
        %v959 = vor.u32 %v955, %v958
        %v960 = vrot.slane %v959, 4
        %v962 = vshll.u32 %v860, 16
        %v964 = vrot.slane %v962, 5
        %v965 = vsel %vm879, %v960, %v964
        %v966 = vshrl.u32 %v860, 16
        %v968 = vrot.slane %v966, 4
        %v969 = vor.u32 %v968, %v964
        %v970 = vrot.slane %v969, 4
        %v972 = vshll.u32 %v872, 16
        %v974 = vrot.slane %v972, 5
        %v975 = vsel %vm879, %v970, %v974
        %v977 = vshrl.u32 %v861, 16
        %v979 = vrot.slane %v977, 4
        %v980 = vshll.u32 %v861, 16
        %v982 = vrot.slane %v980, 5
        %v983 = vor.u32 %v979, %v982
        %v984 = vrot.slane %v983, 4
        %v986 = vshll.u32 %v862, 16
        %v988 = vrot.slane %v986, 5
        %v989 = vsel %vm879, %v984, %v988
        %v990 = vshrl.u32 %v862, 16
        %v992 = vrot.slane %v990, 4
        %v993 = vor.u32 %v992, %v988
        %v994 = vrot.slane %v993, 4
        %v996 = vshll.u32 %v873, 16
        %v998 = vrot.slane %v996, 5
        %v999 = vsel %vm879, %v994, %v998
        %v1001 = vshrl.u32 %v863, 16
        %v1003 = vrot.slane %v1001, 4
        %v1004 = vshll.u32 %v863, 16
        %v1006 = vrot.slane %v1004, 5
        %v1007 = vor.u32 %v1003, %v1006
        %v1008 = vrot.slane %v1007, 4
        %v1010 = vshll.u32 %v864, 16
        %v1012 = vrot.slane %v1010, 5
        %v1013 = vsel %vm879, %v1008, %v1012
        %v1014 = vshrl.u32 %v864, 16
        %v1016 = vrot.slane %v1014, 4
        %v1017 = vor.u32 %v1016, %v1012
        %v1018 = vrot.slane %v1017, 4
        %v1020 = vshll.u32 %v874, 16
        %v1022 = vrot.slane %v1020, 5
        %v1023 = vsel %vm879, %v1018, %v1022
        %v1025 = vshrl.u32 %v865, 16
        %v1027 = vrot.slane %v1025, 4
        %v1028 = vshll.u32 %v865, 16
        %v1030 = vrot.slane %v1028, 5
        %v1031 = vor.u32 %v1027, %v1030
        %v1032 = vrot.slane %v1031, 4
        %v1034 = vshll.u32 %v866, 16
        %v1036 = vrot.slane %v1034, 5
        %v1037 = vsel %vm879, %v1032, %v1036
        %v1038 = vshrl.u32 %v866, 16
        %v1040 = vrot.slane %v1038, 4
        %v1041 = vor.u32 %v1040, %v1036
        %v1042 = vrot.slane %v1041, 4
        %v1044 = vshll.u32 %v875, 16
        %v1046 = vrot.slane %v1044, 5
        %v1047 = vsel %vm879, %v1042, %v1046
        %v1049 = vshrl.u32 %v867, 16
        %v1051 = vrot.slane %v1049, 4
        %v1052 = vshll.u32 %v867, 16
        %v1054 = vrot.slane %v1052, 5
        %v1055 = vor.u32 %v1051, %v1054
        %v1056 = vrot.slane %v1055, 4
        %v1058 = vshll.u32 %v868, 16
        %v1060 = vrot.slane %v1058, 5
        %v1061 = vsel %vm879, %v1056, %v1060
        %v1062 = vshrl.u32 %v868, 16
        %v1064 = vrot.slane %v1062, 4
        %v1065 = vor.u32 %v1064, %v1060
        %v1066 = vrot.slane %v1065, 4
        %v1068 = vshll.u32 %v876, 16
        %v1070 = vrot.slane %v1068, 5
        %v1071 = vsel %vm879, %v1066, %v1070
        %v1072 = vld [vmem:[%s852] sm:$0xe]
        %v1073 = vld [vmem:[%s852 + $0xc] sm:$0xe]
        %v1074 = vld [vmem:[%s852 + $0x18] sm:$0xe]
        %v1075 = vld [vmem:[%s852 + $0x24] sm:$0xe]
        %v1076 = vld [vmem:[%s852 + $0x30] sm:$0xe]
        %v1077 = vld [vmem:[%s852 + $0x3c] sm:$0xe]
        %v1078 = vld [vmem:[%s852 + $0x48] sm:$0xe]
        %v1079 = vld [vmem:[%s852 + $0x54] sm:$0xe]
        %vm1104 = vcmask 1042432
        %vm1105 = vcmask 1046532
        %vm1106 = vmor %vm1104, %vm1105
        %v1107 = vrot.slane %v1072, 5
        %v1108 = vrot.slane %v1107, 4
        %v1109 = vrot.slane %v854, 5
        %v1110 = vsel %vm1106, %v1108, %v1109
        %v1111 = vrot.slane %v1109, 4
        %v1112 = vrot.slane %v869, 5
        %v1113 = vsel %vm1106, %v1111, %v1112
        %v1114 = vrot.slane %v1073, 5
        %v1115 = vrot.slane %v1114, 4
        %v1116 = vrot.slane %v856, 5
        %v1117 = vsel %vm1106, %v1115, %v1116
        %v1118 = vrot.slane %v1116, 4
        %v1119 = vrot.slane %v870, 5
        %v1120 = vsel %vm1106, %v1118, %v1119
        %v1121 = vrot.slane %v1074, 5
        %v1122 = vrot.slane %v1121, 4
        %v1123 = vrot.slane %v858, 5
        %v1124 = vsel %vm1106, %v1122, %v1123
        %v1125 = vrot.slane %v1123, 4
        %v1126 = vrot.slane %v871, 5
        %v1127 = vsel %vm1106, %v1125, %v1126
        %v1128 = vrot.slane %v1075, 5
        %v1129 = vrot.slane %v1128, 4
        %v1130 = vrot.slane %v860, 5
        %v1131 = vsel %vm1106, %v1129, %v1130
        %v1132 = vrot.slane %v1130, 4
        %v1133 = vrot.slane %v872, 5
        %v1134 = vsel %vm1106, %v1132, %v1133
        %v1135 = vrot.slane %v1076, 5
        %v1136 = vrot.slane %v1135, 4
        %v1137 = vrot.slane %v862, 5
        %v1138 = vsel %vm1106, %v1136, %v1137
        %v1139 = vrot.slane %v1137, 4
        %v1140 = vrot.slane %v873, 5
        %v1141 = vsel %vm1106, %v1139, %v1140
        %v1142 = vrot.slane %v1077, 5
        %v1143 = vrot.slane %v1142, 4
        %v1144 = vrot.slane %v864, 5
        %v1145 = vsel %vm1106, %v1143, %v1144
        %v1146 = vrot.slane %v1144, 4
        %v1147 = vrot.slane %v874, 5
        %v1148 = vsel %vm1106, %v1146, %v1147
        %v1149 = vrot.slane %v1078, 5
        %v1150 = vrot.slane %v1149, 4
        %v1151 = vrot.slane %v866, 5
        %v1152 = vsel %vm1106, %v1150, %v1151
        %v1153 = vrot.slane %v1151, 4
        %v1154 = vrot.slane %v875, 5
        %v1155 = vsel %vm1106, %v1153, %v1154
        %v1156 = vrot.slane %v1079, 5
        %v1157 = vrot.slane %v1156, 4
        %v1158 = vrot.slane %v868, 5
        %v1159 = vsel %vm1106, %v1157, %v1158
        %v1160 = vrot.slane %v1158, 4
        %v1161 = vrot.slane %v876, 5
        %v1162 = vsel %vm1106, %v1160, %v1161
        %s1163 = sadd.s32 %s849, 1
        %s1164 = smul.u32 %s1163, 3
        %s1165 = smul.addr %s1164, 4
        %s1166 = scalar_lea.vmem [#allocation2], %s1165
        %v1167 = vld [vmem:[%s1166] sm:$0xf]
        %v1168 = vld [vmem:[%s1166 + $0x4] sm:$0xf]
        %v1169 = vld [vmem:[%s1166 + $0xc] sm:$0xf]
        %v1170 = vld [vmem:[%s1166 + $0x10] sm:$0xf]
        %v1171 = vld [vmem:[%s1166 + $0x18] sm:$0xf]
        %v1172 = vld [vmem:[%s1166 + $0x1c] sm:$0xf]
        %v1173 = vld [vmem:[%s1166 + $0x24] sm:$0xf]
        %v1174 = vld [vmem:[%s1166 + $0x28] sm:$0xf]
        %v1175 = vld [vmem:[%s1166 + $0x30] sm:$0xf]
        %v1176 = vld [vmem:[%s1166 + $0x34] sm:$0xf]
        %v1177 = vld [vmem:[%s1166 + $0x3c] sm:$0xf]
        %v1178 = vld [vmem:[%s1166 + $0x40] sm:$0xf]
        %v1179 = vld [vmem:[%s1166 + $0x48] sm:$0xf]
        %v1180 = vld [vmem:[%s1166 + $0x4c] sm:$0xf]
        %v1181 = vld [vmem:[%s1166 + $0x54] sm:$0xf]
        %v1182 = vld [vmem:[%s1166 + $0x58] sm:$0xf]
        %v1183 = vld [vmem:[%s1166 + $0x8] sm:$0x1]
        %v1184 = vld [vmem:[%s1166 + $0x14] sm:$0x1]
        %v1185 = vld [vmem:[%s1166 + $0x20] sm:$0x1]
        %v1186 = vld [vmem:[%s1166 + $0x2c] sm:$0x1]
        %v1187 = vld [vmem:[%s1166 + $0x38] sm:$0x1]
        %v1188 = vld [vmem:[%s1166 + $0x44] sm:$0x1]
        %v1189 = vld [vmem:[%s1166 + $0x50] sm:$0x1]
        %v1190 = vld [vmem:[%s1166 + $0x5c] sm:$0x1]
        %v1192 = vshrl.u32 %v1167, 16
        %v1194 = vrot.slane %v1192, 4
        %v1195 = vshll.u32 %v1167, 16
        %v1197 = vrot.slane %v1195, 5
        %v1198 = vor.u32 %v1194, %v1197
        %v1199 = vrot.slane %v1198, 4
        %v1201 = vshll.u32 %v1168, 16
        %v1203 = vrot.slane %v1201, 5
        %v1204 = vsel %vm879, %v1199, %v1203
        %v1205 = vshrl.u32 %v1168, 16
        %v1207 = vrot.slane %v1205, 4
        %v1208 = vor.u32 %v1207, %v1203
        %v1209 = vrot.slane %v1208, 4
        %v1211 = vshll.u32 %v1183, 16
        %v1213 = vrot.slane %v1211, 5
        %v1214 = vsel %vm879, %v1209, %v1213
        %v1216 = vshrl.u32 %v1169, 16
        %v1218 = vrot.slane %v1216, 4
        %v1219 = vshll.u32 %v1169, 16
        %v1221 = vrot.slane %v1219, 5
        %v1222 = vor.u32 %v1218, %v1221
        %v1223 = vrot.slane %v1222, 4
        %v1225 = vshll.u32 %v1170, 16
        %v1227 = vrot.slane %v1225, 5
        %v1228 = vsel %vm879, %v1223, %v1227
        %v1229 = vshrl.u32 %v1170, 16
        %v1231 = vrot.slane %v1229, 4
        %v1232 = vor.u32 %v1231, %v1227
        %v1233 = vrot.slane %v1232, 4
        %v1235 = vshll.u32 %v1184, 16
        %v1237 = vrot.slane %v1235, 5
        %v1238 = vsel %vm879, %v1233, %v1237
        %v1240 = vshrl.u32 %v1171, 16
        %v1242 = vrot.slane %v1240, 4
        %v1243 = vshll.u32 %v1171, 16
        %v1245 = vrot.slane %v1243, 5
        %v1246 = vor.u32 %v1242, %v1245
        %v1247 = vrot.slane %v1246, 4
        %v1249 = vshll.u32 %v1172, 16
        %v1251 = vrot.slane %v1249, 5
        %v1252 = vsel %vm879, %v1247, %v1251
        %v1253 = vshrl.u32 %v1172, 16
        %v1255 = vrot.slane %v1253, 4
        %v1256 = vor.u32 %v1255, %v1251
        %v1257 = vrot.slane %v1256, 4
        %v1259 = vshll.u32 %v1185, 16
        %v1261 = vrot.slane %v1259, 5
        %v1262 = vsel %vm879, %v1257, %v1261
        %v1264 = vshrl.u32 %v1173, 16
        %v1266 = vrot.slane %v1264, 4
        %v1267 = vshll.u32 %v1173, 16
        %v1269 = vrot.slane %v1267, 5
        %v1270 = vor.u32 %v1266, %v1269
        %v1271 = vrot.slane %v1270, 4
        %v1273 = vshll.u32 %v1174, 16
        %v1275 = vrot.slane %v1273, 5
        %v1276 = vsel %vm879, %v1271, %v1275
        %v1277 = vshrl.u32 %v1174, 16
        %v1279 = vrot.slane %v1277, 4
        %v1280 = vor.u32 %v1279, %v1275
        %v1281 = vrot.slane %v1280, 4
        %v1283 = vshll.u32 %v1186, 16
        %v1285 = vrot.slane %v1283, 5
        %v1286 = vsel %vm879, %v1281, %v1285
        %v1288 = vshrl.u32 %v1175, 16
        %v1290 = vrot.slane %v1288, 4
        %v1291 = vshll.u32 %v1175, 16
        %v1293 = vrot.slane %v1291, 5
        %v1294 = vor.u32 %v1290, %v1293
        %v1295 = vrot.slane %v1294, 4
        %v1297 = vshll.u32 %v1176, 16
        %v1299 = vrot.slane %v1297, 5
        %v1300 = vsel %vm879, %v1295, %v1299
        %v1301 = vshrl.u32 %v1176, 16
        %v1303 = vrot.slane %v1301, 4
        %v1304 = vor.u32 %v1303, %v1299
        %v1305 = vrot.slane %v1304, 4
        %v1307 = vshll.u32 %v1187, 16
        %v1309 = vrot.slane %v1307, 5
        %v1310 = vsel %vm879, %v1305, %v1309
        %v1312 = vshrl.u32 %v1177, 16
        %v1314 = vrot.slane %v1312, 4
        %v1315 = vshll.u32 %v1177, 16
        %v1317 = vrot.slane %v1315, 5
        %v1318 = vor.u32 %v1314, %v1317
        %v1319 = vrot.slane %v1318, 4
        %v1321 = vshll.u32 %v1178, 16
        %v1323 = vrot.slane %v1321, 5
        %v1324 = vsel %vm879, %v1319, %v1323
        %v1325 = vshrl.u32 %v1178, 16
        %v1327 = vrot.slane %v1325, 4
        %v1328 = vor.u32 %v1327, %v1323
        %v1329 = vrot.slane %v1328, 4
        %v1331 = vshll.u32 %v1188, 16
        %v1333 = vrot.slane %v1331, 5
        %v1334 = vsel %vm879, %v1329, %v1333
        %v1336 = vshrl.u32 %v1179, 16
        %v1338 = vrot.slane %v1336, 4
        %v1339 = vshll.u32 %v1179, 16
        %v1341 = vrot.slane %v1339, 5
        %v1342 = vor.u32 %v1338, %v1341
        %v1343 = vrot.slane %v1342, 4
        %v1345 = vshll.u32 %v1180, 16
        %v1347 = vrot.slane %v1345, 5
        %v1348 = vsel %vm879, %v1343, %v1347
        %v1349 = vshrl.u32 %v1180, 16
        %v1351 = vrot.slane %v1349, 4
        %v1352 = vor.u32 %v1351, %v1347
        %v1353 = vrot.slane %v1352, 4
        %v1355 = vshll.u32 %v1189, 16
        %v1357 = vrot.slane %v1355, 5
        %v1358 = vsel %vm879, %v1353, %v1357
        %v1360 = vshrl.u32 %v1181, 16
        %v1362 = vrot.slane %v1360, 4
        %v1363 = vshll.u32 %v1181, 16
        %v1365 = vrot.slane %v1363, 5
        %v1366 = vor.u32 %v1362, %v1365
        %v1367 = vrot.slane %v1366, 4
        %v1369 = vshll.u32 %v1182, 16
        %v1371 = vrot.slane %v1369, 5
        %v1372 = vsel %vm879, %v1367, %v1371
        %v1373 = vshrl.u32 %v1182, 16
        %v1375 = vrot.slane %v1373, 4
        %v1376 = vor.u32 %v1375, %v1371
        %v1377 = vrot.slane %v1376, 4
        %v1379 = vshll.u32 %v1190, 16
        %v1381 = vrot.slane %v1379, 5
        %v1382 = vsel %vm879, %v1377, %v1381
        %v1383 = vld [vmem:[%s1166] sm:$0xe]
        %v1384 = vld [vmem:[%s1166 + $0xc] sm:$0xe]
        %v1385 = vld [vmem:[%s1166 + $0x18] sm:$0xe]
        %v1386 = vld [vmem:[%s1166 + $0x24] sm:$0xe]
        %v1387 = vld [vmem:[%s1166 + $0x30] sm:$0xe]
        %v1388 = vld [vmem:[%s1166 + $0x3c] sm:$0xe]
        %v1389 = vld [vmem:[%s1166 + $0x48] sm:$0xe]
        %v1390 = vld [vmem:[%s1166 + $0x54] sm:$0xe]
        %v1415 = vrot.slane %v1383, 5
        %v1416 = vrot.slane %v1415, 4
        %v1417 = vrot.slane %v1168, 5
        %v1418 = vsel %vm1106, %v1416, %v1417
        %v1419 = vrot.slane %v1417, 4
        %v1420 = vrot.slane %v1183, 5
        %v1421 = vsel %vm1106, %v1419, %v1420
        %v1422 = vrot.slane %v1384, 5
        %v1423 = vrot.slane %v1422, 4
        %v1424 = vrot.slane %v1170, 5
        %v1425 = vsel %vm1106, %v1423, %v1424
        %v1426 = vrot.slane %v1424, 4
        %v1427 = vrot.slane %v1184, 5
        %v1428 = vsel %vm1106, %v1426, %v1427
        %v1429 = vrot.slane %v1385, 5
        %v1430 = vrot.slane %v1429, 4
        %v1431 = vrot.slane %v1172, 5
        %v1432 = vsel %vm1106, %v1430, %v1431
        %v1433 = vrot.slane %v1431, 4
        %v1434 = vrot.slane %v1185, 5
        %v1435 = vsel %vm1106, %v1433, %v1434
        %v1436 = vrot.slane %v1386, 5
        %v1437 = vrot.slane %v1436, 4
        %v1438 = vrot.slane %v1174, 5
        %v1439 = vsel %vm1106, %v1437, %v1438
        %v1440 = vrot.slane %v1438, 4
        %v1441 = vrot.slane %v1186, 5
        %v1442 = vsel %vm1106, %v1440, %v1441
        %v1443 = vrot.slane %v1387, 5
        %v1444 = vrot.slane %v1443, 4
        %v1445 = vrot.slane %v1176, 5
        %v1446 = vsel %vm1106, %v1444, %v1445
        %v1447 = vrot.slane %v1445, 4
        %v1448 = vrot.slane %v1187, 5
        %v1449 = vsel %vm1106, %v1447, %v1448
        %v1450 = vrot.slane %v1388, 5
        %v1451 = vrot.slane %v1450, 4
        %v1452 = vrot.slane %v1178, 5
        %v1453 = vsel %vm1106, %v1451, %v1452
        %v1454 = vrot.slane %v1452, 4
        %v1455 = vrot.slane %v1188, 5
        %v1456 = vsel %vm1106, %v1454, %v1455
        %v1457 = vrot.slane %v1389, 5
        %v1458 = vrot.slane %v1457, 4
        %v1459 = vrot.slane %v1180, 5
        %v1460 = vsel %vm1106, %v1458, %v1459
        %v1461 = vrot.slane %v1459, 4
        %v1462 = vrot.slane %v1189, 5
        %v1463 = vsel %vm1106, %v1461, %v1462
        %v1464 = vrot.slane %v1390, 5
        %v1465 = vrot.slane %v1464, 4
        %v1466 = vrot.slane %v1182, 5
        %v1467 = vsel %vm1106, %v1465, %v1466
        %v1468 = vrot.slane %v1466, 4
        %v1469 = vrot.slane %v1190, 5
        %v1470 = vsel %vm1106, %v1468, %v1469
        %s1471 = sadd.s32 %s849, 2
        %s1472 = smul.u32 %s1471, 3
        %s1473 = smul.addr %s1472, 4
        %s1474 = scalar_lea.vmem [#allocation2], %s1473
        %v1475 = vld [vmem:[%s1474] sm:$0xf]
        %v1476 = vld [vmem:[%s1474 + $0x4] sm:$0xf]
        %v1477 = vld [vmem:[%s1474 + $0xc] sm:$0xf]
        %v1478 = vld [vmem:[%s1474 + $0x10] sm:$0xf]
        %v1479 = vld [vmem:[%s1474 + $0x18] sm:$0xf]
        %v1480 = vld [vmem:[%s1474 + $0x1c] sm:$0xf]
        %v1481 = vld [vmem:[%s1474 + $0x24] sm:$0xf]
        %v1482 = vld [vmem:[%s1474 + $0x28] sm:$0xf]
        %v1483 = vld [vmem:[%s1474 + $0x30] sm:$0xf]
        %v1484 = vld [vmem:[%s1474 + $0x34] sm:$0xf]
        %v1485 = vld [vmem:[%s1474 + $0x3c] sm:$0xf]
        %v1486 = vld [vmem:[%s1474 + $0x40] sm:$0xf]
        %v1487 = vld [vmem:[%s1474 + $0x48] sm:$0xf]
        %v1488 = vld [vmem:[%s1474 + $0x4c] sm:$0xf]
        %v1489 = vld [vmem:[%s1474 + $0x54] sm:$0xf]
        %v1490 = vld [vmem:[%s1474 + $0x58] sm:$0xf]
        %v1491 = vld [vmem:[%s1474 + $0x8] sm:$0x1]
        %v1492 = vld [vmem:[%s1474 + $0x14] sm:$0x1]
        %v1493 = vld [vmem:[%s1474 + $0x20] sm:$0x1]
        %v1494 = vld [vmem:[%s1474 + $0x2c] sm:$0x1]
        %v1495 = vld [vmem:[%s1474 + $0x38] sm:$0x1]
        %v1496 = vld [vmem:[%s1474 + $0x44] sm:$0x1]
        %v1497 = vld [vmem:[%s1474 + $0x50] sm:$0x1]
        %v1498 = vld [vmem:[%s1474 + $0x5c] sm:$0x1]
        %v1500 = vshrl.u32 %v1475, 16
        %v1502 = vrot.slane %v1500, 4
        %v1503 = vshll.u32 %v1475, 16
        %v1505 = vrot.slane %v1503, 5
        %v1506 = vor.u32 %v1502, %v1505
        %v1507 = vrot.slane %v1506, 4
        %v1509 = vshll.u32 %v1476, 16
        %v1511 = vrot.slane %v1509, 5
        %v1512 = vsel %vm879, %v1507, %v1511
        %v1513 = vshrl.u32 %v1476, 16
        %v1515 = vrot.slane %v1513, 4
        %v1516 = vor.u32 %v1515, %v1511
        %v1517 = vrot.slane %v1516, 4
        %v1519 = vshll.u32 %v1491, 16
        %v1521 = vrot.slane %v1519, 5
        %v1522 = vsel %vm879, %v1517, %v1521
        %v1524 = vshrl.u32 %v1477, 16
        %v1526 = vrot.slane %v1524, 4
        %v1527 = vshll.u32 %v1477, 16
        %v1529 = vrot.slane %v1527, 5
        %v1530 = vor.u32 %v1526, %v1529
        %v1531 = vrot.slane %v1530, 4
        %v1533 = vshll.u32 %v1478, 16
        %v1535 = vrot.slane %v1533, 5
        %v1536 = vsel %vm879, %v1531, %v1535
        %v1537 = vshrl.u32 %v1478, 16
        %v1539 = vrot.slane %v1537, 4
        %v1540 = vor.u32 %v1539, %v1535
        %v1541 = vrot.slane %v1540, 4
        %v1543 = vshll.u32 %v1492, 16
        %v1545 = vrot.slane %v1543, 5
        %v1546 = vsel %vm879, %v1541, %v1545
        %v1548 = vshrl.u32 %v1479, 16
        %v1550 = vrot.slane %v1548, 4
        %v1551 = vshll.u32 %v1479, 16
        %v1553 = vrot.slane %v1551, 5
        %v1554 = vor.u32 %v1550, %v1553
        %v1555 = vrot.slane %v1554, 4
        %v1557 = vshll.u32 %v1480, 16
        %v1559 = vrot.slane %v1557, 5
        %v1560 = vsel %vm879, %v1555, %v1559
        %v1561 = vshrl.u32 %v1480, 16
        %v1563 = vrot.slane %v1561, 4
        %v1564 = vor.u32 %v1563, %v1559
        %v1565 = vrot.slane %v1564, 4
        %v1567 = vshll.u32 %v1493, 16
        %v1569 = vrot.slane %v1567, 5
        %v1570 = vsel %vm879, %v1565, %v1569
        %v1572 = vshrl.u32 %v1481, 16
        %v1574 = vrot.slane %v1572, 4
        %v1575 = vshll.u32 %v1481, 16
        %v1577 = vrot.slane %v1575, 5
        %v1578 = vor.u32 %v1574, %v1577
        %v1579 = vrot.slane %v1578, 4
        %v1581 = vshll.u32 %v1482, 16
        %v1583 = vrot.slane %v1581, 5
        %v1584 = vsel %vm879, %v1579, %v1583
        %v1585 = vshrl.u32 %v1482, 16
        %v1587 = vrot.slane %v1585, 4
        %v1588 = vor.u32 %v1587, %v1583
        %v1589 = vrot.slane %v1588, 4
        %v1591 = vshll.u32 %v1494, 16
        %v1593 = vrot.slane %v1591, 5
        %v1594 = vsel %vm879, %v1589, %v1593
        %v1596 = vshrl.u32 %v1483, 16
        %v1598 = vrot.slane %v1596, 4
        %v1599 = vshll.u32 %v1483, 16
        %v1601 = vrot.slane %v1599, 5
        %v1602 = vor.u32 %v1598, %v1601
        %v1603 = vrot.slane %v1602, 4
        %v1605 = vshll.u32 %v1484, 16
        %v1607 = vrot.slane %v1605, 5
        %v1608 = vsel %vm879, %v1603, %v1607
        %v1609 = vshrl.u32 %v1484, 16
        %v1611 = vrot.slane %v1609, 4
        %v1612 = vor.u32 %v1611, %v1607
        %v1613 = vrot.slane %v1612, 4
        %v1615 = vshll.u32 %v1495, 16
        %v1617 = vrot.slane %v1615, 5
        %v1618 = vsel %vm879, %v1613, %v1617
        %v1620 = vshrl.u32 %v1485, 16
        %v1622 = vrot.slane %v1620, 4
        %v1623 = vshll.u32 %v1485, 16
        %v1625 = vrot.slane %v1623, 5
        %v1626 = vor.u32 %v1622, %v1625
        %v1627 = vrot.slane %v1626, 4
        %v1629 = vshll.u32 %v1486, 16
        %v1631 = vrot.slane %v1629, 5
        %v1632 = vsel %vm879, %v1627, %v1631
        %v1633 = vshrl.u32 %v1486, 16
        %v1635 = vrot.slane %v1633, 4
        %v1636 = vor.u32 %v1635, %v1631
        %v1637 = vrot.slane %v1636, 4
        %v1639 = vshll.u32 %v1496, 16
        %v1641 = vrot.slane %v1639, 5
        %v1642 = vsel %vm879, %v1637, %v1641
        %v1644 = vshrl.u32 %v1487, 16
        %v1646 = vrot.slane %v1644, 4
        %v1647 = vshll.u32 %v1487, 16
        %v1649 = vrot.slane %v1647, 5
        %v1650 = vor.u32 %v1646, %v1649
        %v1651 = vrot.slane %v1650, 4
        %v1653 = vshll.u32 %v1488, 16
        %v1655 = vrot.slane %v1653, 5
        %v1656 = vsel %vm879, %v1651, %v1655
        %v1657 = vshrl.u32 %v1488, 16
        %v1659 = vrot.slane %v1657, 4
        %v1660 = vor.u32 %v1659, %v1655
        %v1661 = vrot.slane %v1660, 4
        %v1663 = vshll.u32 %v1497, 16
        %v1665 = vrot.slane %v1663, 5
        %v1666 = vsel %vm879, %v1661, %v1665
        %v1668 = vshrl.u32 %v1489, 16
        %v1670 = vrot.slane %v1668, 4
        %v1671 = vshll.u32 %v1489, 16
        %v1673 = vrot.slane %v1671, 5
        %v1674 = vor.u32 %v1670, %v1673
        %v1675 = vrot.slane %v1674, 4
        %v1677 = vshll.u32 %v1490, 16
        %v1679 = vrot.slane %v1677, 5
        %v1680 = vsel %vm879, %v1675, %v1679
        %v1681 = vshrl.u32 %v1490, 16
        %v1683 = vrot.slane %v1681, 4
        %v1684 = vor.u32 %v1683, %v1679
        %v1685 = vrot.slane %v1684, 4
        %v1687 = vshll.u32 %v1498, 16
        %v1689 = vrot.slane %v1687, 5
        %v1690 = vsel %vm879, %v1685, %v1689
        %v1691 = vld [vmem:[%s1474] sm:$0xe]
        %v1692 = vld [vmem:[%s1474 + $0xc] sm:$0xe]
        %v1693 = vld [vmem:[%s1474 + $0x18] sm:$0xe]
        %v1694 = vld [vmem:[%s1474 + $0x24] sm:$0xe]
        %v1695 = vld [vmem:[%s1474 + $0x30] sm:$0xe]
        %v1696 = vld [vmem:[%s1474 + $0x3c] sm:$0xe]
        %v1697 = vld [vmem:[%s1474 + $0x48] sm:$0xe]
        %v1698 = vld [vmem:[%s1474 + $0x54] sm:$0xe]
        %v1723 = vrot.slane %v1691, 5
        %v1724 = vrot.slane %v1723, 4
        %v1725 = vrot.slane %v1476, 5
        %v1726 = vsel %vm1106, %v1724, %v1725
        %v1727 = vrot.slane %v1725, 4
        %v1728 = vrot.slane %v1491, 5
        %v1729 = vsel %vm1106, %v1727, %v1728
        %v1730 = vrot.slane %v1692, 5
        %v1731 = vrot.slane %v1730, 4
        %v1732 = vrot.slane %v1478, 5
        %v1733 = vsel %vm1106, %v1731, %v1732
        %v1734 = vrot.slane %v1732, 4
        %v1735 = vrot.slane %v1492, 5
        %v1736 = vsel %vm1106, %v1734, %v1735
        %v1737 = vrot.slane %v1693, 5
        %v1738 = vrot.slane %v1737, 4
        %v1739 = vrot.slane %v1480, 5
        %v1740 = vsel %vm1106, %v1738, %v1739
        %v1741 = vrot.slane %v1739, 4
        %v1742 = vrot.slane %v1493, 5
        %v1743 = vsel %vm1106, %v1741, %v1742
        %v1744 = vrot.slane %v1694, 5
        %v1745 = vrot.slane %v1744, 4
        %v1746 = vrot.slane %v1482, 5
        %v1747 = vsel %vm1106, %v1745, %v1746
        %v1748 = vrot.slane %v1746, 4
        %v1749 = vrot.slane %v1494, 5
        %v1750 = vsel %vm1106, %v1748, %v1749
        %v1751 = vrot.slane %v1695, 5
        %v1752 = vrot.slane %v1751, 4
        %v1753 = vrot.slane %v1484, 5
        %v1754 = vsel %vm1106, %v1752, %v1753
        %v1755 = vrot.slane %v1753, 4
        %v1756 = vrot.slane %v1495, 5
        %v1757 = vsel %vm1106, %v1755, %v1756
        %v1758 = vrot.slane %v1696, 5
        %v1759 = vrot.slane %v1758, 4
        %v1760 = vrot.slane %v1486, 5
        %v1761 = vsel %vm1106, %v1759, %v1760
        %v1762 = vrot.slane %v1760, 4
        %v1763 = vrot.slane %v1496, 5
        %v1764 = vsel %vm1106, %v1762, %v1763
        %v1765 = vrot.slane %v1697, 5
        %v1766 = vrot.slane %v1765, 4
        %v1767 = vrot.slane %v1488, 5
        %v1768 = vsel %vm1106, %v1766, %v1767
        %v1769 = vrot.slane %v1767, 4
        %v1770 = vrot.slane %v1497, 5
        %v1771 = vsel %vm1106, %v1769, %v1770
        %v1772 = vrot.slane %v1698, 5
        %v1773 = vrot.slane %v1772, 4
        %v1774 = vrot.slane %v1490, 5
        %v1775 = vsel %vm1106, %v1773, %v1774
        %v1776 = vrot.slane %v1774, 4
        %v1777 = vrot.slane %v1498, 5
        %v1778 = vsel %vm1106, %v1776, %v1777
        %v1787 = vunpack.c.l.b16 %v853
        %v1788 = vunpack.c.l.b16 %v854
        %v1789 = vunpack.c.l.b16 %v855
        %v1790 = vunpack.c.l.b16 %v856
        %v1791 = vunpack.c.l.b16 %v857
        %v1792 = vunpack.c.l.b16 %v858
        %v1793 = vunpack.c.l.b16 %v859
        %v1794 = vunpack.c.l.b16 %v860
        %v1795 = vunpack.c.l.b16 %v861
        %v1796 = vunpack.c.l.b16 %v862
        %v1797 = vunpack.c.l.b16 %v863
        %v1798 = vunpack.c.l.b16 %v864
        %v1799 = vunpack.c.l.b16 %v865
        %v1800 = vunpack.c.l.b16 %v866
        %v1801 = vunpack.c.l.b16 %v867
        %v1802 = vunpack.c.l.b16 %v868
        %v1803 = vpack.c.b16 %v1788, %v1787
        %v1804 = vpack.c.b16 %v1790, %v1789
        %v1805 = vpack.c.b16 %v1792, %v1791
        %v1806 = vpack.c.b16 %v1794, %v1793
        %v1807 = vpack.c.b16 %v1796, %v1795
        %v1808 = vpack.c.b16 %v1798, %v1797
        %v1809 = vpack.c.b16 %v1800, %v1799
        %v1810 = vpack.c.b16 %v1802, %v1801
        %v1811 = vunpack.c.l.b16 %v893
        %v1812 = vunpack.c.l.b16 %v903
        %v1813 = vunpack.c.l.b16 %v917
        %v1814 = vunpack.c.l.b16 %v927
        %v1815 = vunpack.c.l.b16 %v941
        %v1816 = vunpack.c.l.b16 %v951
        %v1817 = vunpack.c.l.b16 %v965
        %v1818 = vunpack.c.l.b16 %v975
        %v1819 = vunpack.c.l.b16 %v989
        %v1820 = vunpack.c.l.b16 %v999
        %v1821 = vunpack.c.l.b16 %v1013
        %v1822 = vunpack.c.l.b16 %v1023
        %v1823 = vunpack.c.l.b16 %v1037
        %v1824 = vunpack.c.l.b16 %v1047
        %v1825 = vunpack.c.l.b16 %v1061
        %v1826 = vunpack.c.l.b16 %v1071
        %v1827 = vpack.c.b16 %v1812, %v1811
        %v1828 = vpack.c.b16 %v1814, %v1813
        %v1829 = vpack.c.b16 %v1816, %v1815
        %v1830 = vpack.c.b16 %v1818, %v1817
        %v1831 = vpack.c.b16 %v1820, %v1819
        %v1832 = vpack.c.b16 %v1822, %v1821
        %v1833 = vpack.c.b16 %v1824, %v1823
        %v1834 = vpack.c.b16 %v1826, %v1825
        %1835 = vrot.lane.b32.xlu0 %v1827, 4
        %v1836 = vpop.permute.xlu0 %1835
        %1837 = vrot.lane.b32.xlu0 %v1828, 4
        %v1838 = vpop.permute.xlu0 %1837
        %1839 = vrot.lane.b32.xlu0 %v1829, 4
        %v1840 = vpop.permute.xlu0 %1839
        %1841 = vrot.lane.b32.xlu0 %v1830, 4
        %v1842 = vpop.permute.xlu0 %1841
        %1843 = vrot.lane.b32.xlu0 %v1831, 4
        %v1844 = vpop.permute.xlu0 %1843
        %1845 = vrot.lane.b32.xlu0 %v1832, 4
        %v1846 = vpop.permute.xlu0 %1845
        %1847 = vrot.lane.b32.xlu0 %v1833, 4
        %v1848 = vpop.permute.xlu0 %1847
        %1849 = vrot.lane.b32.xlu0 %v1834, 4
        %v1850 = vpop.permute.xlu0 %1849
        %v1851 = vunpack.c.l.b16 %v1110
        %v1852 = vunpack.c.l.b16 %v1113
        %v1853 = vunpack.c.l.b16 %v1117
        %v1854 = vunpack.c.l.b16 %v1120
        %v1855 = vunpack.c.l.b16 %v1124
        %v1856 = vunpack.c.l.b16 %v1127
        %v1857 = vunpack.c.l.b16 %v1131
        %v1858 = vunpack.c.l.b16 %v1134
        %v1859 = vunpack.c.l.b16 %v1138
        %v1860 = vunpack.c.l.b16 %v1141
        %v1861 = vunpack.c.l.b16 %v1145
        %v1862 = vunpack.c.l.b16 %v1148
        %v1863 = vunpack.c.l.b16 %v1152
        %v1864 = vunpack.c.l.b16 %v1155
        %v1865 = vunpack.c.l.b16 %v1159
        %v1866 = vunpack.c.l.b16 %v1162
        %v1867 = vpack.c.b16 %v1852, %v1851
        %v1868 = vpack.c.b16 %v1854, %v1853
        %v1869 = vpack.c.b16 %v1856, %v1855
        %v1870 = vpack.c.b16 %v1858, %v1857
        %v1871 = vpack.c.b16 %v1860, %v1859
        %v1872 = vpack.c.b16 %v1862, %v1861
        %v1873 = vpack.c.b16 %v1864, %v1863
        %v1874 = vpack.c.b16 %v1866, %v1865
        %1875 = vrot.lane.b32.xlu0 %v1867, 8
        %v1876 = vpop.permute.xlu0 %1875
        %1877 = vrot.lane.b32.xlu0 %v1868, 8
        %v1878 = vpop.permute.xlu0 %1877
        %1879 = vrot.lane.b32.xlu0 %v1869, 8
        %v1880 = vpop.permute.xlu0 %1879
        %1881 = vrot.lane.b32.xlu0 %v1870, 8
        %v1882 = vpop.permute.xlu0 %1881
        %1883 = vrot.lane.b32.xlu0 %v1871, 8
        %v1884 = vpop.permute.xlu0 %1883
        %1885 = vrot.lane.b32.xlu0 %v1872, 8
        %v1886 = vpop.permute.xlu0 %1885
        %1887 = vrot.lane.b32.xlu0 %v1873, 8
        %v1888 = vpop.permute.xlu0 %1887
        %1889 = vrot.lane.b32.xlu0 %v1874, 8
        %v1890 = vpop.permute.xlu0 %1889
        %v1899 = vunpack.c.l.b16 %v1167
        %v1900 = vunpack.c.l.b16 %v1168
        %v1901 = vunpack.c.l.b16 %v1169
        %v1902 = vunpack.c.l.b16 %v1170
        %v1903 = vunpack.c.l.b16 %v1171
        %v1904 = vunpack.c.l.b16 %v1172
        %v1905 = vunpack.c.l.b16 %v1173
        %v1906 = vunpack.c.l.b16 %v1174
        %v1907 = vunpack.c.l.b16 %v1175
        %v1908 = vunpack.c.l.b16 %v1176
        %v1909 = vunpack.c.l.b16 %v1177
        %v1910 = vunpack.c.l.b16 %v1178
        %v1911 = vunpack.c.l.b16 %v1179
        %v1912 = vunpack.c.l.b16 %v1180
        %v1913 = vunpack.c.l.b16 %v1181
        %v1914 = vunpack.c.l.b16 %v1182
        %v1915 = vpack.c.b16 %v1900, %v1899
        %v1916 = vpack.c.b16 %v1902, %v1901
        %v1917 = vpack.c.b16 %v1904, %v1903
        %v1918 = vpack.c.b16 %v1906, %v1905
        %v1919 = vpack.c.b16 %v1908, %v1907
        %v1920 = vpack.c.b16 %v1910, %v1909
        %v1921 = vpack.c.b16 %v1912, %v1911
        %v1922 = vpack.c.b16 %v1914, %v1913
        %1923 = vrot.lane.b32.xlu0 %v1915, 12
        %v1924 = vpop.permute.xlu0 %1923
        %1925 = vrot.lane.b32.xlu0 %v1916, 12
        %v1926 = vpop.permute.xlu0 %1925
        %1927 = vrot.lane.b32.xlu0 %v1917, 12
        %v1928 = vpop.permute.xlu0 %1927
        %1929 = vrot.lane.b32.xlu0 %v1918, 12
        %v1930 = vpop.permute.xlu0 %1929
        %1931 = vrot.lane.b32.xlu0 %v1919, 12
        %v1932 = vpop.permute.xlu0 %1931
        %1933 = vrot.lane.b32.xlu0 %v1920, 12
        %v1934 = vpop.permute.xlu0 %1933
        %1935 = vrot.lane.b32.xlu0 %v1921, 12
        %v1936 = vpop.permute.xlu0 %1935
        %1937 = vrot.lane.b32.xlu0 %v1922, 12
        %v1938 = vpop.permute.xlu0 %1937
        %v1939 = vunpack.c.l.b16 %v1204
        %v1940 = vunpack.c.l.b16 %v1214
        %v1941 = vunpack.c.l.b16 %v1228
        %v1942 = vunpack.c.l.b16 %v1238
        %v1943 = vunpack.c.l.b16 %v1252
        %v1944 = vunpack.c.l.b16 %v1262
        %v1945 = vunpack.c.l.b16 %v1276
        %v1946 = vunpack.c.l.b16 %v1286
        %v1947 = vunpack.c.l.b16 %v1300
        %v1948 = vunpack.c.l.b16 %v1310
        %v1949 = vunpack.c.l.b16 %v1324
        %v1950 = vunpack.c.l.b16 %v1334
        %v1951 = vunpack.c.l.b16 %v1348
        %v1952 = vunpack.c.l.b16 %v1358
        %v1953 = vunpack.c.l.b16 %v1372
        %v1954 = vunpack.c.l.b16 %v1382
        %v1955 = vpack.c.b16 %v1940, %v1939
        %v1956 = vpack.c.b16 %v1942, %v1941
        %v1957 = vpack.c.b16 %v1944, %v1943
        %v1958 = vpack.c.b16 %v1946, %v1945
        %v1959 = vpack.c.b16 %v1948, %v1947
        %v1960 = vpack.c.b16 %v1950, %v1949
        %v1961 = vpack.c.b16 %v1952, %v1951
        %v1962 = vpack.c.b16 %v1954, %v1953
        %1963 = vrot.lane.b32.xlu0 %v1955, 16
        %v1964 = vpop.permute.xlu0 %1963
        %1965 = vrot.lane.b32.xlu0 %v1956, 16
        %v1966 = vpop.permute.xlu0 %1965
        %1967 = vrot.lane.b32.xlu0 %v1957, 16
        %v1968 = vpop.permute.xlu0 %1967
        %1969 = vrot.lane.b32.xlu0 %v1958, 16
        %v1970 = vpop.permute.xlu0 %1969
        %1971 = vrot.lane.b32.xlu0 %v1959, 16
        %v1972 = vpop.permute.xlu0 %1971
        %1973 = vrot.lane.b32.xlu0 %v1960, 16
        %v1974 = vpop.permute.xlu0 %1973
        %1975 = vrot.lane.b32.xlu0 %v1961, 16
        %v1976 = vpop.permute.xlu0 %1975
        %1977 = vrot.lane.b32.xlu0 %v1962, 16
        %v1978 = vpop.permute.xlu0 %1977
        %v1979 = vunpack.c.l.b16 %v1418
        %v1980 = vunpack.c.l.b16 %v1421
        %v1981 = vunpack.c.l.b16 %v1425
        %v1982 = vunpack.c.l.b16 %v1428
        %v1983 = vunpack.c.l.b16 %v1432
        %v1984 = vunpack.c.l.b16 %v1435
        %v1985 = vunpack.c.l.b16 %v1439
        %v1986 = vunpack.c.l.b16 %v1442
        %v1987 = vunpack.c.l.b16 %v1446
        %v1988 = vunpack.c.l.b16 %v1449
        %v1989 = vunpack.c.l.b16 %v1453
        %v1990 = vunpack.c.l.b16 %v1456
        %v1991 = vunpack.c.l.b16 %v1460
        %v1992 = vunpack.c.l.b16 %v1463
        %v1993 = vunpack.c.l.b16 %v1467
        %v1994 = vunpack.c.l.b16 %v1470
        %v1995 = vpack.c.b16 %v1980, %v1979
        %v1996 = vpack.c.b16 %v1982, %v1981
        %v1997 = vpack.c.b16 %v1984, %v1983
        %v1998 = vpack.c.b16 %v1986, %v1985
        %v1999 = vpack.c.b16 %v1988, %v1987
        %v2000 = vpack.c.b16 %v1990, %v1989
        %v2001 = vpack.c.b16 %v1992, %v1991
        %v2002 = vpack.c.b16 %v1994, %v1993
        %2003 = vrot.lane.b32.xlu0 %v1995, 20
        %v2004 = vpop.permute.xlu0 %2003
        %2005 = vrot.lane.b32.xlu0 %v1996, 20
        %v2006 = vpop.permute.xlu0 %2005
        %2007 = vrot.lane.b32.xlu0 %v1997, 20
        %v2008 = vpop.permute.xlu0 %2007
        %2009 = vrot.lane.b32.xlu0 %v1998, 20
        %v2010 = vpop.permute.xlu0 %2009
        %2011 = vrot.lane.b32.xlu0 %v1999, 20
        %v2012 = vpop.permute.xlu0 %2011
        %2013 = vrot.lane.b32.xlu0 %v2000, 20
        %v2014 = vpop.permute.xlu0 %2013
        %2015 = vrot.lane.b32.xlu0 %v2001, 20
        %v2016 = vpop.permute.xlu0 %2015
        %2017 = vrot.lane.b32.xlu0 %v2002, 20
        %v2018 = vpop.permute.xlu0 %2017
        %v2027 = vunpack.c.l.b16 %v1475
        %v2028 = vunpack.c.l.b16 %v1476
        %v2029 = vunpack.c.l.b16 %v1477
        %v2030 = vunpack.c.l.b16 %v1478
        %v2031 = vunpack.c.l.b16 %v1479
        %v2032 = vunpack.c.l.b16 %v1480
        %v2033 = vunpack.c.l.b16 %v1481
        %v2034 = vunpack.c.l.b16 %v1482
        %v2035 = vunpack.c.l.b16 %v1483
        %v2036 = vunpack.c.l.b16 %v1484
        %v2037 = vunpack.c.l.b16 %v1485
        %v2038 = vunpack.c.l.b16 %v1486
        %v2039 = vunpack.c.l.b16 %v1487
        %v2040 = vunpack.c.l.b16 %v1488
        %v2041 = vunpack.c.l.b16 %v1489
        %v2042 = vunpack.c.l.b16 %v1490
        %v2043 = vpack.c.b16 %v2028, %v2027
        %v2044 = vpack.c.b16 %v2030, %v2029
        %v2045 = vpack.c.b16 %v2032, %v2031
        %v2046 = vpack.c.b16 %v2034, %v2033
        %v2047 = vpack.c.b16 %v2036, %v2035
        %v2048 = vpack.c.b16 %v2038, %v2037
        %v2049 = vpack.c.b16 %v2040, %v2039
        %v2050 = vpack.c.b16 %v2042, %v2041
        %2051 = vrot.lane.b32.xlu0 %v2043, 24
        %v2052 = vpop.permute.xlu0 %2051
        %2053 = vrot.lane.b32.xlu0 %v2044, 24
        %v2054 = vpop.permute.xlu0 %2053
        %2055 = vrot.lane.b32.xlu0 %v2045, 24
        %v2056 = vpop.permute.xlu0 %2055
        %2057 = vrot.lane.b32.xlu0 %v2046, 24
        %v2058 = vpop.permute.xlu0 %2057
        %2059 = vrot.lane.b32.xlu0 %v2047, 24
        %v2060 = vpop.permute.xlu0 %2059
        %2061 = vrot.lane.b32.xlu0 %v2048, 24
        %v2062 = vpop.permute.xlu0 %2061
        %2063 = vrot.lane.b32.xlu0 %v2049, 24
        %v2064 = vpop.permute.xlu0 %2063
        %2065 = vrot.lane.b32.xlu0 %v2050, 24
        %v2066 = vpop.permute.xlu0 %2065
        %v2067 = vunpack.c.l.b16 %v1512
        %v2068 = vunpack.c.l.b16 %v1522
        %v2069 = vunpack.c.l.b16 %v1536
        %v2070 = vunpack.c.l.b16 %v1546
        %v2071 = vunpack.c.l.b16 %v1560
        %v2072 = vunpack.c.l.b16 %v1570
        %v2073 = vunpack.c.l.b16 %v1584
        %v2074 = vunpack.c.l.b16 %v1594
        %v2075 = vunpack.c.l.b16 %v1608
        %v2076 = vunpack.c.l.b16 %v1618
        %v2077 = vunpack.c.l.b16 %v1632
        %v2078 = vunpack.c.l.b16 %v1642
        %v2079 = vunpack.c.l.b16 %v1656
        %v2080 = vunpack.c.l.b16 %v1666
        %v2081 = vunpack.c.l.b16 %v1680
        %v2082 = vunpack.c.l.b16 %v1690
        %v2083 = vpack.c.b16 %v2068, %v2067
        %v2084 = vpack.c.b16 %v2070, %v2069
        %v2085 = vpack.c.b16 %v2072, %v2071
        %v2086 = vpack.c.b16 %v2074, %v2073
        %v2087 = vpack.c.b16 %v2076, %v2075
        %v2088 = vpack.c.b16 %v2078, %v2077
        %v2089 = vpack.c.b16 %v2080, %v2079
        %v2090 = vpack.c.b16 %v2082, %v2081
        %2091 = vrot.lane.b32.xlu0 %v2083, 28
        %v2092 = vpop.permute.xlu0 %2091
        %2093 = vrot.lane.b32.xlu0 %v2084, 28
        %v2094 = vpop.permute.xlu0 %2093
        %2095 = vrot.lane.b32.xlu0 %v2085, 28
        %v2096 = vpop.permute.xlu0 %2095
        %2097 = vrot.lane.b32.xlu0 %v2086, 28
        %v2098 = vpop.permute.xlu0 %2097
        %2099 = vrot.lane.b32.xlu0 %v2087, 28
        %v2100 = vpop.permute.xlu0 %2099
        %2101 = vrot.lane.b32.xlu0 %v2088, 28
        %v2102 = vpop.permute.xlu0 %2101
        %2103 = vrot.lane.b32.xlu0 %v2089, 28
        %v2104 = vpop.permute.xlu0 %2103
        %2105 = vrot.lane.b32.xlu0 %v2090, 28
        %v2106 = vpop.permute.xlu0 %2105
        %v2107 = vunpack.c.l.b16 %v1726
        %v2108 = vunpack.c.l.b16 %v1729
        %v2109 = vunpack.c.l.b16 %v1733
        %v2110 = vunpack.c.l.b16 %v1736
        %v2111 = vunpack.c.l.b16 %v1740
        %v2112 = vunpack.c.l.b16 %v1743
        %v2113 = vunpack.c.l.b16 %v1747
        %v2114 = vunpack.c.l.b16 %v1750
        %v2115 = vunpack.c.l.b16 %v1754
        %v2116 = vunpack.c.l.b16 %v1757
        %v2117 = vunpack.c.l.b16 %v1761
        %v2118 = vunpack.c.l.b16 %v1764
        %v2119 = vunpack.c.l.b16 %v1768
        %v2120 = vunpack.c.l.b16 %v1771
        %v2121 = vunpack.c.l.b16 %v1775
        %v2122 = vunpack.c.l.b16 %v1778
        %v2123 = vpack.c.b16 %v2108, %v2107
        %v2124 = vpack.c.b16 %v2110, %v2109
        %v2125 = vpack.c.b16 %v2112, %v2111
        %v2126 = vpack.c.b16 %v2114, %v2113
        %v2127 = vpack.c.b16 %v2116, %v2115
        %v2128 = vpack.c.b16 %v2118, %v2117
        %v2129 = vpack.c.b16 %v2120, %v2119
        %v2130 = vpack.c.b16 %v2122, %v2121
        %2131 = vrot.lane.b32.xlu0 %v2123, 32
        %v2132 = vpop.permute.xlu0 %2131
        %2133 = vrot.lane.b32.xlu0 %v2124, 32
        %v2134 = vpop.permute.xlu0 %2133
        %2135 = vrot.lane.b32.xlu0 %v2125, 32
        %v2136 = vpop.permute.xlu0 %2135
        %2137 = vrot.lane.b32.xlu0 %v2126, 32
        %v2138 = vpop.permute.xlu0 %2137
        %2139 = vrot.lane.b32.xlu0 %v2127, 32
        %v2140 = vpop.permute.xlu0 %2139
        %2141 = vrot.lane.b32.xlu0 %v2128, 32
        %v2142 = vpop.permute.xlu0 %2141
        %2143 = vrot.lane.b32.xlu0 %v2129, 32
        %v2144 = vpop.permute.xlu0 %2143
        %2145 = vrot.lane.b32.xlu0 %v2130, 32
        %v2146 = vpop.permute.xlu0 %2145
        %vm2147 = vcmask 31744
        %v2150 = vsel %vm2147, %v1803, %v1836
        %v2153 = vsel %vm2147, %v1804, %v1838
        %v2156 = vsel %vm2147, %v1805, %v1840
        %v2159 = vsel %vm2147, %v1806, %v1842
        %v2162 = vsel %vm2147, %v1807, %v1844
        %v2165 = vsel %vm2147, %v1808, %v1846
        %v2168 = vsel %vm2147, %v1809, %v1848
        %v2171 = vsel %vm2147, %v1810, %v1850
        %vm2172 = vcmask 64512
        %v2174 = vsel %vm2172, %v2150, %v1876
        %v2176 = vsel %vm2172, %v2153, %v1878
        %v2178 = vsel %vm2172, %v2156, %v1880
        %v2180 = vsel %vm2172, %v2159, %v1882
        %v2182 = vsel %vm2172, %v2162, %v1884
        %v2184 = vsel %vm2172, %v2165, %v1886
        %v2186 = vsel %vm2172, %v2168, %v1888
        %v2188 = vsel %vm2172, %v2171, %v1890
        %vm2189 = vcmask 97280
        %v2191 = vsel %vm2189, %v2174, %v1924
        %v2193 = vsel %vm2189, %v2176, %v1926
        %v2195 = vsel %vm2189, %v2178, %v1928
        %v2197 = vsel %vm2189, %v2180, %v1930
        %v2199 = vsel %vm2189, %v2182, %v1932
        %v2201 = vsel %vm2189, %v2184, %v1934
        %v2203 = vsel %vm2189, %v2186, %v1936
        %v2205 = vsel %vm2189, %v2188, %v1938
        %vm2206 = vcmask 130048
        %v2208 = vsel %vm2206, %v2191, %v1964
        %v2210 = vsel %vm2206, %v2193, %v1966
        %v2212 = vsel %vm2206, %v2195, %v1968
        %v2214 = vsel %vm2206, %v2197, %v1970
        %v2216 = vsel %vm2206, %v2199, %v1972
        %v2218 = vsel %vm2206, %v2201, %v1974
        %v2220 = vsel %vm2206, %v2203, %v1976
        %v2222 = vsel %vm2206, %v2205, %v1978
        %vm2223 = vcmask 162816
        %v2225 = vsel %vm2223, %v2208, %v2004
        %v2227 = vsel %vm2223, %v2210, %v2006
        %v2229 = vsel %vm2223, %v2212, %v2008
        %v2231 = vsel %vm2223, %v2214, %v2010
        %v2233 = vsel %vm2223, %v2216, %v2012
        %v2235 = vsel %vm2223, %v2218, %v2014
        %v2237 = vsel %vm2223, %v2220, %v2016
        %v2239 = vsel %vm2223, %v2222, %v2018
        %vm2240 = vcmask 195584
        %v2242 = vsel %vm2240, %v2225, %v2052
        %v2244 = vsel %vm2240, %v2227, %v2054
        %v2246 = vsel %vm2240, %v2229, %v2056
        %v2248 = vsel %vm2240, %v2231, %v2058
        %v2250 = vsel %vm2240, %v2233, %v2060
        %v2252 = vsel %vm2240, %v2235, %v2062
        %v2254 = vsel %vm2240, %v2237, %v2064
        %v2256 = vsel %vm2240, %v2239, %v2066
        %vm2257 = vcmask 228352
        %v2259 = vsel %vm2257, %v2242, %v2092
        %v2261 = vsel %vm2257, %v2244, %v2094
        %v2263 = vsel %vm2257, %v2246, %v2096
        %v2265 = vsel %vm2257, %v2248, %v2098
        %v2267 = vsel %vm2257, %v2250, %v2100
        %v2269 = vsel %vm2257, %v2252, %v2102
        %v2271 = vsel %vm2257, %v2254, %v2104
        %v2273 = vsel %vm2257, %v2256, %v2106
        %vm2274 = vcmask 261120
        %v2276 = vsel %vm2274, %v2259, %v2132
        %v2278 = vsel %vm2274, %v2261, %v2134
        %v2280 = vsel %vm2274, %v2263, %v2136
        %v2282 = vsel %vm2274, %v2265, %v2138
        %v2284 = vsel %vm2274, %v2267, %v2140
        %v2286 = vsel %vm2274, %v2269, %v2142
        %v2288 = vsel %vm2274, %v2271, %v2144
        %v2290 = vsel %vm2274, %v2273, %v2146
        %v2291 = vld [vmem:[%s1] sm:$0xf]
        %v2292 = vld [vmem:[%s1 + $0x4] sm:$0xf]
        %v2293 = vld [vmem:[%s1 + $0x8] sm:$0xf]
        %v2294 = vld [vmem:[%s1 + $0xc] sm:$0xf]
        %v2295 = vld [vmem:[%s1 + $0x10] sm:$0x3]
        %v2301 = vunpack.c.l.b16 %v2291
        %v2302 = vunpack.c.l.b16 %v2292
        %v2303 = vunpack.c.l.b16 %v2293
        %v2304 = vunpack.c.l.b16 %v2294
        %v2305 = vunpack.c.l.b16 %v2295
        %v2306 = vpack.c.b16 %v2302, %v2301
        %v2307 = vpack.c.b16 %v2304, %v2303
        %v2308 = vpack.c.b16 %v2305, %v2305
        %vm2311 = vcmask 293888
        %v2312 = vsel %vm2311, %v2276, 0
        %v2314 = vsel %vm2311, %v2278, 0
        %v2316 = vsel %vm2311, %v2280, 0
        %v2318 = vsel %vm2311, %v2282, 0
        %v2320 = vsel %vm2311, %v2284, 0
        %v2322 = vsel %vm2311, %v2286, 0
        %v2324 = vsel %vm2311, %v2288, 0
        %v2326 = vsel %vm2311, %v2290, 0
        %vm2328 = vcmask 1041408
        %v2330 = vsel %vm2328, %v2308, 0
        %2332 = vmatprep.subr.bf16.mxu0 0
        %2333 = vmatpush1.bf16.msra.mxu0 %v2306
        %2334 = vmatprep.subr.bf16.mxu0 0
        %2335 = vmatpush1.bf16.msra.mxu0 %v2307
        %2336 = vmatprep.subr.bf16.mxu0 0
        %2337 = vmatpush1.bf16.msra.mxu0 %v2330
        %2338 = vmatprep.subr.bf16.mxu0 0
        %2339 = vmatpush1.bf16.msra.mxu0 0
        %2340 = vmatprep.subr.bf16.mxu0 0
        %2341 = vmatpush1.bf16.msra.mxu0 0
        %2342 = vmatprep.subr.bf16.mxu0 0
        %2343 = vmatpush1.bf16.msra.mxu0 0
        %2344 = vmatprep.subr.bf16.mxu0 0
        %2345 = vmatpush1.bf16.msra.mxu0 0
        %2346 = vmatprep.subr.bf16.mxu0 0
        %2347 = vmatpush1.bf16.msra.mxu0 0
        %2348 = vmatprep.subr.bf16.mxu0 0
        %2349 = vmatpush1.bf16.msra.mxu0 0
        %2350 = vmatprep.subr.bf16.mxu0 0
        %2351 = vmatpush1.bf16.msra.mxu0 0
        %2352 = vmatprep.subr.bf16.mxu0 0
        %2353 = vmatpush1.bf16.msra.mxu0 0
        %2354 = vmatprep.subr.bf16.mxu0 0
        %2355 = vmatpush1.bf16.msra.mxu0 0
        %2356 = vmatprep.subr.bf16.mxu0 0
        %2357 = vmatpush1.bf16.msra.mxu0 0
        %2358 = vmatprep.subr.bf16.mxu0 0
        %2359 = vmatpush1.bf16.msra.mxu0 0
        %2360 = vmatprep.subr.bf16.mxu0 0
        %2361 = vmatpush1.bf16.msra.mxu0 0
        %2362 = vmatprep.subr.bf16.mxu0 0
        %2363 = vmatpush1.bf16.msra.mxu0 0
        %2364 = vmatprep.mubr.bf16.mxu0 0
        %2365 = vmatmul.mubr.bf16.gmra.mrb[0].mxu0 %v2312
        %v2366 = vpop.f32.mrb[0].mxu0
        %v2367 = vadd.f32 0.0, %v2366
        %v2368 = vpop.f32.mrb[0].mxu0
        %v2369 = vpop.f32.mrb[0].mxu0
        %v2370 = vadd.f32 0.0, %v2369
        %v2371 = vpop.f32.mrb[0].mxu0
        %2372 = vmatprep.mubr.bf16.mxu0 0
        %2373 = vmatmul.mubr.bf16.gmra.mrb[0].mxu0 %v2314
        %v2374 = vpop.f32.mrb[0].mxu0
        %v2375 = vadd.f32 0.0, %v2374
        %v2376 = vpop.f32.mrb[0].mxu0
        %v2377 = vpop.f32.mrb[0].mxu0
        %v2378 = vadd.f32 0.0, %v2377
        %v2379 = vpop.f32.mrb[0].mxu0
        %2380 = vmatprep.mubr.bf16.mxu0 0
        %2381 = vmatmul.mubr.bf16.gmra.mrb[0].mxu0 %v2316
        %v2382 = vpop.f32.mrb[0].mxu0
        %v2383 = vadd.f32 0.0, %v2382
        %v2384 = vpop.f32.mrb[0].mxu0
        %v2385 = vpop.f32.mrb[0].mxu0
        %v2386 = vadd.f32 0.0, %v2385
        %v2387 = vpop.f32.mrb[0].mxu0
        %2388 = vmatprep.mubr.bf16.mxu0 0
        %2389 = vmatmul.mubr.bf16.gmra.mrb[0].mxu0 %v2318
        %v2390 = vpop.f32.mrb[0].mxu0
        %v2391 = vadd.f32 0.0, %v2390
        %v2392 = vpop.f32.mrb[0].mxu0
        %v2393 = vpop.f32.mrb[0].mxu0
        %v2394 = vadd.f32 0.0, %v2393
        %v2395 = vpop.f32.mrb[0].mxu0
        %2396 = vmatprep.mubr.bf16.mxu0 0
        %2397 = vmatmul.mubr.bf16.gmra.mrb[0].mxu0 %v2320
        %v2398 = vpop.f32.mrb[0].mxu0
        %v2399 = vadd.f32 0.0, %v2398
        %v2400 = vpop.f32.mrb[0].mxu0
        %v2401 = vpop.f32.mrb[0].mxu0
        %v2402 = vadd.f32 0.0, %v2401
        %v2403 = vpop.f32.mrb[0].mxu0
        %2404 = vmatprep.mubr.bf16.mxu0 0
        %2405 = vmatmul.mubr.bf16.gmra.mrb[0].mxu0 %v2322
        %v2406 = vpop.f32.mrb[0].mxu0
        %v2407 = vadd.f32 0.0, %v2406
        %v2408 = vpop.f32.mrb[0].mxu0
        %v2409 = vpop.f32.mrb[0].mxu0
        %v2410 = vadd.f32 0.0, %v2409
        %v2411 = vpop.f32.mrb[0].mxu0
        %2412 = vmatprep.mubr.bf16.mxu0 0
        %2413 = vmatmul.mubr.bf16.gmra.mrb[0].mxu0 %v2324
        %v2414 = vpop.f32.mrb[0].mxu0
        %v2415 = vadd.f32 0.0, %v2414
        %v2416 = vpop.f32.mrb[0].mxu0
        %v2417 = vpop.f32.mrb[0].mxu0
        %v2418 = vadd.f32 0.0, %v2417
        %v2419 = vpop.f32.mrb[0].mxu0
        %2420 = vmatprep.mubr.bf16.mxu0 0
        %2421 = vmatmul.mubr.bf16.gmra.mrb[0].mxu0 %v2326
        %v2422 = vpop.f32.mrb[0].mxu0
        %v2423 = vadd.f32 0.0, %v2422
        %v2424 = vpop.f32.mrb[0].mxu0
        %v2425 = vpop.f32.mrb[0].mxu0
        %v2426 = vadd.f32 0.0, %v2425
        %v2427 = vpop.f32.mrb[0].mxu0
        %2428 = vdwg.mxu0
        %v2429 = vpack.c.bf16 %v2370, %v2367
        %v2430 = vpack.c.bf16 %v2378, %v2375
        %v2431 = vpack.c.bf16 %v2386, %v2383
        %v2432 = vpack.c.bf16 %v2394, %v2391
        %v2433 = vpack.c.bf16 %v2402, %v2399
        %v2434 = vpack.c.bf16 %v2410, %v2407
        %v2435 = vpack.c.bf16 %v2418, %v2415
        %v2436 = vpack.c.bf16 %v2426, %v2423
        %v2445 = vunpack.c.l.b16 %v2429
        %v2446 = vunpack.c.h.b16 %v2429
        %v2447 = vunpack.c.l.b16 %v2430
        %v2448 = vunpack.c.h.b16 %v2430
        %v2449 = vunpack.c.l.b16 %v2431
        %v2450 = vunpack.c.h.b16 %v2431
        %v2451 = vunpack.c.l.b16 %v2432
        %v2452 = vunpack.c.h.b16 %v2432
        %v2453 = vunpack.c.l.b16 %v2433
        %v2454 = vunpack.c.h.b16 %v2433
        %v2455 = vunpack.c.l.b16 %v2434
        %v2456 = vunpack.c.h.b16 %v2434
        %v2457 = vunpack.c.l.b16 %v2435
        %v2458 = vunpack.c.h.b16 %v2435
        %v2459 = vunpack.c.l.b16 %v2436
        %v2460 = vunpack.c.h.b16 %v2436
        %v2461 = vpack.c.b16 %v2445, %v2445
        %v2462 = vpack.c.b16 %v2446, %v2446
        %v2463 = vpack.c.b16 %v2447, %v2447
        %v2464 = vpack.c.b16 %v2448, %v2448
        %v2465 = vpack.c.b16 %v2449, %v2449
        %v2466 = vpack.c.b16 %v2450, %v2450
        %v2467 = vpack.c.b16 %v2451, %v2451
        %v2468 = vpack.c.b16 %v2452, %v2452
        %v2469 = vpack.c.b16 %v2453, %v2453
        %v2470 = vpack.c.b16 %v2454, %v2454
        %v2471 = vpack.c.b16 %v2455, %v2455
        %v2472 = vpack.c.b16 %v2456, %v2456
        %v2473 = vpack.c.b16 %v2457, %v2457
        %v2474 = vpack.c.b16 %v2458, %v2458
        %v2475 = vpack.c.b16 %v2459, %v2459
        %v2476 = vpack.c.b16 %v2460, %v2460
        %s2493 = smul.u32 %s849, 2
        %s2494 = smul.addr %s2493, 4
        %s2495 = scalar_lea.vmem %s208, %s2494
        %2496 = vst.msk [vmem:[%s2495] sm:$0xf] %vm248, %v2461
        %2497 = vst.msk [vmem:[%s2495 + $0x4] sm:$0xf] %vm248, %v2462
        %2498 = vst.msk [vmem:[%s2495 + $0x8] sm:$0xf] %vm248, %v2463
        %2499 = vst.msk [vmem:[%s2495 + $0xc] sm:$0xf] %vm248, %v2464
        %2500 = vst.msk [vmem:[%s2495 + $0x10] sm:$0xf] %vm248, %v2465
        %2501 = vst.msk [vmem:[%s2495 + $0x14] sm:$0xf] %vm248, %v2466
        %2502 = vst.msk [vmem:[%s2495 + $0x18] sm:$0xf] %vm248, %v2467
        %2503 = vst.msk [vmem:[%s2495 + $0x1c] sm:$0xf] %vm248, %v2468
        %2504 = vst.msk [vmem:[%s2495 + $0x20] sm:$0xf] %vm248, %v2469
        %2505 = vst.msk [vmem:[%s2495 + $0x24] sm:$0xf] %vm248, %v2470
        %2506 = vst.msk [vmem:[%s2495 + $0x28] sm:$0xf] %vm248, %v2471
        %2507 = vst.msk [vmem:[%s2495 + $0x2c] sm:$0xf] %vm248, %v2472
        %2508 = vst.msk [vmem:[%s2495 + $0x30] sm:$0xf] %vm248, %v2473
        %2509 = vst.msk [vmem:[%s2495 + $0x34] sm:$0xf] %vm248, %v2474
        %2510 = vst.msk [vmem:[%s2495 + $0x38] sm:$0xf] %vm248, %v2475
        %2511 = vst.msk [vmem:[%s2495 + $0x3c] sm:$0xf] %vm248, %v2476
        %v2512 = vsel %vm2147, %v2367, 0.0
        %v2513 = vsel %vm2147, %v2370, 0.0
        %v2514 = vadd.f32 %v2512, %v2513
        %v2515 = vsel %vm2147, %v2375, 0.0
        %v2516 = vadd.f32 %v2514, %v2515
        %v2517 = vsel %vm2147, %v2378, 0.0
        %v2518 = vadd.f32 %v2516, %v2517
        %v2519 = vsel %vm2147, %v2383, 0.0
        %v2520 = vadd.f32 %v2518, %v2519
        %v2521 = vsel %vm2147, %v2386, 0.0
        %v2522 = vadd.f32 %v2520, %v2521
        %v2523 = vsel %vm2147, %v2391, 0.0
        %v2524 = vadd.f32 %v2522, %v2523
        %v2525 = vsel %vm2147, %v2394, 0.0
        %v2526 = vadd.f32 %v2524, %v2525
        %v2527 = vsel %vm2147, %v2399, 0.0
        %v2528 = vadd.f32 %v2526, %v2527
        %v2529 = vsel %vm2147, %v2402, 0.0
        %v2530 = vadd.f32 %v2528, %v2529
        %v2531 = vsel %vm2147, %v2407, 0.0
        %v2532 = vadd.f32 %v2530, %v2531
        %v2533 = vsel %vm2147, %v2410, 0.0
        %v2534 = vadd.f32 %v2532, %v2533
        %v2535 = vsel %vm2147, %v2415, 0.0
        %v2536 = vadd.f32 %v2534, %v2535
        %v2537 = vsel %vm2147, %v2418, 0.0
        %v2538 = vadd.f32 %v2536, %v2537
        %v2539 = vsel %vm2147, %v2423, 0.0
        %v2540 = vadd.f32 %v2538, %v2539
        %v2541 = vsel %vm2147, %v2426, 0.0
        %v2542 = vadd.f32 %v2540, %v2541
        %v2543 = vrot.slane %v2542, 4
        %v2544 = vadd.f32 %v2542, %v2543
        %v2545 = vrot.slane %v2544, 2
        %v2546 = vadd.f32 %v2544, %v2545
        %v2547 = vrot.slane %v2546, 1
        %v2548 = vadd.f32 %v2546, %v2547
        %v2549 = vadd.f32 %v847, %v2548
        %v2550 = vmul.f32 %v2367, %v2367
        %v2551 = vmul.f32 %v2370, %v2370
        %v2552 = vmul.f32 %v2375, %v2375
        %v2553 = vmul.f32 %v2378, %v2378
        %v2554 = vmul.f32 %v2383, %v2383
        %v2555 = vmul.f32 %v2386, %v2386
        %v2556 = vmul.f32 %v2391, %v2391
        %v2557 = vmul.f32 %v2394, %v2394
        %v2558 = vmul.f32 %v2399, %v2399
        %v2559 = vmul.f32 %v2402, %v2402
        %v2560 = vmul.f32 %v2407, %v2407
        %v2561 = vmul.f32 %v2410, %v2410
        %v2562 = vmul.f32 %v2415, %v2415
        %v2563 = vmul.f32 %v2418, %v2418
        %v2564 = vmul.f32 %v2423, %v2423
        %v2565 = vmul.f32 %v2426, %v2426
        %v2566 = vsel %vm2147, %v2550, 0.0
        %v2567 = vsel %vm2147, %v2551, 0.0
        %v2568 = vadd.f32 %v2566, %v2567
        %v2569 = vsel %vm2147, %v2552, 0.0
        %v2570 = vadd.f32 %v2568, %v2569
        %v2571 = vsel %vm2147, %v2553, 0.0
        %v2572 = vadd.f32 %v2570, %v2571
        %v2573 = vsel %vm2147, %v2554, 0.0
        %v2574 = vadd.f32 %v2572, %v2573
        %v2575 = vsel %vm2147, %v2555, 0.0
        %v2576 = vadd.f32 %v2574, %v2575
        %v2577 = vsel %vm2147, %v2556, 0.0
        %v2578 = vadd.f32 %v2576, %v2577
        %v2579 = vsel %vm2147, %v2557, 0.0
        %v2580 = vadd.f32 %v2578, %v2579
        %v2581 = vsel %vm2147, %v2558, 0.0
        %v2582 = vadd.f32 %v2580, %v2581
        %v2583 = vsel %vm2147, %v2559, 0.0
        %v2584 = vadd.f32 %v2582, %v2583
        %v2585 = vsel %vm2147, %v2560, 0.0
        %v2586 = vadd.f32 %v2584, %v2585
        %v2587 = vsel %vm2147, %v2561, 0.0
        %v2588 = vadd.f32 %v2586, %v2587
        %v2589 = vsel %vm2147, %v2562, 0.0
        %v2590 = vadd.f32 %v2588, %v2589
        %v2591 = vsel %vm2147, %v2563, 0.0
        %v2592 = vadd.f32 %v2590, %v2591
        %v2593 = vsel %vm2147, %v2564, 0.0
        %v2594 = vadd.f32 %v2592, %v2593
        %v2595 = vsel %vm2147, %v2565, 0.0
        %v2596 = vadd.f32 %v2594, %v2595
        %v2597 = vrot.slane %v2596, 4
        %v2598 = vadd.f32 %v2596, %v2597
        %v2599 = vrot.slane %v2598, 2
        %v2600 = vadd.f32 %v2598, %v2599
        %v2601 = vrot.slane %v2600, 1
        %v2602 = vadd.f32 %v2600, %v2601
        %v2603 = vadd.f32 %v848, %v2602
      $region33: #{residual_block.3} parent=27 // loop_footer
        %s846 = sadd.s32 1, %s842
      $region34: #{residual_block.3} parent=27 // loop_footer_branch
        %841 = sbr.rel target = $region30
      $region35: #{residual_block.3} parent=27 // loop_exit
        _
      %2604 = vst.msk [vmem:[%s211] sm:$0x1] %vm251, %v847
      %2605 = vst.msk [vmem:[%s214] sm:$0x1] %vm251, %v848
      %p2606 = scmp.lt.s32.totalorder %s16, 1
      %s2607 = scalar_select %p2606, %s16, 1
      %s2608 = smul.addr %s2607, 32
      %s2609 = smul.addr %s2608, 4
      %s2610 = scalar_lea.vmem %s2, %s2609
      %p2611 = scmp.lt.s32.totalorder %s16, 1
      %s2612 = scalar_select %p2611, %s16, 1
      %s2613 = scalar_lea.vmem %s3, %s2612
      %p2614 = scmp.lt.s32.totalorder %s16, 1
      %s2615 = scalar_select %p2614, %s16, 1
      %s2616 = scalar_lea.vmem %s4, %s2615
      // Predicated region
      $region36: #{residual_block.3} parent=27 // pred_check
        %p2617 = pneg %p81
      $region37: #{residual_block.3} parent=27 // pred_check_branch
        %2619 = sbr.rel (%p2617) target = $region39
      $region38: #{residual_block.3} parent=27 // pred_region
        _
      $region39: #{residual_block.3} parent=27 // pred_fallthru
        _
      // Predicated region
      $region40: #{residual_block.3} parent=27 // pred_check
        %p2620 = pneg %p107
      $region41: #{residual_block.3} parent=27 // pred_check_branch
        %2622 = sbr.rel (%p2620) target = $region43
      $region42: #{residual_block.3} parent=27 // pred_region
        _
      $region43: #{residual_block.3} parent=27 // pred_fallthru
        _
      // Predicated region
      $region44: #{residual_block.3} parent=27 // pred_check
        %p2623 = pneg %p133
      $region45: #{residual_block.3} parent=27 // pred_check_branch
        %2625 = sbr.rel (%p2623) target = $region47
      $region46: #{residual_block.3} parent=27 // pred_region
        _
      $region47: #{residual_block.3} parent=27 // pred_fallthru
        _
    $region28: #{residual_block.3} parent=5 // pred_fallthru
      _
    %p2626 = scmp.le.s32.totalorder 2, %s11
    // Predicated region
    $region48: #{residual_block.3} parent=5 // pred_check
      %p2627 = pneg %p2626
    $region49: #{residual_block.3} parent=5 // pred_check_branch
      %2629 = sbr.rel (%p2627) target = $region51
    $region50: #{residual_block.3} parent=5 // pred_region
      %s2630 = ssub.s32 %s11, 2
      // Predicated region
      $region52: #{residual_block.3} parent=50 // pred_check
        %p2631 = pneg %p87
      $region53: #{residual_block.3} parent=50 // pred_check_branch
        %2633 = sbr.rel (%p2631) target = $region55
      $region54: #{residual_block.3} parent=50 // pred_region
        %p2634 = scmp.lt.s32.totalorder %s17, 1
        %s2635 = scalar_select %p2634, %s17, 1
        %s2636 = smul.addr %s2635, 32
        %s2637 = smul.addr %s2636, 4
        %s2638 = scalar_lea.vmem %s2, %s2637
      $region55: #{residual_block.3} parent=50 // pred_fallthru
        _
      // Predicated region
      $region56: #{residual_block.3} parent=50 // pred_check
        %p2639 = pneg %p113
      $region57: #{residual_block.3} parent=50 // pred_check_branch
        %2641 = sbr.rel (%p2639) target = $region59
      $region58: #{residual_block.3} parent=50 // pred_region
        %p2642 = scmp.lt.s32.totalorder %s17, 1
        %s2643 = scalar_select %p2642, %s17, 1
        %s2644 = scalar_lea.vmem %s3, %s2643
      $region59: #{residual_block.3} parent=50 // pred_fallthru
        _
      // Predicated region
      $region60: #{residual_block.3} parent=50 // pred_check
        %p2645 = pneg %p139
      $region61: #{residual_block.3} parent=50 // pred_check_branch
        %2647 = sbr.rel (%p2645) target = $region63
      $region62: #{residual_block.3} parent=50 // pred_region
        %p2648 = scmp.lt.s32.totalorder %s17, 1
        %s2649 = scalar_select %p2648, %s17, 1
        %s2650 = scalar_lea.vmem %s4, %s2649
      $region63: #{residual_block.3} parent=50 // pred_fallthru
        _
    $region51: #{residual_block.3} parent=5 // pred_fallthru
      _
  $region6: #{residual_block.3} parent=0 // loop_footer
    %s15 = sadd.s32 1, %s11
  $region7: #{residual_block.3} parent=0 // loop_footer_branch
    %10 = sbr.rel target = $region3
  $region8: #{residual_block.3} parent=0 // loop_exit
    _

</llo_original>
